<compile_context>
chip_gen: v5e
topology: v5e:2x2
jax: 0.10.0
libtpu: 0.0.40
codegen_flags: <defaults>
</compile_context>

<pallas_src>
import functools

import jax
import jax.numpy as jnp
from jax import lax
from jax.experimental import pallas as pl
from jax.experimental.pallas import tpu as pltpu

LEAKY_SLOPE = 0.01


# ---------------------------------------------------------------------------
# Shared elementwise math (used inside kernels and in the pure-JAX reference)
# ---------------------------------------------------------------------------
def _activate(x, act):
    if act == "leaky":
        return jnp.where(x > 0, x, LEAKY_SLOPE * x)
    if act == "sigmoid":
        # numerically stable sigmoid: never overflows exp()
        z = jnp.exp(-jnp.abs(x))
        return jnp.where(x >= 0, 1.0 / (1.0 + z), z / (1.0 + z))
    return x


# ---------------------------------------------------------------------------
# Pallas kernels
# ---------------------------------------------------------------------------
def _accumulate_conv_taps(xp, w_ref, acc_ref, H, W, cin):
    """Accumulate the 9 taps of a 3x3 'same' conv into acc_ref.

    xp is the zero-haloed image value of shape (H+2, W+9, Cin) with the real
    image stored at rows [1, H+1) and columns [8, 8+W) (8 = aligned sublane
    offset; columns 7 and 8+W plus rows 0 / H+1 are the zero halo).
    """
    for dy in range(3):
        for dx in range(3):
            xs = xp[dy:dy + H, 7 + dx:7 + dx + W, :]     # (H, W, Cin)
            wtap = w_ref[dy, dx]                         # (Cin, Cout)
            if cin == 1:
                # VPU broadcast path: (H,W,1) * (1,Cout) -> (H,W,Cout)
                acc_ref[...] += xs * wtap
            else:
                acc_ref[...] += lax.dot_general(
                    xs, wtap, (((2,), (0,)), ((), ())),
                    preferred_element_type=jnp.float32)


def conv3x3_kernel(x_ref, w_ref, b_ref, o_ref, xp_ref, acc_ref, *, H, W, act):
    """3x3 stride-1 'same' conv on one image; halo built in a VMEM scratch."""
    cin = x_ref.shape[-1]
    # Build the zero-haloed image in VMEM (no HBM-padded copy of the input).
    xp_ref[...] = jnp.zeros(xp_ref.shape, xp_ref.dtype)
    xp_ref[1:H + 1, 8:8 + W, :] = x_ref[0]
    acc_ref[...] = jnp.zeros(acc_ref.shape, acc_ref.dtype)
    _accumulate_conv_taps(xp_ref[...], w_ref, acc_ref, H, W, cin)
    y = acc_ref[...] + b_ref[...]                        # (H,W,Cout) + (1,Cout)
    o_ref[0] = _activate(y, act).astype(o_ref.dtype)


def conv3x3_leaky_pool5_kernel(x_ref, w_ref, b_ref, o_ref,
                               xp_ref, acc_ref, mp_ref, *, H, W):
    """Fused: 3x3 'same' conv -> LeakyReLU -> 5x5 stride-1 'same' max-pool."""
    cin = x_ref.shape[-1]
    xp_ref[...] = jnp.zeros(xp_ref.shape, xp_ref.dtype)
    xp_ref[1:H + 1, 8:8 + W, :] = x_ref[0]
    acc_ref[...] = jnp.zeros(acc_ref.shape, acc_ref.dtype)
    _accumulate_conv_taps(xp_ref[...], w_ref, acc_ref, H, W, cin)
    y = _activate(acc_ref[...] + b_ref[...], "leaky")    # (H, W, Cout)

    # Separable 5x5 max-pool through a -inf haloed VMEM scratch:
    # y stored at rows [2, H+2), columns [8, 8+W) of mp (shape (H+4, W+10, C)).
    mp_ref[...] = jnp.full(mp_ref.shape, -jnp.inf, mp_ref.dtype)
    mp_ref[2:H + 2, 8:8 + W, :] = y
    mp = mp_ref[...]
    rm = mp[0:H, :, :]
    for dy in range(1, 5):
        rm = jnp.maximum(rm, mp[dy:dy + H, :, :])        # (H, W+10, C)
    out = rm[:, 6:6 + W, :]
    for dx in range(1, 5):
        out = jnp.maximum(out, rm[:, 6 + dx:6 + dx + W, :])
    o_ref[0] = out.astype(o_ref.dtype)


def encoder_fc_kernel(x_ref, w_ref, b_ref, o_ref, acc_ref):
    """out = x @ w.T + b with w stored lane-dense as (Dout, K); K-grid reduce."""
    k = pl.program_id(0)

    @pl.when(k == 0)
    def _():
        acc_ref[...] = jnp.zeros(acc_ref.shape, acc_ref.dtype)

    acc_ref[...] += lax.dot_general(
        x_ref[...], w_ref[...], (((1,), (1,)), ((), ())),
        preferred_element_type=jnp.float32)

    @pl.when(k == pl.num_programs(0) - 1)
    def _():
        o_ref[...] = (acc_ref[...] + b_ref[...]).astype(o_ref.dtype)


def decoder_fc_kernel(x_ref, w_ref, b_ref, o_ref):
    """out_tile = x @ w_tile + b_tile, tiled over the (huge) output dim."""
    o_ref[...] = (jnp.dot(x_ref[...], w_ref[...],
                          preferred_element_type=jnp.float32)
                  + b_ref[...]).astype(o_ref.dtype)


# ---------------------------------------------------------------------------
# Wrappers around pallas_call
# ---------------------------------------------------------------------------
def conv3x3_same(x, w, b, act="none"):
    """x: (N,H,W,Cin) NHWC; w: (3,3,Cin,Cout) HWIO; b: (Cout,)."""
    N, H, W, Cin = x.shape
    Cout = w.shape[-1]
    # TODO(synk): add a spatial row-tile grid axis (with in-kernel halo rows)
    # for 100x100 inputs / v7x's 64 MiB VMEM.
    kern = functools.partial(conv3x3_kernel, H=H, W=W, act=act)
    return pl.pallas_call(
        kern,
        out_shape=jax.ShapeDtypeStruct((N, H, W, Cout), jnp.float32),
        grid_spec=pltpu.PrefetchScalarGridSpec(
            num_scalar_prefetch=0,
            grid=(N,),
            in_specs=[
                pl.BlockSpec((1, H, W, Cin), lambda n: (n, 0, 0, 0)),
                pl.BlockSpec((3, 3, Cin, Cout), lambda n: (0, 0, 0, 0)),
                pl.BlockSpec((1, Cout), lambda n: (0, 0)),
            ],
            out_specs=pl.BlockSpec((1, H, W, Cout), lambda n: (n, 0, 0, 0)),
            scratch_shapes=[
                pltpu.VMEM((H + 2, W + 9, Cin), jnp.float32),   # zero halo
                pltpu.VMEM((H, W, Cout), jnp.float32),          # f32 accumulator
            ],
        ),
        compiler_params=pltpu.CompilerParams(
            dimension_semantics=("parallel",)),
    )(x, w, b.reshape(1, Cout))


def conv3x3_leaky_pool5_same(x, w, b):
    """Fused conv(3x3,'same') + LeakyReLU + maxpool(5x5,stride 1,'same')."""
    N, H, W, Cin = x.shape
    Cout = w.shape[-1]
    kern = functools.partial(conv3x3_leaky_pool5_kernel, H=H, W=W)
    return pl.pallas_call(
        kern,
        out_shape=jax.ShapeDtypeStruct((N, H, W, Cout), jnp.float32),
        grid_spec=pltpu.PrefetchScalarGridSpec(
            num_scalar_prefetch=0,
            grid=(N,),
            in_specs=[
                pl.BlockSpec((1, H, W, Cin), lambda n: (n, 0, 0, 0)),
                pl.BlockSpec((3, 3, Cin, Cout), lambda n: (0, 0, 0, 0)),
                pl.BlockSpec((1, Cout), lambda n: (0, 0)),
            ],
            out_specs=pl.BlockSpec((1, H, W, Cout), lambda n: (n, 0, 0, 0)),
            scratch_shapes=[
                pltpu.VMEM((H + 2, W + 9, Cin), jnp.float32),   # zero halo
                pltpu.VMEM((H, W, Cout), jnp.float32),          # f32 accumulator
                pltpu.VMEM((H + 4, W + 10, Cout), jnp.float32), # -inf pool halo
            ],
        ),
        compiler_params=pltpu.CompilerParams(
            dimension_semantics=("parallel",)),
    )(x, w, b.reshape(1, Cout))


def encoder_fc(x, w, b, tk):
    """x: (N,K); w: (Dout,K) lane-dense; b: (Dout,).  Reduces over K blocks."""
    N, K = x.shape
    Dout = w.shape[0]
    assert w.shape == (Dout, K) and K % tk == 0
    return pl.pallas_call(
        encoder_fc_kernel,
        out_shape=jax.ShapeDtypeStruct((N, Dout), jnp.float32),
        grid_spec=pltpu.PrefetchScalarGridSpec(
            num_scalar_prefetch=0,
            grid=(K // tk,),
            in_specs=[
                pl.BlockSpec((N, tk), lambda k: (0, k)),
                pl.BlockSpec((Dout, tk), lambda k: (0, k)),
                pl.BlockSpec((1, Dout), lambda k: (0, 0)),
            ],
            out_specs=pl.BlockSpec((N, Dout), lambda k: (0, 0)),
            scratch_shapes=[pltpu.VMEM((N, Dout), jnp.float32)],
        ),
        compiler_params=pltpu.CompilerParams(
            dimension_semantics=("arbitrary",)),
    )(x, w, b.reshape(1, Dout))


def decoder_fc(z, w, b, tn):
    """z: (N,K); w: (K,Dout) with Dout tiled lane-dense; b: (Dout,)."""
    N, K = z.shape
    Dout = w.shape[1]
    assert w.shape == (K, Dout) and Dout % tn == 0
    return pl.pallas_call(
        decoder_fc_kernel,
        out_shape=jax.ShapeDtypeStruct((N, Dout), jnp.float32),
        grid_spec=pltpu.PrefetchScalarGridSpec(
            num_scalar_prefetch=0,
            grid=(Dout // tn,),
            in_specs=[
                pl.BlockSpec((N, K), lambda j: (0, 0)),
                pl.BlockSpec((K, tn), lambda j: (0, j)),
                pl.BlockSpec((1, tn), lambda j: (0, j)),
            ],
            out_specs=pl.BlockSpec((N, tn), lambda j: (0, j)),
        ),
        compiler_params=pltpu.CompilerParams(
            dimension_semantics=("parallel",)),
    )(z, w, b.reshape(1, Dout))


def _pick_tile(total, target, mult):
    """Largest divisor of `total` that is <= target and a multiple of `mult`."""
    t = min(total, max(mult, (target // mult) * mult))
    while total % t:
        t -= mult
    return t


# ---------------------------------------------------------------------------
# Parameters: PyTorch layouts -> kernel layouts (with flatten-permutation fold)
# ---------------------------------------------------------------------------
def init_pt_params(key, bottleneck, H, W):
    """Parameters in native PyTorch layouts (Conv2d OIHW, ConvT IOHW, Linear (out,in))."""
    feat = 128 * H * W
    ks = jax.random.split(key, 20)

    def nrm(k, shape, fan_in):
        return jax.random.normal(k, shape, jnp.float32) / jnp.sqrt(float(fan_in))

    def unif(k, shape, scale=0.05):
        return jax.random.uniform(k, shape, jnp.float32, -scale, scale)

    p = {}
    for i, (cin, cout) in enumerate([(1, 32), (32, 32), (32, 64), (64, 128)]):
        p[f"ec{i+1}_w"] = nrm(ks[2 * i], (cout, cin, 3, 3), 9 * cin)      # OIHW
        p[f"ec{i+1}_b"] = unif(ks[2 * i + 1], (cout,))
    p["efc_w"] = nrm(ks[8], (bottleneck, feat), feat)                      # (out,in)
    p["efc_b"] = unif(ks[9], (bottleneck,))
    p["dfc_w"] = nrm(ks[10], (feat, bottleneck), bottleneck)               # (out,in)
    p["dfc_b"] = unif(ks[11], (feat,))
    for i, (cin, cout) in enumerate([(128, 64), (64, 32), (32, 32), (32, 1)]):
        p[f"dc{i+1}_w"] = nrm(ks[12 + 2 * i], (cin, cout, 3, 3), 9 * cin)  # IOHW
        p[f"dc{i+1}_b"] = unif(ks[13 + 2 * i], (cout,))
    return p


def convert_params(pt, H, W):
    """PyTorch layouts -> kernel layouts (HWIO convs, NHWC-flatten-folded FCs)."""
    C = 128
    # perm[nhwc_flat_idx] = nchw_flat_idx
    perm = jnp.transpose(
        jnp.arange(C * H * W).reshape(C, H, W), (1, 2, 0)).reshape(-1)

    kp = {}
    for i in range(4):
        kp[f"ec{i+1}_w"] = jnp.transpose(pt[f"ec{i+1}_w"], (2, 3, 1, 0))   # HWIO
        kp[f"ec{i+1}_b"] = pt[f"ec{i+1}_b"]
    for i in range(4):
        # ConvTranspose2d(k=3, s=1, p=1) == same conv with spatially flipped
        # kernel and swapped in/out channels.
        w = pt[f"dc{i+1}_w"]                                               # (I,O,3,3)
        kp[f"dc{i+1}_w"] = jnp.transpose(jnp.flip(w, (2, 3)), (2, 3, 0, 1))
        kp[f"dc{i+1}_b"] = pt[f"dc{i+1}_b"]
    # Fold the NCHW flatten order of nn.Flatten() / .view() into the FC
    # weights so the Pallas path flattens/reshapes NHWC activations directly.
    kp["efc_w"] = pt["efc_w"][:, perm]          # (bottleneck, feat), NHWC inputs
    kp["efc_b"] = pt["efc_b"]
    kp["dfc_w"] = pt["dfc_w"][perm, :].T        # (bottleneck, feat), NHWC outputs
    kp["dfc_b"] = pt["dfc_b"][perm]
    return kp


# ---------------------------------------------------------------------------
# Forward pass (Pallas)
# ---------------------------------------------------------------------------
def conv_autoencoder_forward(kp, x_nchw):
    N, _, H, W = x_nchw.shape
    x = x_nchw.reshape(N, H, W, 1)        # NCHW->NHWC is a pure reshape for C==1

    # ---- encoder ----
    h = conv3x3_leaky_pool5_same(x, kp["ec1_w"], kp["ec1_b"])   # conv+act+pool fused
    h = conv3x3_same(h, kp["ec2_w"], kp["ec2_b"], act="leaky")
    h = conv3x3_same(h, kp["ec3_w"], kp["ec3_b"], act="leaky")
    h = conv3x3_same(h, kp["ec4_w"], kp["ec4_b"], act="none")
    h = h.reshape(N, -1)                  # NHWC flatten (perm folded into efc_w)
    feat = h.shape[1]
    z = encoder_fc(h, kp["efc_w"], kp["efc_b"], tk=_pick_tile(feat, 4096, 128))

    # ---- decoder ----
    h = decoder_fc(z, kp["dfc_w"], kp["dfc_b"], tn=_pick_tile(feat, 4096, 128))
    h = h.reshape(N, H, W, 128)           # already NHWC (perm folded into dfc_w)
    h = conv3x3_same(h, kp["dc1_w"], kp["dc1_b"], act="leaky")
    h = conv3x3_same(h, kp["dc2_w"], kp["dc2_b"], act="leaky")
    h = conv3x3_same(h, kp["dc3_w"], kp["dc3_b"], act="leaky")
    # nn.Upsample(scale_factor=1) is the identity
    h = conv3x3_same(h, kp["dc4_w"], kp["dc4_b"], act="sigmoid")
    return h.reshape(N, 1, H, W)          # NHWC->NCHW is a pure reshape for C==1


# ---------------------------------------------------------------------------
# Pure-JAX reference in PyTorch layouts (validates kernels + layout folding)
# ---------------------------------------------------------------------------
def reference_forward(pt, x_nchw):
    N, _, H, W = x_nchw.shape
    P = lax.Precision.HIGHEST

    def conv(x, w_oihw, bias, act):
        y = lax.conv_general_dilated(
            x, w_oihw, (1, 1), "SAME",
            dimension_numbers=("NCHW", "OIHW", "NCHW"), precision=P)
        return _activate(y + bias[None, :, None, None], act)

    def tconv(x, w_iohw, bias, act):
        w_oihw = jnp.transpose(jnp.flip(w_iohw, (2, 3)), (1, 0, 2, 3))
        return conv(x, w_oihw, bias, act)

    h = conv(x_nchw, pt["ec1_w"], pt["ec1_b"], "leaky")
    h = lax.reduce_window(h, -jnp.inf, lax.max, (1, 1, 5, 5), (1, 1, 1, 1),
                          [(0, 0), (0, 0), (2, 2), (2, 2)])
    h = conv(h, pt["ec2_w"], pt["ec2_b"], "leaky")
    h = conv(h, pt["ec3_w"], pt["ec3_b"], "leaky")
    h = conv(h, pt["ec4_w"], pt["ec4_b"], "none")
    h = h.reshape(N, -1)                               # NCHW flatten (nn.Flatten)
    z = jnp.dot(h, pt["efc_w"].T, precision=P) + pt["efc_b"]
    h = jnp.dot(z, pt["dfc_w"].T, precision=P) + pt["dfc_b"]
    h = h.reshape(N, 128, H, W)                        # x.view(-1, 128, H, W)
    h = tconv(h, pt["dc1_w"], pt["dc1_b"], "leaky")
    h = tconv(h, pt["dc2_w"], pt["dc2_b"], "leaky")
    h = tconv(h, pt["dc3_w"], pt["dc3_b"], "leaky")
    h = tconv(h, pt["dc4_w"], pt["dc4_b"], "sigmoid")
    return h


# ---------------------------------------------------------------------------
if __name__ == "__main__":
    BATCH, H, W = 2, 16, 16          # spatial size scaled down from 100 -> 16
    BOTTLENECK = 32

    key = jax.random.PRNGKey(0)
    pkey, xkey = jax.random.split(key)
    pt_params = init_pt_params(pkey, BOTTLENECK, H, W)
    kernel_params = convert_params(pt_params, H, W)
    x = jax.random.normal(xkey, (BATCH, 1, H, W), jnp.float32)

    out = jax.block_until_ready(conv_autoencoder_forward(kernel_params, x))

    assert out.shape == (BATCH, 1, H, W), out.shape
    assert bool(jnp.all(jnp.isfinite(out)))
    assert bool(jnp.all((out >= 0.0) & (out <= 1.0)))        # sigmoid range

    ref = jax.block_until_ready(reference_forward(pt_params, x))
    max_err = float(jnp.max(jnp.abs(out - ref)))
    assert max_err < 2e-3, f"mismatch vs reference: {max_err}"

    print("KERNEL_OK")
</pallas_src>

<mosaic_0001>
module attributes {stable_mosaic.version = 11 : i64} {
  func.func @conv3x3_leaky_pool5_kernel(%arg0: i32, %arg1: memref<1x16x16x1xf32, #tpu.memory_space<vmem>>, %arg2: memref<3x3x1x32xf32, #tpu.memory_space<vmem>>, %arg3: memref<1x32xf32, #tpu.memory_space<vmem>>, %arg4: memref<1x16x16x32xf32, #tpu.memory_space<vmem>>, %arg5: memref<18x25x1xf32, #tpu.memory_space<vmem>>, %arg6: memref<16x16x32xf32, #tpu.memory_space<vmem>>, %arg7: memref<20x26x32xf32, #tpu.memory_space<vmem>>) attributes {dimension_semantics = [#tpu.dimension_semantics<parallel>], iteration_bounds = array<i64: 2>, scalar_prefetch = 0 : i64, scratch_operands = 3 : i64, tpu.core_type = #tpu.core_type<tc>, window_params = [{transform_indices = @transform_0, window_bounds = array<i64: 1, 16, 16, 1>}, {pipeline_mode = #tpu.pipeline_mode<synchronous>, transform_indices = @transform_1, window_bounds = array<i64: 3, 3, 1, 32>}, {pipeline_mode = #tpu.pipeline_mode<synchronous>, transform_indices = @transform_2, window_bounds = array<i64: 1, 32>}, {transform_indices = @transform_3, window_bounds = array<i64: 1, 16, 16, 32>}]} {
    %cst = arith.constant 0.000000e+00 : f32
    %0 = vector.broadcast %cst : f32 to vector<18x25x1xf32>
    %c0 = arith.constant 0 : index
    %c0_0 = arith.constant 0 : index
    %c0_1 = arith.constant 0 : index
    %1 = vector.load %arg5[%c0, %c0_0, %c0_1] : memref<18x25x1xf32, #tpu.memory_space<vmem>>, vector<18x25x1xf32>
    tpu.vector_store %arg5[%c0, %c0_0, %c0_1], %0 {strides = array<i32>} : memref<18x25x1xf32, #tpu.memory_space<vmem>>, vector<18x25x1xf32>,
    %c0_2 = arith.constant 0 : index
    %c0_3 = arith.constant 0 : index
    %c0_4 = arith.constant 0 : index
    %c0_5 = arith.constant 0 : index
    %2 = vector.load %arg1[%c0_2, %c0_3, %c0_4, %c0_5] : memref<1x16x16x1xf32, #tpu.memory_space<vmem>>, vector<1x16x16x1xf32>
    %3 = vector.shape_cast %2 : vector<1x16x16x1xf32> to vector<16x16x1xf32>
    %c1 = arith.constant 1 : index
    %c8 = arith.constant 8 : index
    %c0_6 = arith.constant 0 : index
    %4 = vector.load %arg5[%c1, %c8, %c0_6] : memref<18x25x1xf32, #tpu.memory_space<vmem>>, vector<16x16x1xf32>
    tpu.vector_store %arg5[%c1, %c8, %c0_6], %3 {strides = array<i32>} : memref<18x25x1xf32, #tpu.memory_space<vmem>>, vector<16x16x1xf32>,
    %cst_7 = arith.constant 0.000000e+00 : f32
    %5 = vector.broadcast %cst_7 : f32 to vector<16x16x32xf32>
    %c0_8 = arith.constant 0 : index
    %c0_9 = arith.constant 0 : index
    %c0_10 = arith.constant 0 : index
    %6 = vector.load %arg6[%c0_8, %c0_9, %c0_10] : memref<16x16x32xf32, #tpu.memory_space<vmem>>, vector<16x16x32xf32>
    tpu.vector_store %arg6[%c0_8, %c0_9, %c0_10], %5 {strides = array<i32>} : memref<16x16x32xf32, #tpu.memory_space<vmem>>, vector<16x16x32xf32>,
    %c0_11 = arith.constant 0 : index
    %c0_12 = arith.constant 0 : index
    %c0_13 = arith.constant 0 : index
    %7 = vector.load %arg5[%c0_11, %c0_12, %c0_13] : memref<18x25x1xf32, #tpu.memory_space<vmem>>, vector<18x25x1xf32>
    %8 = vector.extract_strided_slice %7 {offsets = [0, 7, 0], sizes = [16, 16, 1], strides = [1, 1, 1]} : vector<18x25x1xf32> to vector<16x16x1xf32>
    %c0_14 = arith.constant 0 : index
    %c0_15 = arith.constant 0 : index
    %c0_16 = arith.constant 0 : index
    %c0_17 = arith.constant 0 : index
    %9 = vector.load %arg2[%c0_14, %c0_15, %c0_16, %c0_17] : memref<3x3x1x32xf32, #tpu.memory_space<vmem>>, vector<1x1x1x32xf32>
    %10 = vector.shape_cast %9 : vector<1x1x1x32xf32> to vector<1x32xf32>
    %c0_18 = arith.constant 0 : index
    %c0_19 = arith.constant 0 : index
    %c0_20 = arith.constant 0 : index
    %11 = vector.load %arg6[%c0_18, %c0_19, %c0_20] : memref<16x16x32xf32, #tpu.memory_space<vmem>>, vector<16x16x32xf32>
    %12 = vector.shape_cast %10 : vector<1x32xf32> to vector<1x1x32xf32>
    %13 = vector.broadcast %8 : vector<16x16x1xf32> to vector<16x16x32xf32>
    %14 = vector.broadcast %12 : vector<1x1x32xf32> to vector<16x16x32xf32>
    %15 = arith.mulf %13, %14 : vector<16x16x32xf32>
    %16 = arith.addf %11, %15 : vector<16x16x32xf32>
    %c0_21 = arith.constant 0 : index
    %c0_22 = arith.constant 0 : index
    %c0_23 = arith.constant 0 : index
    %17 = vector.load %arg6[%c0_21, %c0_22, %c0_23] : memref<16x16x32xf32, #tpu.memory_space<vmem>>, vector<16x16x32xf32>
    tpu.vector_store %arg6[%c0_21, %c0_22, %c0_23], %16 {strides = array<i32>} : memref<16x16x32xf32, #tpu.memory_space<vmem>>, vector<16x16x32xf32>,
    %18 = vector.extract_strided_slice %7 {offsets = [0, 8, 0], sizes = [16, 16, 1], strides = [1, 1, 1]} : vector<18x25x1xf32> to vector<16x16x1xf32>
    %c0_24 = arith.constant 0 : index
    %c1_25 = arith.constant 1 : index
    %c0_26 = arith.constant 0 : index
    %c0_27 = arith.constant 0 : index
    %19 = vector.load %arg2[%c0_24, %c1_25, %c0_26, %c0_27] : memref<3x3x1x32xf32, #tpu.memory_space<vmem>>, vector<1x1x1x32xf32>
    %20 = vector.shape_cast %19 : vector<1x1x1x32xf32> to vector<1x32xf32>
    %c0_28 = arith.constant 0 : index
    %c0_29 = arith.constant 0 : index
    %c0_30 = arith.constant 0 : index
    %21 = vector.load %arg6[%c0_28, %c0_29, %c0_30] : memref<16x16x32xf32, #tpu.memory_space<vmem>>, vector<16x16x32xf32>
    %22 = vector.shape_cast %20 : vector<1x32xf32> to vector<1x1x32xf32>
    %23 = vector.broadcast %18 : vector<16x16x1xf32> to vector<16x16x32xf32>
    %24 = vector.broadcast %22 : vector<1x1x32xf32> to vector<16x16x32xf32>
    %25 = arith.mulf %23, %24 : vector<16x16x32xf32>
    %26 = arith.addf %21, %25 : vector<16x16x32xf32>
    %c0_31 = arith.constant 0 : index
    %c0_32 = arith.constant 0 : index
    %c0_33 = arith.constant 0 : index
    %27 = vector.load %arg6[%c0_31, %c0_32, %c0_33] : memref<16x16x32xf32, #tpu.memory_space<vmem>>, vector<16x16x32xf32>
    tpu.vector_store %arg6[%c0_31, %c0_32, %c0_33], %26 {strides = array<i32>} : memref<16x16x32xf32, #tpu.memory_space<vmem>>, vector<16x16x32xf32>,
    %28 = vector.extract_strided_slice %7 {offsets = [0, 9, 0], sizes = [16, 16, 1], strides = [1, 1, 1]} : vector<18x25x1xf32> to vector<16x16x1xf32>
    %c0_34 = arith.constant 0 : index
    %c2 = arith.constant 2 : index
    %c0_35 = arith.constant 0 : index
    %c0_36 = arith.constant 0 : index
    %29 = vector.load %arg2[%c0_34, %c2, %c0_35, %c0_36] : memref<3x3x1x32xf32, #tpu.memory_space<vmem>>, vector<1x1x1x32xf32>
    %30 = vector.shape_cast %29 : vector<1x1x1x32xf32> to vector<1x32xf32>
    %c0_37 = arith.constant 0 : index
    %c0_38 = arith.constant 0 : index
    %c0_39 = arith.constant 0 : index
    %31 = vector.load %arg6[%c0_37, %c0_38, %c0_39] : memref<16x16x32xf32, #tpu.memory_space<vmem>>, vector<16x16x32xf32>
    %32 = vector.shape_cast %30 : vector<1x32xf32> to vector<1x1x32xf32>
    %33 = vector.broadcast %28 : vector<16x16x1xf32> to vector<16x16x32xf32>
    %34 = vector.broadcast %32 : vector<1x1x32xf32> to vector<16x16x32xf32>
    %35 = arith.mulf %33, %34 : vector<16x16x32xf32>
    %36 = arith.addf %31, %35 : vector<16x16x32xf32>
    %c0_40 = arith.constant 0 : index
    %c0_41 = arith.constant 0 : index
    %c0_42 = arith.constant 0 : index
    %37 = vector.load %arg6[%c0_40, %c0_41, %c0_42] : memref<16x16x32xf32, #tpu.memory_space<vmem>>, vector<16x16x32xf32>
    tpu.vector_store %arg6[%c0_40, %c0_41, %c0_42], %36 {strides = array<i32>} : memref<16x16x32xf32, #tpu.memory_space<vmem>>, vector<16x16x32xf32>,
    %38 = vector.extract_strided_slice %7 {offsets = [1, 7, 0], sizes = [16, 16, 1], strides = [1, 1, 1]} : vector<18x25x1xf32> to vector<16x16x1xf32>
    %c1_43 = arith.constant 1 : index
    %c0_44 = arith.constant 0 : index
    %c0_45 = arith.constant 0 : index
    %c0_46 = arith.constant 0 : index
    %39 = vector.load %arg2[%c1_43, %c0_44, %c0_45, %c0_46] : memref<3x3x1x32xf32, #tpu.memory_space<vmem>>, vector<1x1x1x32xf32>
    %40 = vector.shape_cast %39 : vector<1x1x1x32xf32> to vector<1x32xf32>
    %c0_47 = arith.constant 0 : index
    %c0_48 = arith.constant 0 : index
    %c0_49 = arith.constant 0 : index
    %41 = vector.load %arg6[%c0_47, %c0_48, %c0_49] : memref<16x16x32xf32, #tpu.memory_space<vmem>>, vector<16x16x32xf32>
    %42 = vector.shape_cast %40 : vector<1x32xf32> to vector<1x1x32xf32>
    %43 = vector.broadcast %38 : vector<16x16x1xf32> to vector<16x16x32xf32>
    %44 = vector.broadcast %42 : vector<1x1x32xf32> to vector<16x16x32xf32>
    %45 = arith.mulf %43, %44 : vector<16x16x32xf32>
    %46 = arith.addf %41, %45 : vector<16x16x32xf32>
    %c0_50 = arith.constant 0 : index
    %c0_51 = arith.constant 0 : index
    %c0_52 = arith.constant 0 : index
    %47 = vector.load %arg6[%c0_50, %c0_51, %c0_52] : memref<16x16x32xf32, #tpu.memory_space<vmem>>, vector<16x16x32xf32>
    tpu.vector_store %arg6[%c0_50, %c0_51, %c0_52], %46 {strides = array<i32>} : memref<16x16x32xf32, #tpu.memory_space<vmem>>, vector<16x16x32xf32>,
    %48 = vector.extract_strided_slice %7 {offsets = [1, 8, 0], sizes = [16, 16, 1], strides = [1, 1, 1]} : vector<18x25x1xf32> to vector<16x16x1xf32>
    %c1_53 = arith.constant 1 : index
    %c1_54 = arith.constant 1 : index
    %c0_55 = arith.constant 0 : index
    %c0_56 = arith.constant 0 : index
    %49 = vector.load %arg2[%c1_53, %c1_54, %c0_55, %c0_56] : memref<3x3x1x32xf32, #tpu.memory_space<vmem>>, vector<1x1x1x32xf32>
    %50 = vector.shape_cast %49 : vector<1x1x1x32xf32> to vector<1x32xf32>
    %c0_57 = arith.constant 0 : index
    %c0_58 = arith.constant 0 : index
    %c0_59 = arith.constant 0 : index
    %51 = vector.load %arg6[%c0_57, %c0_58, %c0_59] : memref<16x16x32xf32, #tpu.memory_space<vmem>>, vector<16x16x32xf32>
    %52 = vector.shape_cast %50 : vector<1x32xf32> to vector<1x1x32xf32>
    %53 = vector.broadcast %48 : vector<16x16x1xf32> to vector<16x16x32xf32>
    %54 = vector.broadcast %52 : vector<1x1x32xf32> to vector<16x16x32xf32>
    %55 = arith.mulf %53, %54 : vector<16x16x32xf32>
    %56 = arith.addf %51, %55 : vector<16x16x32xf32>
    %c0_60 = arith.constant 0 : index
    %c0_61 = arith.constant 0 : index
    %c0_62 = arith.constant 0 : index
    %57 = vector.load %arg6[%c0_60, %c0_61, %c0_62] : memref<16x16x32xf32, #tpu.memory_space<vmem>>, vector<16x16x32xf32>
    tpu.vector_store %arg6[%c0_60, %c0_61, %c0_62], %56 {strides = array<i32>} : memref<16x16x32xf32, #tpu.memory_space<vmem>>, vector<16x16x32xf32>,
    %58 = vector.extract_strided_slice %7 {offsets = [1, 9, 0], sizes = [16, 16, 1], strides = [1, 1, 1]} : vector<18x25x1xf32> to vector<16x16x1xf32>
    %c1_63 = arith.constant 1 : index
    %c2_64 = arith.constant 2 : index
    %c0_65 = arith.constant 0 : index
    %c0_66 = arith.constant 0 : index
    %59 = vector.load %arg2[%c1_63, %c2_64, %c0_65, %c0_66] : memref<3x3x1x32xf32, #tpu.memory_space<vmem>>, vector<1x1x1x32xf32>
    %60 = vector.shape_cast %59 : vector<1x1x1x32xf32> to vector<1x32xf32>
    %c0_67 = arith.constant 0 : index
    %c0_68 = arith.constant 0 : index
    %c0_69 = arith.constant 0 : index
    %61 = vector.load %arg6[%c0_67, %c0_68, %c0_69] : memref<16x16x32xf32, #tpu.memory_space<vmem>>, vector<16x16x32xf32>
    %62 = vector.shape_cast %60 : vector<1x32xf32> to vector<1x1x32xf32>
    %63 = vector.broadcast %58 : vector<16x16x1xf32> to vector<16x16x32xf32>
    %64 = vector.broadcast %62 : vector<1x1x32xf32> to vector<16x16x32xf32>
    %65 = arith.mulf %63, %64 : vector<16x16x32xf32>
    %66 = arith.addf %61, %65 : vector<16x16x32xf32>
    %c0_70 = arith.constant 0 : index
    %c0_71 = arith.constant 0 : index
    %c0_72 = arith.constant 0 : index
    %67 = vector.load %arg6[%c0_70, %c0_71, %c0_72] : memref<16x16x32xf32, #tpu.memory_space<vmem>>, vector<16x16x32xf32>
    tpu.vector_store %arg6[%c0_70, %c0_71, %c0_72], %66 {strides = array<i32>} : memref<16x16x32xf32, #tpu.memory_space<vmem>>, vector<16x16x32xf32>,
    %68 = vector.extract_strided_slice %7 {offsets = [2, 7, 0], sizes = [16, 16, 1], strides = [1, 1, 1]} : vector<18x25x1xf32> to vector<16x16x1xf32>
    %c2_73 = arith.constant 2 : index
    %c0_74 = arith.constant 0 : index
    %c0_75 = arith.constant 0 : index
    %c0_76 = arith.constant 0 : index
    %69 = vector.load %arg2[%c2_73, %c0_74, %c0_75, %c0_76] : memref<3x3x1x32xf32, #tpu.memory_space<vmem>>, vector<1x1x1x32xf32>
    %70 = vector.shape_cast %69 : vector<1x1x1x32xf32> to vector<1x32xf32>
    %c0_77 = arith.constant 0 : index
    %c0_78 = arith.constant 0 : index
    %c0_79 = arith.constant 0 : index
    %71 = vector.load %arg6[%c0_77, %c0_78, %c0_79] : memref<16x16x32xf32, #tpu.memory_space<vmem>>, vector<16x16x32xf32>
    %72 = vector.shape_cast %70 : vector<1x32xf32> to vector<1x1x32xf32>
    %73 = vector.broadcast %68 : vector<16x16x1xf32> to vector<16x16x32xf32>
    %74 = vector.broadcast %72 : vector<1x1x32xf32> to vector<16x16x32xf32>
    %75 = arith.mulf %73, %74 : vector<16x16x32xf32>
    %76 = arith.addf %71, %75 : vector<16x16x32xf32>
    %c0_80 = arith.constant 0 : index
    %c0_81 = arith.constant 0 : index
    %c0_82 = arith.constant 0 : index
    %77 = vector.load %arg6[%c0_80, %c0_81, %c0_82] : memref<16x16x32xf32, #tpu.memory_space<vmem>>, vector<16x16x32xf32>
    tpu.vector_store %arg6[%c0_80, %c0_81, %c0_82], %76 {strides = array<i32>} : memref<16x16x32xf32, #tpu.memory_space<vmem>>, vector<16x16x32xf32>,
    %78 = vector.extract_strided_slice %7 {offsets = [2, 8, 0], sizes = [16, 16, 1], strides = [1, 1, 1]} : vector<18x25x1xf32> to vector<16x16x1xf32>
    %c2_83 = arith.constant 2 : index
    %c1_84 = arith.constant 1 : index
    %c0_85 = arith.constant 0 : index
    %c0_86 = arith.constant 0 : index
    %79 = vector.load %arg2[%c2_83, %c1_84, %c0_85, %c0_86] : memref<3x3x1x32xf32, #tpu.memory_space<vmem>>, vector<1x1x1x32xf32>
    %80 = vector.shape_cast %79 : vector<1x1x1x32xf32> to vector<1x32xf32>
    %c0_87 = arith.constant 0 : index
    %c0_88 = arith.constant 0 : index
    %c0_89 = arith.constant 0 : index
    %81 = vector.load %arg6[%c0_87, %c0_88, %c0_89] : memref<16x16x32xf32, #tpu.memory_space<vmem>>, vector<16x16x32xf32>
    %82 = vector.shape_cast %80 : vector<1x32xf32> to vector<1x1x32xf32>
    %83 = vector.broadcast %78 : vector<16x16x1xf32> to vector<16x16x32xf32>
    %84 = vector.broadcast %82 : vector<1x1x32xf32> to vector<16x16x32xf32>
    %85 = arith.mulf %83, %84 : vector<16x16x32xf32>
    %86 = arith.addf %81, %85 : vector<16x16x32xf32>
    %c0_90 = arith.constant 0 : index
    %c0_91 = arith.constant 0 : index
    %c0_92 = arith.constant 0 : index
    %87 = vector.load %arg6[%c0_90, %c0_91, %c0_92] : memref<16x16x32xf32, #tpu.memory_space<vmem>>, vector<16x16x32xf32>
    tpu.vector_store %arg6[%c0_90, %c0_91, %c0_92], %86 {strides = array<i32>} : memref<16x16x32xf32, #tpu.memory_space<vmem>>, vector<16x16x32xf32>,
    %88 = vector.extract_strided_slice %7 {offsets = [2, 9, 0], sizes = [16, 16, 1], strides = [1, 1, 1]} : vector<18x25x1xf32> to vector<16x16x1xf32>
    %c2_93 = arith.constant 2 : index
    %c2_94 = arith.constant 2 : index
    %c0_95 = arith.constant 0 : index
    %c0_96 = arith.constant 0 : index
    %89 = vector.load %arg2[%c2_93, %c2_94, %c0_95, %c0_96] : memref<3x3x1x32xf32, #tpu.memory_space<vmem>>, vector<1x1x1x32xf32>
    %90 = vector.shape_cast %89 : vector<1x1x1x32xf32> to vector<1x32xf32>
    %c0_97 = arith.constant 0 : index
    %c0_98 = arith.constant 0 : index
    %c0_99 = arith.constant 0 : index
    %91 = vector.load %arg6[%c0_97, %c0_98, %c0_99] : memref<16x16x32xf32, #tpu.memory_space<vmem>>, vector<16x16x32xf32>
    %92 = vector.shape_cast %90 : vector<1x32xf32> to vector<1x1x32xf32>
    %93 = vector.broadcast %88 : vector<16x16x1xf32> to vector<16x16x32xf32>
    %94 = vector.broadcast %92 : vector<1x1x32xf32> to vector<16x16x32xf32>
    %95 = arith.mulf %93, %94 : vector<16x16x32xf32>
    %96 = arith.addf %91, %95 : vector<16x16x32xf32>
    %c0_100 = arith.constant 0 : index
    %c0_101 = arith.constant 0 : index
    %c0_102 = arith.constant 0 : index
    %97 = vector.load %arg6[%c0_100, %c0_101, %c0_102] : memref<16x16x32xf32, #tpu.memory_space<vmem>>, vector<16x16x32xf32>
    tpu.vector_store %arg6[%c0_100, %c0_101, %c0_102], %96 {strides = array<i32>} : memref<16x16x32xf32, #tpu.memory_space<vmem>>, vector<16x16x32xf32>,
    %c0_103 = arith.constant 0 : index
    %c0_104 = arith.constant 0 : index
    %c0_105 = arith.constant 0 : index
    %98 = vector.load %arg6[%c0_103, %c0_104, %c0_105] : memref<16x16x32xf32, #tpu.memory_space<vmem>>, vector<16x16x32xf32>
    %c0_106 = arith.constant 0 : index
    %c0_107 = arith.constant 0 : index
    %99 = vector.load %arg3[%c0_106, %c0_107] : memref<1x32xf32, #tpu.memory_space<vmem>>, vector<1x32xf32>
    %100 = vector.shape_cast %99 : vector<1x32xf32> to vector<1x1x32xf32>
    %101 = vector.broadcast %100 : vector<1x1x32xf32> to vector<16x16x32xf32>
    %102 = arith.addf %98, %101 : vector<16x16x32xf32>
    %cst_108 = arith.constant 0.000000e+00 : f32
    %103 = vector.broadcast %cst_108 : f32 to vector<16x16x32xf32>
    %104 = arith.cmpf ogt, %102, %103 : vector<16x16x32xf32>
    %cst_109 = arith.constant 0.00999999977 : f32
    %105 = vector.broadcast %cst_109 : f32 to vector<16x16x32xf32>
    %106 = arith.mulf %105, %102 : vector<16x16x32xf32>
    %107 = arith.select %104, %102, %106 : vector<16x16x32xi1>, vector<16x16x32xf32>
    %cst_110 = arith.constant 0xFF800000 : f32
    %108 = vector.broadcast %cst_110 : f32 to vector<20x26x32xf32>
    %c0_111 = arith.constant 0 : index
    %c0_112 = arith.constant 0 : index
    %c0_113 = arith.constant 0 : index
    %109 = vector.load %arg7[%c0_111, %c0_112, %c0_113] : memref<20x26x32xf32, #tpu.memory_space<vmem>>, vector<20x26x32xf32>
    tpu.vector_store %arg7[%c0_111, %c0_112, %c0_113], %108 {strides = array<i32>} : memref<20x26x32xf32, #tpu.memory_space<vmem>>, vector<20x26x32xf32>,
    %c2_114 = arith.constant 2 : index
    %c8_115 = arith.constant 8 : index
    %c0_116 = arith.constant 0 : index
    %110 = vector.load %arg7[%c2_114, %c8_115, %c0_116] : memref<20x26x32xf32, #tpu.memory_space<vmem>>, vector<16x16x32xf32>
    tpu.vector_store %arg7[%c2_114, %c8_115, %c0_116], %107 {strides = array<i32>} : memref<20x26x32xf32, #tpu.memory_space<vmem>>, vector<16x16x32xf32>,
    %c0_117 = arith.constant 0 : index
    %c0_118 = arith.constant 0 : index
    %c0_119 = arith.constant 0 : index
    %111 = vector.load %arg7[%c0_117, %c0_118, %c0_119] : memref<20x26x32xf32, #tpu.memory_space<vmem>>, vector<20x26x32xf32>
    %112 = vector.extract_strided_slice %111 {offsets = [0, 0, 0], sizes = [16, 26, 32], strides = [1, 1, 1]} : vector<20x26x32xf32> to vector<16x26x32xf32>
    %113 = vector.extract_strided_slice %111 {offsets = [1, 0, 0], sizes = [16, 26, 32], strides = [1, 1, 1]} : vector<20x26x32xf32> to vector<16x26x32xf32>
    %114 = arith.maximumf %112, %113 : vector<16x26x32xf32>
    %115 = vector.extract_strided_slice %111 {offsets = [2, 0, 0], sizes = [16, 26, 32], strides = [1, 1, 1]} : vector<20x26x32xf32> to vector<16x26x32xf32>
    %116 = arith.maximumf %114, %115 : vector<16x26x32xf32>
    %117 = vector.extract_strided_slice %111 {offsets = [3, 0, 0], sizes = [16, 26, 32], strides = [1, 1, 1]} : vector<20x26x32xf32> to vector<16x26x32xf32>
    %118 = arith.maximumf %116, %117 : vector<16x26x32xf32>
    %119 = vector.extract_strided_slice %111 {offsets = [4, 0, 0], sizes = [16, 26, 32], strides = [1, 1, 1]} : vector<20x26x32xf32> to vector<16x26x32xf32>
    %120 = arith.maximumf %118, %119 : vector<16x26x32xf32>
    %121 = vector.extract_strided_slice %120 {offsets = [0, 6, 0], sizes = [16, 16, 32], strides = [1, 1, 1]} : vector<16x26x32xf32> to vector<16x16x32xf32>
    %122 = vector.extract_strided_slice %120 {offsets = [0, 7, 0], sizes = [16, 16, 32], strides = [1, 1, 1]} : vector<16x26x32xf32> to vector<16x16x32xf32>
    %123 = arith.maximumf %121, %122 : vector<16x16x32xf32>
    %124 = vector.extract_strided_slice %120 {offsets = [0, 8, 0], sizes = [16, 16, 32], strides = [1, 1, 1]} : vector<16x26x32xf32> to vector<16x16x32xf32>
    %125 = arith.maximumf %123, %124 : vector<16x16x32xf32>
    %126 = vector.extract_strided_slice %120 {offsets = [0, 9, 0], sizes = [16, 16, 32], strides = [1, 1, 1]} : vector<16x26x32xf32> to vector<16x16x32xf32>
    %127 = arith.maximumf %125, %126 : vector<16x16x32xf32>
    %128 = vector.extract_strided_slice %120 {offsets = [0, 10, 0], sizes = [16, 16, 32], strides = [1, 1, 1]} : vector<16x26x32xf32> to vector<16x16x32xf32>
    %129 = arith.maximumf %127, %128 : vector<16x16x32xf32>
    %c0_120 = arith.constant 0 : index
    %c0_121 = arith.constant 0 : index
    %c0_122 = arith.constant 0 : index
    %c0_123 = arith.constant 0 : index
    %130 = vector.load %arg4[%c0_120, %c0_121, %c0_122, %c0_123] : memref<1x16x16x32xf32, #tpu.memory_space<vmem>>, vector<1x16x16x32xf32>
    %131 = vector.shape_cast %130 : vector<1x16x16x32xf32> to vector<16x16x32xf32>
    %132 = vector.shape_cast %129 : vector<16x16x32xf32> to vector<1x16x16x32xf32>
    tpu.vector_store %arg4[%c0_120, %c0_121, %c0_122, %c0_123], %132 {strides = array<i32>} : memref<1x16x16x32xf32, #tpu.memory_space<vmem>>, vector<1x16x16x32xf32>,
    return
  }
  func.func @transform_0(%arg0: i32) -> (i32, i32, i32, i32) {
    %c0_i32 = arith.constant 0 : i32
    %c0_i32_0 = arith.constant 0 : i32
    %c0_i32_1 = arith.constant 0 : i32
    %c0_i32_2 = arith.constant 0 : i32
    return %arg0, %c0_i32, %c0_i32_0, %c0_i32_1 : i32, i32, i32, i32
  }
  func.func @transform_1(%arg0: i32) -> (i32, i32, i32, i32) {
    %c0_i32 = arith.constant 0 : i32
    %c0_i32_0 = arith.constant 0 : i32
    %c0_i32_1 = arith.constant 0 : i32
    %c0_i32_2 = arith.constant 0 : i32
    %c0_i32_3 = arith.constant 0 : i32
    return %c0_i32, %c0_i32_0, %c0_i32_1, %c0_i32_2 : i32, i32, i32, i32
  }
  func.func @transform_2(%arg0: i32) -> (i32, i32) {
    %c0_i32 = arith.constant 0 : i32
    %c0_i32_0 = arith.constant 0 : i32
    %c0_i32_1 = arith.constant 0 : i32
    return %c0_i32, %c0_i32_0 : i32, i32
  }
  func.func @transform_3(%arg0: i32) -> (i32, i32, i32, i32) {
    %c0_i32 = arith.constant 0 : i32
    %c0_i32_0 = arith.constant 0 : i32
    %c0_i32_1 = arith.constant 0 : i32
    %c0_i32_2 = arith.constant 0 : i32
    return %arg0, %c0_i32, %c0_i32_0, %c0_i32_1 : i32, i32, i32, i32
  }
}

</mosaic_0001>

<llo_original>
// kernel: tpu_custom_call.1
$region0: #{tpu_custom_call.1}
  #allocation0 [shape = 'u32[]', space=smem, size = 0x4, offset = 0x4, fixed_abs, tag = 'smem constant byte address 0x4 - core index']
  #allocation1 [shape = 'u32[72,128]{1,0:T(1,128)}', space=vmem, size = 0x9000, scoped, tag = 'internal scratch']
  #allocation2 [shape = 'f32[18,25,1]{2,1,0:T(8,128)}', space=vmem, size = 0x48000, scoped, tag = 'scratch operand']
  #allocation3 [shape = 'f32[16,16,32]{2,1,0:T(8,128)}', space=vmem, size = 0x20000, scoped, tag = 'scratch operand']
  #allocation4 [shape = 'f32[20,26,32]{2,1,0:T(8,128)}', space=vmem, size = 0x50000, scoped, tag = 'scratch operand']
  %s0 = inlined_call_operand.vmem [shape: f32[2,16,16,1], index: 0, kind: input, shape index: {}]
  %s1 = inlined_call_operand.vmem [shape: f32[3,3,1,32], index: 1, kind: input, shape index: {}]
  %s2 = inlined_call_operand.vmem [shape: f32[1,32], index: 2, kind: input, shape index: {}]
  %s3 = inlined_call_operand.hbm [shape: f32[2,16,16,32], index: 3, kind: output, shape index: {}]
  %s4 = sld [smem:[#allocation0]]
  $region45: #{tpu_custom_call.1} parent=0
    _
  %s6 = ssub.s32 1, %s4
  %s7 = scalar_select 0, %s6, %s4
  $region1: #{tpu_custom_call.1} parent=0
    #allocation5 [shape = 'u8[262144]{0}', space=vmem, size = 0x40000, scoped, tag = 'output window, operand 0']
    #allocation6 [shape = 's32[2]{0}', space=sflag, size = 0x8, scoped, tag = 'scoped memory for tpu_custom_call.1']
    %8 = vsyncpa [#allocation6], 0
    %s9 = scalar_lea.sflag [#allocation6], 1
    %10 = vsyncpa %s9, 0
    loop: start=0, step=1, limit=4
    $region2: #{tpu_custom_call.1} parent=1 // loop_pre_header
      _
    $region3: #{tpu_custom_call.1} parent=1 // loop_header
      %s12 = sphi 0, %s16
      %p13 = scmp.ge.s32.totalorder %s12, 4
      %s22 = sphi 0, %s24
      %s25 = sphi 0, %s22
      %s26 = sphi 0, %s25
      %s42 = sphi 0, %s26
      %s46 = sphi 0, %s46
      %s48 = sphi 0, %s46
      %s49 = sphi 0, %s48
      %s63 = sphi 0, %s49
      %s67 = sphi 0, %s67
      %s69 = sphi 0, %s67
      %s70 = sphi 0, %s69
      %s84 = sphi 0, %s70
      %s90 = sphi 0, %s92
      %s93 = sphi 0, %s90
      %s94 = sphi 0, %s93
      %s110 = sphi 0, %s94
    $region4: #{tpu_custom_call.1} parent=1 // loop_header_branch
      %15 = sbr.rel (%p13) target = $region8
    $region5: #{tpu_custom_call.1} parent=1 // loop_body
      %s17 = ssub.s32 %s12, 1
      %s18 = ssub.s32 %s12, 2
      %s19 = sadd.s32 %s12, 1
      %s20 = ssub.s32 %s12, %s19
      %p21 = scmp.eq.s32.totalorder %s20, 0
      %s23 = sadd.s32 %s22, 1
      %s24 = scalar_select %p21, %s22, %s23
      %p27 = pneg %p21
      %p28 = scmp.eq.s32.totalorder %s12, 1
      %p29 = por %p27, %p28
      %p30 = scmp.ne.s32.totalorder %s22, %s25
      %p31 = scmp.eq.s32.totalorder %s12, 0
      %p32 = por %p30, %p31
      %p33 = scmp.ne.s32.totalorder %s22, %s25
      %p34 = scmp.eq.s32.totalorder %s17, 1
      %p35 = por %p33, %p34
      %p36 = scmp.ne.s32.totalorder %s25, %s26
      %p37 = scmp.eq.s32.totalorder %s17, 0
      %p38 = por %p36, %p37
      %p39 = scmp.ne.s32.totalorder %s25, %s26
      %p40 = scmp.eq.s32.totalorder %s18, 1
      %p41 = por %p39, %p40
      %p43 = scmp.ne.s32.totalorder %s26, %s42
      %p44 = scmp.eq.s32.totalorder %s18, 0
      %p45 = por %p43, %p44
      %s47 = sadd.s32 %s46, 1
      %p50 = scmp.eq.s32.totalorder %s12, 1
      %p51 = scmp.ne.s32.totalorder %s46, %s48
      %p52 = scmp.eq.s32.totalorder %s12, 0
      %p53 = por %p51, %p52
      %p54 = scmp.ne.s32.totalorder %s46, %s48
      %p55 = scmp.eq.s32.totalorder %s17, 1
      %p56 = por %p54, %p55
      %p57 = scmp.ne.s32.totalorder %s48, %s49
      %p58 = scmp.eq.s32.totalorder %s17, 0
      %p59 = por %p57, %p58
      %p60 = scmp.ne.s32.totalorder %s48, %s49
      %p61 = scmp.eq.s32.totalorder %s18, 1
      %p62 = por %p60, %p61
      %p64 = scmp.ne.s32.totalorder %s49, %s63
      %p65 = scmp.eq.s32.totalorder %s18, 0
      %p66 = por %p64, %p65
      %s68 = sadd.s32 %s67, 1
      %p71 = scmp.eq.s32.totalorder %s12, 1
      %p72 = scmp.ne.s32.totalorder %s67, %s69
      %p73 = scmp.eq.s32.totalorder %s12, 0
      %p74 = por %p72, %p73
      %p75 = scmp.ne.s32.totalorder %s67, %s69
      %p76 = scmp.eq.s32.totalorder %s17, 1
      %p77 = por %p75, %p76
      %p78 = scmp.ne.s32.totalorder %s69, %s70
      %p79 = scmp.eq.s32.totalorder %s17, 0
      %p80 = por %p78, %p79
      %p81 = scmp.ne.s32.totalorder %s69, %s70
      %p82 = scmp.eq.s32.totalorder %s18, 1
      %p83 = por %p81, %p82
      %p85 = scmp.ne.s32.totalorder %s70, %s84
      %p86 = scmp.eq.s32.totalorder %s18, 0
      %p87 = por %p85, %p86
      %s88 = ssub.s32 %s12, %s19
      %p89 = scmp.eq.s32.totalorder %s88, 0
      %s91 = sadd.s32 %s90, 1
      %s92 = scalar_select %p89, %s90, %s91
      %p95 = pneg %p89
      %p96 = scmp.eq.s32.totalorder %s12, 1
      %p97 = por %p95, %p96
      %p98 = scmp.ne.s32.totalorder %s90, %s93
      %p99 = scmp.eq.s32.totalorder %s12, 0
      %p100 = por %p98, %p99
      %p101 = scmp.ne.s32.totalorder %s90, %s93
      %p102 = scmp.eq.s32.totalorder %s17, 1
      %p103 = por %p101, %p102
      %p104 = scmp.ne.s32.totalorder %s93, %s94
      %p105 = scmp.eq.s32.totalorder %s17, 0
      %p106 = por %p104, %p105
      %p107 = scmp.ne.s32.totalorder %s93, %s94
      %p108 = scmp.eq.s32.totalorder %s18, 1
      %p109 = por %p107, %p108
      %p111 = scmp.ne.s32.totalorder %s94, %s110
      %p112 = scmp.eq.s32.totalorder %s18, 0
      %p113 = por %p111, %p112
      %p114 = scmp.le.s32.totalorder 1, %s12
      %p115 = scmp.lt.s32.totalorder %s12, 3
      %p116 = pnand %p114, %p115
      %p117 = pneg %p116
      // Predicated region
      $region9: #{tpu_custom_call.1} parent=5 // pred_check
        _
      $region10: #{tpu_custom_call.1} parent=5 // pred_check_branch
        %119 = sbr.rel (%p116) target = $region12
      $region11: #{tpu_custom_call.1} parent=5 // pred_region
        %s120 = ssub.s32 %s12, 1
        // Predicated region
        $region13: #{tpu_custom_call.1} parent=11 // pred_check
          %p121 = pneg %p59
        $region14: #{tpu_custom_call.1} parent=11 // pred_check_branch
          %123 = sbr.rel (%p121) target = $region16
        $region15: #{tpu_custom_call.1} parent=11 // pred_region
          _
        $region16: #{tpu_custom_call.1} parent=11 // pred_fallthru
          _
        // Predicated region
        $region17: #{tpu_custom_call.1} parent=11 // pred_check
          %p124 = pneg %p80
        $region18: #{tpu_custom_call.1} parent=11 // pred_check_branch
          %126 = sbr.rel (%p124) target = $region20
        $region19: #{tpu_custom_call.1} parent=11 // pred_region
          _
        $region20: #{tpu_custom_call.1} parent=11 // pred_fallthru
          _
      $region12: #{tpu_custom_call.1} parent=5 // pred_fallthru
        _
      %p127 = scmp.lt.s32.totalorder %s12, 2
      // Predicated region
      $region21: #{tpu_custom_call.1} parent=5 // pred_check
        %p128 = pneg %p127
      $region22: #{tpu_custom_call.1} parent=5 // pred_check_branch
        %130 = sbr.rel (%p128) target = $region24
      $region23: #{tpu_custom_call.1} parent=5 // pred_region
        // Predicated region
        $region25: #{tpu_custom_call.1} parent=23 // pred_check
          %p131 = pneg %p32
        $region26: #{tpu_custom_call.1} parent=23 // pred_check_branch
          %133 = sbr.rel (%p131) target = $region28
        $region27: #{tpu_custom_call.1} parent=23 // pred_region
          %p134 = scmp.lt.s32.totalorder %s12, 1
          %s135 = scalar_select %p134, %s12, 1
          %s136 = smul.addr %s135, 32
          %s137 = smul.addr %s136, 8
          %s138 = scalar_lea.vmem %s0, %s137
        $region28: #{tpu_custom_call.1} parent=23 // pred_fallthru
          _
      $region24: #{tpu_custom_call.1} parent=5 // pred_fallthru
        _
      %p139 = scmp.le.s32.totalorder 1, %s12
      %p140 = scmp.lt.s32.totalorder %s12, 3
      %p141 = pnand %p139, %p140
      %p142 = pneg %p141
      // Predicated region
      $region29: #{tpu_custom_call.1} parent=5 // pred_check
        _
      $region30: #{tpu_custom_call.1} parent=5 // pred_check_branch
        %144 = sbr.rel (%p141) target = $region32
      $region31: #{tpu_custom_call.1} parent=5 // pred_region
        %s145 = ssub.s32 %s12, 1
        %p146 = scmp.lt.s32.totalorder %s17, 1
        %s147 = scalar_select %p146, %s17, 1
        %s148 = smul.addr %s147, 32
        %s149 = smul.addr %s148, 8
        %s150 = scalar_lea.vmem %s0, %s149
        %p151 = pneg %p38
        %p152 = pneg %p35
        %p153 = pneg %p59
        %p154 = pneg %p56
        %p155 = pneg %p80
        %p156 = pneg %p77
        %p157 = pneg %p106
        %p158 = pneg %p103
        %s159 = sand.u32 %s93, 1
        %s160 = scalar_lea.sflag [#allocation6], %s159
        %s161 = sand.u32 %s93, 1
        %s162 = smul.addr %s161, 256
        %s163 = scalar_lea.vmem [#allocation5], %s162
        %p164 = scmp.lt.s32.totalorder %s17, 1
        %s165 = scalar_select %p164, %s17, 1
        %s166 = smul.addr %s165, 32
        %s167 = smul.addr %s166, 8
        %s168 = scalar_lea.vmem %s0, %s167
        %vm169 = vcmask 7168
        %170 = vst.msk [vmem:[#allocation2] sm:$0xff] %vm169, 0.0
        %171 = vst.msk [vmem:[#allocation2 + $0x8] sm:$0xff] %vm169, 0.0
        %172 = vst.msk [vmem:[#allocation2 + $0x10] sm:$0xff] %vm169, 0.0
        %vm173 = vcmask 0
        %174 = vst.msk [vmem:[#allocation2 + $0x18] sm:$0x1] %vm173, 0.0
        %175 = vst.msk [vmem:[#allocation2 + $0x20] sm:$0xff] %vm169, 0.0
        %176 = vst.msk [vmem:[#allocation2 + $0x28] sm:$0xff] %vm169, 0.0
        %177 = vst.msk [vmem:[#allocation2 + $0x30] sm:$0xff] %vm169, 0.0
        %178 = vst.msk [vmem:[#allocation2 + $0x38] sm:$0x1] %vm173, 0.0
        %179 = vst.msk [vmem:[#allocation2 + $0x40] sm:$0xff] %vm169, 0.0
        %180 = vst.msk [vmem:[#allocation2 + $0x48] sm:$0xff] %vm169, 0.0
        %181 = vst.msk [vmem:[#allocation2 + $0x50] sm:$0xff] %vm169, 0.0
        %182 = vst.msk [vmem:[#allocation2 + $0x58] sm:$0x1] %vm173, 0.0
        %183 = vst.msk [vmem:[#allocation2 + $0x60] sm:$0xff] %vm169, 0.0
        %184 = vst.msk [vmem:[#allocation2 + $0x68] sm:$0xff] %vm169, 0.0
        %185 = vst.msk [vmem:[#allocation2 + $0x70] sm:$0xff] %vm169, 0.0
        %186 = vst.msk [vmem:[#allocation2 + $0x78] sm:$0x1] %vm173, 0.0
        %187 = vst.msk [vmem:[#allocation2 + $0x80] sm:$0xff] %vm169, 0.0
        %188 = vst.msk [vmem:[#allocation2 + $0x88] sm:$0xff] %vm169, 0.0
        %189 = vst.msk [vmem:[#allocation2 + $0x90] sm:$0xff] %vm169, 0.0
        %190 = vst.msk [vmem:[#allocation2 + $0x98] sm:$0x1] %vm173, 0.0
        %191 = vst.msk [vmem:[#allocation2 + $0xa0] sm:$0xff] %vm169, 0.0
        %192 = vst.msk [vmem:[#allocation2 + $0xa8] sm:$0xff] %vm169, 0.0
        %193 = vst.msk [vmem:[#allocation2 + $0xb0] sm:$0xff] %vm169, 0.0
        %194 = vst.msk [vmem:[#allocation2 + $0xb8] sm:$0x1] %vm173, 0.0
        %195 = vst.msk [vmem:[#allocation2 + $0xc0] sm:$0xff] %vm169, 0.0
        %196 = vst.msk [vmem:[#allocation2 + $0xc8] sm:$0xff] %vm169, 0.0
        %197 = vst.msk [vmem:[#allocation2 + $0xd0] sm:$0xff] %vm169, 0.0
        %198 = vst.msk [vmem:[#allocation2 + $0xd8] sm:$0x1] %vm173, 0.0
        %199 = vst.msk [vmem:[#allocation2 + $0xe0] sm:$0xff] %vm169, 0.0
        %200 = vst.msk [vmem:[#allocation2 + $0xe8] sm:$0xff] %vm169, 0.0
        %201 = vst.msk [vmem:[#allocation2 + $0xf0] sm:$0xff] %vm169, 0.0
        %202 = vst.msk [vmem:[#allocation2 + $0xf8] sm:$0x1] %vm173, 0.0
        %203 = vst.msk [vmem:[#allocation2 + $0x100] sm:$0xff] %vm169, 0.0
        %204 = vst.msk [vmem:[#allocation2 + $0x108] sm:$0xff] %vm169, 0.0
        %205 = vst.msk [vmem:[#allocation2 + $0x110] sm:$0xff] %vm169, 0.0
        %206 = vst.msk [vmem:[#allocation2 + $0x118] sm:$0x1] %vm173, 0.0
        %207 = vst.msk [vmem:[#allocation2 + $0x120] sm:$0xff] %vm169, 0.0
        %208 = vst.msk [vmem:[#allocation2 + $0x128] sm:$0xff] %vm169, 0.0
        %209 = vst.msk [vmem:[#allocation2 + $0x130] sm:$0xff] %vm169, 0.0
        %210 = vst.msk [vmem:[#allocation2 + $0x138] sm:$0x1] %vm173, 0.0
        %211 = vst.msk [vmem:[#allocation2 + $0x140] sm:$0xff] %vm169, 0.0
        %212 = vst.msk [vmem:[#allocation2 + $0x148] sm:$0xff] %vm169, 0.0
        %213 = vst.msk [vmem:[#allocation2 + $0x150] sm:$0xff] %vm169, 0.0
        %214 = vst.msk [vmem:[#allocation2 + $0x158] sm:$0x1] %vm173, 0.0
        %215 = vst.msk [vmem:[#allocation2 + $0x160] sm:$0xff] %vm169, 0.0
        %216 = vst.msk [vmem:[#allocation2 + $0x168] sm:$0xff] %vm169, 0.0
        %217 = vst.msk [vmem:[#allocation2 + $0x170] sm:$0xff] %vm169, 0.0
        %218 = vst.msk [vmem:[#allocation2 + $0x178] sm:$0x1] %vm173, 0.0
        %219 = vst.msk [vmem:[#allocation2 + $0x180] sm:$0xff] %vm169, 0.0
        %220 = vst.msk [vmem:[#allocation2 + $0x188] sm:$0xff] %vm169, 0.0
        %221 = vst.msk [vmem:[#allocation2 + $0x190] sm:$0xff] %vm169, 0.0
        %222 = vst.msk [vmem:[#allocation2 + $0x198] sm:$0x1] %vm173, 0.0
        %223 = vst.msk [vmem:[#allocation2 + $0x1a0] sm:$0xff] %vm169, 0.0
        %224 = vst.msk [vmem:[#allocation2 + $0x1a8] sm:$0xff] %vm169, 0.0
        %225 = vst.msk [vmem:[#allocation2 + $0x1b0] sm:$0xff] %vm169, 0.0
        %226 = vst.msk [vmem:[#allocation2 + $0x1b8] sm:$0x1] %vm173, 0.0
        %227 = vst.msk [vmem:[#allocation2 + $0x1c0] sm:$0xff] %vm169, 0.0
        %228 = vst.msk [vmem:[#allocation2 + $0x1c8] sm:$0xff] %vm169, 0.0
        %229 = vst.msk [vmem:[#allocation2 + $0x1d0] sm:$0xff] %vm169, 0.0
        %230 = vst.msk [vmem:[#allocation2 + $0x1d8] sm:$0x1] %vm173, 0.0
        %231 = vst.msk [vmem:[#allocation2 + $0x1e0] sm:$0xff] %vm169, 0.0
        %232 = vst.msk [vmem:[#allocation2 + $0x1e8] sm:$0xff] %vm169, 0.0
        %233 = vst.msk [vmem:[#allocation2 + $0x1f0] sm:$0xff] %vm169, 0.0
        %234 = vst.msk [vmem:[#allocation2 + $0x1f8] sm:$0x1] %vm173, 0.0
        %235 = vst.msk [vmem:[#allocation2 + $0x200] sm:$0xff] %vm169, 0.0
        %236 = vst.msk [vmem:[#allocation2 + $0x208] sm:$0xff] %vm169, 0.0
        %237 = vst.msk [vmem:[#allocation2 + $0x210] sm:$0xff] %vm169, 0.0
        %238 = vst.msk [vmem:[#allocation2 + $0x218] sm:$0x1] %vm173, 0.0
        %239 = vst.msk [vmem:[#allocation2 + $0x220] sm:$0xff] %vm169, 0.0
        %240 = vst.msk [vmem:[#allocation2 + $0x228] sm:$0xff] %vm169, 0.0
        %241 = vst.msk [vmem:[#allocation2 + $0x230] sm:$0xff] %vm169, 0.0
        %242 = vst.msk [vmem:[#allocation2 + $0x238] sm:$0x1] %vm173, 0.0
        %v243 = vld [vmem:[%s168] sm:$0xff]
        %v244 = vld [vmem:[%s168 + $0x8] sm:$0xff]
        %v245 = vld [vmem:[%s168 + $0x10] sm:$0xff]
        %v246 = vld [vmem:[%s168 + $0x18] sm:$0xff]
        %v247 = vld [vmem:[%s168 + $0x20] sm:$0xff]
        %v248 = vld [vmem:[%s168 + $0x28] sm:$0xff]
        %v249 = vld [vmem:[%s168 + $0x30] sm:$0xff]
        %v250 = vld [vmem:[%s168 + $0x38] sm:$0xff]
        %v251 = vld [vmem:[%s168 + $0x40] sm:$0xff]
        %v252 = vld [vmem:[%s168 + $0x48] sm:$0xff]
        %v253 = vld [vmem:[%s168 + $0x50] sm:$0xff]
        %v254 = vld [vmem:[%s168 + $0x58] sm:$0xff]
        %v255 = vld [vmem:[%s168 + $0x60] sm:$0xff]
        %v256 = vld [vmem:[%s168 + $0x68] sm:$0xff]
        %v257 = vld [vmem:[%s168 + $0x70] sm:$0xff]
        %v258 = vld [vmem:[%s168 + $0x78] sm:$0xff]
        %v259 = vld [vmem:[%s168 + $0x80] sm:$0xff]
        %v260 = vld [vmem:[%s168 + $0x88] sm:$0xff]
        %v261 = vld [vmem:[%s168 + $0x90] sm:$0xff]
        %v262 = vld [vmem:[%s168 + $0x98] sm:$0xff]
        %v263 = vld [vmem:[%s168 + $0xa0] sm:$0xff]
        %v264 = vld [vmem:[%s168 + $0xa8] sm:$0xff]
        %v265 = vld [vmem:[%s168 + $0xb0] sm:$0xff]
        %v266 = vld [vmem:[%s168 + $0xb8] sm:$0xff]
        %v267 = vld [vmem:[%s168 + $0xc0] sm:$0xff]
        %v268 = vld [vmem:[%s168 + $0xc8] sm:$0xff]
        %v269 = vld [vmem:[%s168 + $0xd0] sm:$0xff]
        %v270 = vld [vmem:[%s168 + $0xd8] sm:$0xff]
        %v271 = vld [vmem:[%s168 + $0xe0] sm:$0xff]
        %v272 = vld [vmem:[%s168 + $0xe8] sm:$0xff]
        %v273 = vld [vmem:[%s168 + $0xf0] sm:$0xff]
        %v274 = vld [vmem:[%s168 + $0xf8] sm:$0xff]
        %s275 = scalar_lea.vmem [#allocation2], 32
        %276 = vst.msk [vmem:[%s275 + $0x8] sm:$0xff] %vm169, %v243
        %277 = vst.msk [vmem:[%s275 + $0x10] sm:$0xff] %vm169, %v244
        %278 = vst.msk [vmem:[%s275 + $0x28] sm:$0xff] %vm169, %v245
        %279 = vst.msk [vmem:[%s275 + $0x30] sm:$0xff] %vm169, %v246
        %280 = vst.msk [vmem:[%s275 + $0x48] sm:$0xff] %vm169, %v247
        %281 = vst.msk [vmem:[%s275 + $0x50] sm:$0xff] %vm169, %v248
        %282 = vst.msk [vmem:[%s275 + $0x68] sm:$0xff] %vm169, %v249
        %283 = vst.msk [vmem:[%s275 + $0x70] sm:$0xff] %vm169, %v250
        %284 = vst.msk [vmem:[%s275 + $0x88] sm:$0xff] %vm169, %v251
        %285 = vst.msk [vmem:[%s275 + $0x90] sm:$0xff] %vm169, %v252
        %286 = vst.msk [vmem:[%s275 + $0xa8] sm:$0xff] %vm169, %v253
        %287 = vst.msk [vmem:[%s275 + $0xb0] sm:$0xff] %vm169, %v254
        %288 = vst.msk [vmem:[%s275 + $0xc8] sm:$0xff] %vm169, %v255
        %289 = vst.msk [vmem:[%s275 + $0xd0] sm:$0xff] %vm169, %v256
        %290 = vst.msk [vmem:[%s275 + $0xe8] sm:$0xff] %vm169, %v257
        %291 = vst.msk [vmem:[%s275 + $0xf0] sm:$0xff] %vm169, %v258
        %292 = vst.msk [vmem:[%s275 + $0x108] sm:$0xff] %vm169, %v259
        %293 = vst.msk [vmem:[%s275 + $0x110] sm:$0xff] %vm169, %v260
        %294 = vst.msk [vmem:[%s275 + $0x128] sm:$0xff] %vm169, %v261
        %295 = vst.msk [vmem:[%s275 + $0x130] sm:$0xff] %vm169, %v262
        %296 = vst.msk [vmem:[%s275 + $0x148] sm:$0xff] %vm169, %v263
        %297 = vst.msk [vmem:[%s275 + $0x150] sm:$0xff] %vm169, %v264
        %298 = vst.msk [vmem:[%s275 + $0x168] sm:$0xff] %vm169, %v265
        %299 = vst.msk [vmem:[%s275 + $0x170] sm:$0xff] %vm169, %v266
        %300 = vst.msk [vmem:[%s275 + $0x188] sm:$0xff] %vm169, %v267
        %301 = vst.msk [vmem:[%s275 + $0x190] sm:$0xff] %vm169, %v268
        %302 = vst.msk [vmem:[%s275 + $0x1a8] sm:$0xff] %vm169, %v269
        %303 = vst.msk [vmem:[%s275 + $0x1b0] sm:$0xff] %vm169, %v270
        %304 = vst.msk [vmem:[%s275 + $0x1c8] sm:$0xff] %vm169, %v271
        %305 = vst.msk [vmem:[%s275 + $0x1d0] sm:$0xff] %vm169, %v272
        %306 = vst.msk [vmem:[%s275 + $0x1e8] sm:$0xff] %vm169, %v273
        %307 = vst.msk [vmem:[%s275 + $0x1f0] sm:$0xff] %vm169, %v274
        %vm308 = vcmask 261120
        %309 = vst.msk [vmem:[#allocation3] sm:$0xff] %vm308, 0.0
        %310 = vst.msk [vmem:[#allocation3 + $0x8] sm:$0xff] %vm308, 0.0
        %311 = vst.msk [vmem:[#allocation3 + $0x10] sm:$0xff] %vm308, 0.0
        %312 = vst.msk [vmem:[#allocation3 + $0x18] sm:$0xff] %vm308, 0.0
        %313 = vst.msk [vmem:[#allocation3 + $0x20] sm:$0xff] %vm308, 0.0
        %314 = vst.msk [vmem:[#allocation3 + $0x28] sm:$0xff] %vm308, 0.0
        %315 = vst.msk [vmem:[#allocation3 + $0x30] sm:$0xff] %vm308, 0.0
        %316 = vst.msk [vmem:[#allocation3 + $0x38] sm:$0xff] %vm308, 0.0
        %317 = vst.msk [vmem:[#allocation3 + $0x40] sm:$0xff] %vm308, 0.0
        %318 = vst.msk [vmem:[#allocation3 + $0x48] sm:$0xff] %vm308, 0.0
        %319 = vst.msk [vmem:[#allocation3 + $0x50] sm:$0xff] %vm308, 0.0
        %320 = vst.msk [vmem:[#allocation3 + $0x58] sm:$0xff] %vm308, 0.0
        %321 = vst.msk [vmem:[#allocation3 + $0x60] sm:$0xff] %vm308, 0.0
        %322 = vst.msk [vmem:[#allocation3 + $0x68] sm:$0xff] %vm308, 0.0
        %323 = vst.msk [vmem:[#allocation3 + $0x70] sm:$0xff] %vm308, 0.0
        %324 = vst.msk [vmem:[#allocation3 + $0x78] sm:$0xff] %vm308, 0.0
        %325 = vst.msk [vmem:[#allocation3 + $0x80] sm:$0xff] %vm308, 0.0
        %326 = vst.msk [vmem:[#allocation3 + $0x88] sm:$0xff] %vm308, 0.0
        %327 = vst.msk [vmem:[#allocation3 + $0x90] sm:$0xff] %vm308, 0.0
        %328 = vst.msk [vmem:[#allocation3 + $0x98] sm:$0xff] %vm308, 0.0
        %329 = vst.msk [vmem:[#allocation3 + $0xa0] sm:$0xff] %vm308, 0.0
        %330 = vst.msk [vmem:[#allocation3 + $0xa8] sm:$0xff] %vm308, 0.0
        %331 = vst.msk [vmem:[#allocation3 + $0xb0] sm:$0xff] %vm308, 0.0
        %332 = vst.msk [vmem:[#allocation3 + $0xb8] sm:$0xff] %vm308, 0.0
        %333 = vst.msk [vmem:[#allocation3 + $0xc0] sm:$0xff] %vm308, 0.0
        %334 = vst.msk [vmem:[#allocation3 + $0xc8] sm:$0xff] %vm308, 0.0
        %335 = vst.msk [vmem:[#allocation3 + $0xd0] sm:$0xff] %vm308, 0.0
        %336 = vst.msk [vmem:[#allocation3 + $0xd8] sm:$0xff] %vm308, 0.0
        %337 = vst.msk [vmem:[#allocation3 + $0xe0] sm:$0xff] %vm308, 0.0
        %338 = vst.msk [vmem:[#allocation3 + $0xe8] sm:$0xff] %vm308, 0.0
        %339 = vst.msk [vmem:[#allocation3 + $0xf0] sm:$0xff] %vm308, 0.0
        %340 = vst.msk [vmem:[#allocation3 + $0xf8] sm:$0xff] %vm308, 0.0
        %v341 = vld [vmem:[#allocation2] sm:$0xff]
        %v342 = vld [vmem:[#allocation2 + $0x8] sm:$0xff]
        %v343 = vld [vmem:[#allocation2 + $0x10] sm:$0xff]
        %v344 = vld [vmem:[#allocation2 + $0x18] sm:$0x1]
        %v345 = vld [vmem:[#allocation2 + $0x20] sm:$0xff]
        %v346 = vld [vmem:[#allocation2 + $0x28] sm:$0xff]
        %v347 = vld [vmem:[#allocation2 + $0x30] sm:$0xff]
        %v348 = vld [vmem:[#allocation2 + $0x38] sm:$0x1]
        %v349 = vld [vmem:[#allocation2 + $0x40] sm:$0xff]
        %v350 = vld [vmem:[#allocation2 + $0x48] sm:$0xff]
        %v351 = vld [vmem:[#allocation2 + $0x50] sm:$0xff]
        %v352 = vld [vmem:[#allocation2 + $0x58] sm:$0x1]
        %v353 = vld [vmem:[#allocation2 + $0x60] sm:$0xff]
        %v354 = vld [vmem:[#allocation2 + $0x68] sm:$0xff]
        %v355 = vld [vmem:[#allocation2 + $0x70] sm:$0xff]
        %v356 = vld [vmem:[#allocation2 + $0x78] sm:$0x1]
        %v357 = vld [vmem:[#allocation2 + $0x80] sm:$0xff]
        %v358 = vld [vmem:[#allocation2 + $0x88] sm:$0xff]
        %v359 = vld [vmem:[#allocation2 + $0x90] sm:$0xff]
        %v360 = vld [vmem:[#allocation2 + $0x98] sm:$0x1]
        %v361 = vld [vmem:[#allocation2 + $0xa0] sm:$0xff]
        %v362 = vld [vmem:[#allocation2 + $0xa8] sm:$0xff]
        %v363 = vld [vmem:[#allocation2 + $0xb0] sm:$0xff]
        %v364 = vld [vmem:[#allocation2 + $0xb8] sm:$0x1]
        %v365 = vld [vmem:[#allocation2 + $0xc0] sm:$0xff]
        %v366 = vld [vmem:[#allocation2 + $0xc8] sm:$0xff]
        %v367 = vld [vmem:[#allocation2 + $0xd0] sm:$0xff]
        %v368 = vld [vmem:[#allocation2 + $0xd8] sm:$0x1]
        %v369 = vld [vmem:[#allocation2 + $0xe0] sm:$0xff]
        %v370 = vld [vmem:[#allocation2 + $0xe8] sm:$0xff]
        %v371 = vld [vmem:[#allocation2 + $0xf0] sm:$0xff]
        %v372 = vld [vmem:[#allocation2 + $0xf8] sm:$0x1]
        %v373 = vld [vmem:[#allocation2 + $0x100] sm:$0xff]
        %v374 = vld [vmem:[#allocation2 + $0x108] sm:$0xff]
        %v375 = vld [vmem:[#allocation2 + $0x110] sm:$0xff]
        %v376 = vld [vmem:[#allocation2 + $0x118] sm:$0x1]
        %v377 = vld [vmem:[#allocation2 + $0x120] sm:$0xff]
        %v378 = vld [vmem:[#allocation2 + $0x128] sm:$0xff]
        %v379 = vld [vmem:[#allocation2 + $0x130] sm:$0xff]
        %v380 = vld [vmem:[#allocation2 + $0x138] sm:$0x1]
        %v381 = vld [vmem:[#allocation2 + $0x140] sm:$0xff]
        %v382 = vld [vmem:[#allocation2 + $0x148] sm:$0xff]
        %v383 = vld [vmem:[#allocation2 + $0x150] sm:$0xff]
        %v384 = vld [vmem:[#allocation2 + $0x158] sm:$0x1]
        %v385 = vld [vmem:[#allocation2 + $0x160] sm:$0xff]
        %v386 = vld [vmem:[#allocation2 + $0x168] sm:$0xff]
        %v387 = vld [vmem:[#allocation2 + $0x170] sm:$0xff]
        %v388 = vld [vmem:[#allocation2 + $0x178] sm:$0x1]
        %v389 = vld [vmem:[#allocation2 + $0x180] sm:$0xff]
        %v390 = vld [vmem:[#allocation2 + $0x188] sm:$0xff]
        %v391 = vld [vmem:[#allocation2 + $0x190] sm:$0xff]
        %v392 = vld [vmem:[#allocation2 + $0x198] sm:$0x1]
        %v393 = vld [vmem:[#allocation2 + $0x1a0] sm:$0xff]
        %v394 = vld [vmem:[#allocation2 + $0x1a8] sm:$0xff]
        %v395 = vld [vmem:[#allocation2 + $0x1b0] sm:$0xff]
        %v396 = vld [vmem:[#allocation2 + $0x1b8] sm:$0x1]
        %v397 = vld [vmem:[#allocation2 + $0x1c0] sm:$0xff]
        %v398 = vld [vmem:[#allocation2 + $0x1c8] sm:$0xff]
        %v399 = vld [vmem:[#allocation2 + $0x1d0] sm:$0xff]
        %v400 = vld [vmem:[#allocation2 + $0x1d8] sm:$0x1]
        %v401 = vld [vmem:[#allocation2 + $0x1e0] sm:$0xff]
        %v402 = vld [vmem:[#allocation2 + $0x1e8] sm:$0xff]
        %v403 = vld [vmem:[#allocation2 + $0x1f0] sm:$0xff]
        %v404 = vld [vmem:[#allocation2 + $0x1f8] sm:$0x1]
        %v405 = vld [vmem:[#allocation2 + $0x200] sm:$0xff]
        %v406 = vld [vmem:[#allocation2 + $0x208] sm:$0xff]
        %v407 = vld [vmem:[#allocation2 + $0x210] sm:$0xff]
        %v408 = vld [vmem:[#allocation2 + $0x218] sm:$0x1]
        %v409 = vld [vmem:[#allocation2 + $0x220] sm:$0xff]
        %v410 = vld [vmem:[#allocation2 + $0x228] sm:$0xff]
        %v411 = vld [vmem:[#allocation2 + $0x230] sm:$0xff]
        %v412 = vld [vmem:[#allocation2 + $0x238] sm:$0x1]
        %v413 = vld [vmem:[%s1] sm:$0x1]
        %v414 = vld [vmem:[#allocation3] sm:$0xff]
        %v415 = vld [vmem:[#allocation3 + $0x8] sm:$0xff]
        %v416 = vld [vmem:[#allocation3 + $0x10] sm:$0xff]
        %v417 = vld [vmem:[#allocation3 + $0x18] sm:$0xff]
        %v418 = vld [vmem:[#allocation3 + $0x20] sm:$0xff]
        %v419 = vld [vmem:[#allocation3 + $0x28] sm:$0xff]
        %v420 = vld [vmem:[#allocation3 + $0x30] sm:$0xff]
        %v421 = vld [vmem:[#allocation3 + $0x38] sm:$0xff]
        %v422 = vld [vmem:[#allocation3 + $0x40] sm:$0xff]
        %v423 = vld [vmem:[#allocation3 + $0x48] sm:$0xff]
        %v424 = vld [vmem:[#allocation3 + $0x50] sm:$0xff]
        %v425 = vld [vmem:[#allocation3 + $0x58] sm:$0xff]
        %v426 = vld [vmem:[#allocation3 + $0x60] sm:$0xff]
        %v427 = vld [vmem:[#allocation3 + $0x68] sm:$0xff]
        %v428 = vld [vmem:[#allocation3 + $0x70] sm:$0xff]
        %v429 = vld [vmem:[#allocation3 + $0x78] sm:$0xff]
        %v430 = vld [vmem:[#allocation3 + $0x80] sm:$0xff]
        %v431 = vld [vmem:[#allocation3 + $0x88] sm:$0xff]
        %v432 = vld [vmem:[#allocation3 + $0x90] sm:$0xff]
        %v433 = vld [vmem:[#allocation3 + $0x98] sm:$0xff]
        %v434 = vld [vmem:[#allocation3 + $0xa0] sm:$0xff]
        %v435 = vld [vmem:[#allocation3 + $0xa8] sm:$0xff]
        %v436 = vld [vmem:[#allocation3 + $0xb0] sm:$0xff]
        %v437 = vld [vmem:[#allocation3 + $0xb8] sm:$0xff]
        %v438 = vld [vmem:[#allocation3 + $0xc0] sm:$0xff]
        %v439 = vld [vmem:[#allocation3 + $0xc8] sm:$0xff]
        %v440 = vld [vmem:[#allocation3 + $0xd0] sm:$0xff]
        %v441 = vld [vmem:[#allocation3 + $0xd8] sm:$0xff]
        %v442 = vld [vmem:[#allocation3 + $0xe0] sm:$0xff]
        %v443 = vld [vmem:[#allocation3 + $0xe8] sm:$0xff]
        %v444 = vld [vmem:[#allocation3 + $0xf0] sm:$0xff]
        %v445 = vld [vmem:[#allocation3 + $0xf8] sm:$0xff]
        %447 = vset.pattern.permute.xlu0 0
        %448 = vperm.xlu0 %447, %v341
        %v449 = vpop.permute.xlu0 %448
        %452 = vset.pattern.permute.xlu0 0
        %453 = vperm.xlu0 %452, %v342
        %v454 = vpop.permute.xlu0 %453
        %457 = vset.pattern.permute.xlu0 0
        %458 = vperm.xlu0 %457, %v343
        %v459 = vpop.permute.xlu0 %458
        %462 = vset.pattern.permute.xlu0 0
        %463 = vperm.xlu0 %462, %v345
        %v464 = vpop.permute.xlu0 %463
        %467 = vset.pattern.permute.xlu0 0
        %468 = vperm.xlu0 %467, %v346
        %v469 = vpop.permute.xlu0 %468
        %472 = vset.pattern.permute.xlu0 0
        %473 = vperm.xlu0 %472, %v347
        %v474 = vpop.permute.xlu0 %473
        %477 = vset.pattern.permute.xlu0 0
        %478 = vperm.xlu0 %477, %v349
        %v479 = vpop.permute.xlu0 %478
        %482 = vset.pattern.permute.xlu0 0
        %483 = vperm.xlu0 %482, %v350
        %v484 = vpop.permute.xlu0 %483
        %487 = vset.pattern.permute.xlu0 0
        %488 = vperm.xlu0 %487, %v351
        %v489 = vpop.permute.xlu0 %488
        %492 = vset.pattern.permute.xlu0 0
        %493 = vperm.xlu0 %492, %v353
        %v494 = vpop.permute.xlu0 %493
        %497 = vset.pattern.permute.xlu0 0
        %498 = vperm.xlu0 %497, %v354
        %v499 = vpop.permute.xlu0 %498
        %502 = vset.pattern.permute.xlu0 0
        %503 = vperm.xlu0 %502, %v355
        %v504 = vpop.permute.xlu0 %503
        %507 = vset.pattern.permute.xlu0 0
        %508 = vperm.xlu0 %507, %v357
        %v509 = vpop.permute.xlu0 %508
        %512 = vset.pattern.permute.xlu0 0
        %513 = vperm.xlu0 %512, %v358
        %v514 = vpop.permute.xlu0 %513
        %517 = vset.pattern.permute.xlu0 0
        %518 = vperm.xlu0 %517, %v359
        %v519 = vpop.permute.xlu0 %518
        %522 = vset.pattern.permute.xlu0 0
        %523 = vperm.xlu0 %522, %v361
        %v524 = vpop.permute.xlu0 %523
        %527 = vset.pattern.permute.xlu0 0
        %528 = vperm.xlu0 %527, %v362
        %v529 = vpop.permute.xlu0 %528
        %532 = vset.pattern.permute.xlu0 0
        %533 = vperm.xlu0 %532, %v363
        %v534 = vpop.permute.xlu0 %533
        %537 = vset.pattern.permute.xlu0 0
        %538 = vperm.xlu0 %537, %v365
        %v539 = vpop.permute.xlu0 %538
        %542 = vset.pattern.permute.xlu0 0
        %543 = vperm.xlu0 %542, %v366
        %v544 = vpop.permute.xlu0 %543
        %547 = vset.pattern.permute.xlu0 0
        %548 = vperm.xlu0 %547, %v367
        %v549 = vpop.permute.xlu0 %548
        %552 = vset.pattern.permute.xlu0 0
        %553 = vperm.xlu0 %552, %v369
        %v554 = vpop.permute.xlu0 %553
        %557 = vset.pattern.permute.xlu0 0
        %558 = vperm.xlu0 %557, %v370
        %v559 = vpop.permute.xlu0 %558
        %562 = vset.pattern.permute.xlu0 0
        %563 = vperm.xlu0 %562, %v371
        %v564 = vpop.permute.xlu0 %563
        %567 = vset.pattern.permute.xlu0 0
        %568 = vperm.xlu0 %567, %v373
        %v569 = vpop.permute.xlu0 %568
        %572 = vset.pattern.permute.xlu0 0
        %573 = vperm.xlu0 %572, %v374
        %v574 = vpop.permute.xlu0 %573
        %577 = vset.pattern.permute.xlu0 0
        %578 = vperm.xlu0 %577, %v375
        %v579 = vpop.permute.xlu0 %578
        %582 = vset.pattern.permute.xlu0 0
        %583 = vperm.xlu0 %582, %v377
        %v584 = vpop.permute.xlu0 %583
        %587 = vset.pattern.permute.xlu0 0
        %588 = vperm.xlu0 %587, %v378
        %v589 = vpop.permute.xlu0 %588
        %592 = vset.pattern.permute.xlu0 0
        %593 = vperm.xlu0 %592, %v379
        %v594 = vpop.permute.xlu0 %593
        %597 = vset.pattern.permute.xlu0 0
        %598 = vperm.xlu0 %597, %v381
        %v599 = vpop.permute.xlu0 %598
        %602 = vset.pattern.permute.xlu0 0
        %603 = vperm.xlu0 %602, %v382
        %v604 = vpop.permute.xlu0 %603
        %607 = vset.pattern.permute.xlu0 0
        %608 = vperm.xlu0 %607, %v383
        %v609 = vpop.permute.xlu0 %608
        %612 = vset.pattern.permute.xlu0 0
        %613 = vperm.xlu0 %612, %v385
        %v614 = vpop.permute.xlu0 %613
        %617 = vset.pattern.permute.xlu0 0
        %618 = vperm.xlu0 %617, %v386
        %v619 = vpop.permute.xlu0 %618
        %622 = vset.pattern.permute.xlu0 0
        %623 = vperm.xlu0 %622, %v387
        %v624 = vpop.permute.xlu0 %623
        %627 = vset.pattern.permute.xlu0 0
        %628 = vperm.xlu0 %627, %v389
        %v629 = vpop.permute.xlu0 %628
        %632 = vset.pattern.permute.xlu0 0
        %633 = vperm.xlu0 %632, %v390
        %v634 = vpop.permute.xlu0 %633
        %637 = vset.pattern.permute.xlu0 0
        %638 = vperm.xlu0 %637, %v391
        %v639 = vpop.permute.xlu0 %638
        %642 = vset.pattern.permute.xlu0 0
        %643 = vperm.xlu0 %642, %v393
        %v644 = vpop.permute.xlu0 %643
        %647 = vset.pattern.permute.xlu0 0
        %648 = vperm.xlu0 %647, %v394
        %v649 = vpop.permute.xlu0 %648
        %652 = vset.pattern.permute.xlu0 0
        %653 = vperm.xlu0 %652, %v395
        %v654 = vpop.permute.xlu0 %653
        %657 = vset.pattern.permute.xlu0 0
        %658 = vperm.xlu0 %657, %v397
        %v659 = vpop.permute.xlu0 %658
        %662 = vset.pattern.permute.xlu0 0
        %663 = vperm.xlu0 %662, %v398
        %v664 = vpop.permute.xlu0 %663
        %667 = vset.pattern.permute.xlu0 0
        %668 = vperm.xlu0 %667, %v399
        %v669 = vpop.permute.xlu0 %668
        %672 = vset.pattern.permute.xlu0 0
        %673 = vperm.xlu0 %672, %v401
        %v674 = vpop.permute.xlu0 %673
        %677 = vset.pattern.permute.xlu0 0
        %678 = vperm.xlu0 %677, %v402
        %v679 = vpop.permute.xlu0 %678
        %682 = vset.pattern.permute.xlu0 0
        %683 = vperm.xlu0 %682, %v403
        %v684 = vpop.permute.xlu0 %683
        %v687 = vperm.slane %v413, 0
        %v689 = vmul.f32 %v449, %v687
        %v690 = vmul.f32 %v454, %v687
        %v691 = vmul.f32 %v459, %v687
        %v692 = vmul.f32 %v464, %v687
        %v693 = vmul.f32 %v469, %v687
        %v694 = vmul.f32 %v474, %v687
        %v695 = vmul.f32 %v479, %v687
        %v696 = vmul.f32 %v484, %v687
        %v697 = vmul.f32 %v489, %v687
        %v698 = vmul.f32 %v494, %v687
        %v699 = vmul.f32 %v499, %v687
        %v700 = vmul.f32 %v504, %v687
        %v701 = vmul.f32 %v509, %v687
        %v702 = vmul.f32 %v514, %v687
        %v703 = vmul.f32 %v519, %v687
        %v704 = vmul.f32 %v524, %v687
        %v705 = vmul.f32 %v529, %v687
        %v706 = vmul.f32 %v534, %v687
        %v707 = vmul.f32 %v539, %v687
        %v708 = vmul.f32 %v544, %v687
        %v709 = vmul.f32 %v549, %v687
        %v710 = vmul.f32 %v554, %v687
        %v711 = vmul.f32 %v559, %v687
        %v712 = vmul.f32 %v564, %v687
        %v713 = vmul.f32 %v569, %v687
        %v714 = vmul.f32 %v574, %v687
        %v715 = vmul.f32 %v579, %v687
        %v716 = vmul.f32 %v584, %v687
        %v717 = vmul.f32 %v589, %v687
        %v718 = vmul.f32 %v594, %v687
        %v719 = vmul.f32 %v599, %v687
        %v720 = vmul.f32 %v604, %v687
        %v721 = vmul.f32 %v609, %v687
        %v722 = vmul.f32 %v614, %v687
        %v723 = vmul.f32 %v619, %v687
        %v724 = vmul.f32 %v624, %v687
        %v725 = vmul.f32 %v629, %v687
        %v726 = vmul.f32 %v634, %v687
        %v727 = vmul.f32 %v639, %v687
        %v728 = vmul.f32 %v644, %v687
        %v729 = vmul.f32 %v649, %v687
        %v730 = vmul.f32 %v654, %v687
        %v731 = vmul.f32 %v659, %v687
        %v732 = vmul.f32 %v664, %v687
        %v733 = vmul.f32 %v669, %v687
        %v734 = vmul.f32 %v674, %v687
        %v735 = vmul.f32 %v679, %v687
        %v736 = vmul.f32 %v684, %v687
        %vm785 = vcmask 1040384
        %v786 = vrot.slane %v689, 7
        %v787 = vrot.slane %v690, 7
        %v788 = vsel %vm785, %v786, %v787
        %v789 = vrot.slane %v691, 7
        %v790 = vsel %vm785, %v787, %v789
        %v791 = vrot.slane %v692, 7
        %v792 = vrot.slane %v693, 7
        %v793 = vsel %vm785, %v791, %v792
        %v794 = vrot.slane %v694, 7
        %v795 = vsel %vm785, %v792, %v794
        %v796 = vrot.slane %v695, 7
        %v797 = vrot.slane %v696, 7
        %v798 = vsel %vm785, %v796, %v797
        %v799 = vrot.slane %v697, 7
        %v800 = vsel %vm785, %v797, %v799
        %v801 = vrot.slane %v698, 7
        %v802 = vrot.slane %v699, 7
        %v803 = vsel %vm785, %v801, %v802
        %v804 = vrot.slane %v700, 7
        %v805 = vsel %vm785, %v802, %v804
        %v806 = vrot.slane %v701, 7
        %v807 = vrot.slane %v702, 7
        %v808 = vsel %vm785, %v806, %v807
        %v809 = vrot.slane %v703, 7
        %v810 = vsel %vm785, %v807, %v809
        %v811 = vrot.slane %v704, 7
        %v812 = vrot.slane %v705, 7
        %v813 = vsel %vm785, %v811, %v812
        %v814 = vrot.slane %v706, 7
        %v815 = vsel %vm785, %v812, %v814
        %v816 = vrot.slane %v707, 7
        %v817 = vrot.slane %v708, 7
        %v818 = vsel %vm785, %v816, %v817
        %v819 = vrot.slane %v709, 7
        %v820 = vsel %vm785, %v817, %v819
        %v821 = vrot.slane %v710, 7
        %v822 = vrot.slane %v711, 7
        %v823 = vsel %vm785, %v821, %v822
        %v824 = vrot.slane %v712, 7
        %v825 = vsel %vm785, %v822, %v824
        %v826 = vrot.slane %v713, 7
        %v827 = vrot.slane %v714, 7
        %v828 = vsel %vm785, %v826, %v827
        %v829 = vrot.slane %v715, 7
        %v830 = vsel %vm785, %v827, %v829
        %v831 = vrot.slane %v716, 7
        %v832 = vrot.slane %v717, 7
        %v833 = vsel %vm785, %v831, %v832
        %v834 = vrot.slane %v718, 7
        %v835 = vsel %vm785, %v832, %v834
        %v836 = vrot.slane %v719, 7
        %v837 = vrot.slane %v720, 7
        %v838 = vsel %vm785, %v836, %v837
        %v839 = vrot.slane %v721, 7
        %v840 = vsel %vm785, %v837, %v839
        %v841 = vrot.slane %v722, 7
        %v842 = vrot.slane %v723, 7
        %v843 = vsel %vm785, %v841, %v842
        %v844 = vrot.slane %v724, 7
        %v845 = vsel %vm785, %v842, %v844
        %v846 = vrot.slane %v725, 7
        %v847 = vrot.slane %v726, 7
        %v848 = vsel %vm785, %v846, %v847
        %v849 = vrot.slane %v727, 7
        %v850 = vsel %vm785, %v847, %v849
        %v851 = vrot.slane %v728, 7
        %v852 = vrot.slane %v729, 7
        %v853 = vsel %vm785, %v851, %v852
        %v854 = vrot.slane %v730, 7
        %v855 = vsel %vm785, %v852, %v854
        %v856 = vrot.slane %v731, 7
        %v857 = vrot.slane %v732, 7
        %v858 = vsel %vm785, %v856, %v857
        %v859 = vrot.slane %v733, 7
        %v860 = vsel %vm785, %v857, %v859
        %v861 = vrot.slane %v734, 7
        %v862 = vrot.slane %v735, 7
        %v863 = vsel %vm785, %v861, %v862
        %v864 = vrot.slane %v736, 7
        %v865 = vsel %vm785, %v862, %v864
        %v898 = vadd.f32 %v414, %v788
        %v899 = vadd.f32 %v415, %v790
        %v900 = vadd.f32 %v416, %v793
        %v901 = vadd.f32 %v417, %v795
        %v902 = vadd.f32 %v418, %v798
        %v903 = vadd.f32 %v419, %v800
        %v904 = vadd.f32 %v420, %v803
        %v905 = vadd.f32 %v421, %v805
        %v906 = vadd.f32 %v422, %v808
        %v907 = vadd.f32 %v423, %v810
        %v908 = vadd.f32 %v424, %v813
        %v909 = vadd.f32 %v425, %v815
        %v910 = vadd.f32 %v426, %v818
        %v911 = vadd.f32 %v427, %v820
        %v912 = vadd.f32 %v428, %v823
        %v913 = vadd.f32 %v429, %v825
        %v914 = vadd.f32 %v430, %v828
        %v915 = vadd.f32 %v431, %v830
        %v916 = vadd.f32 %v432, %v833
        %v917 = vadd.f32 %v433, %v835
        %v918 = vadd.f32 %v434, %v838
        %v919 = vadd.f32 %v435, %v840
        %v920 = vadd.f32 %v436, %v843
        %v921 = vadd.f32 %v437, %v845
        %v922 = vadd.f32 %v438, %v848
        %v923 = vadd.f32 %v439, %v850
        %v924 = vadd.f32 %v440, %v853
        %v925 = vadd.f32 %v441, %v855
        %v926 = vadd.f32 %v442, %v858
        %v927 = vadd.f32 %v443, %v860
        %v928 = vadd.f32 %v444, %v863
        %v929 = vadd.f32 %v445, %v865
        %930 = vst.msk [vmem:[#allocation3] sm:$0xff] %vm308, %v898
        %931 = vst.msk [vmem:[#allocation3 + $0x8] sm:$0xff] %vm308, %v899
        %932 = vst.msk [vmem:[#allocation3 + $0x10] sm:$0xff] %vm308, %v900
        %933 = vst.msk [vmem:[#allocation3 + $0x18] sm:$0xff] %vm308, %v901
        %934 = vst.msk [vmem:[#allocation3 + $0x20] sm:$0xff] %vm308, %v902
        %935 = vst.msk [vmem:[#allocation3 + $0x28] sm:$0xff] %vm308, %v903
        %936 = vst.msk [vmem:[#allocation3 + $0x30] sm:$0xff] %vm308, %v904
        %937 = vst.msk [vmem:[#allocation3 + $0x38] sm:$0xff] %vm308, %v905
        %938 = vst.msk [vmem:[#allocation3 + $0x40] sm:$0xff] %vm308, %v906
        %939 = vst.msk [vmem:[#allocation3 + $0x48] sm:$0xff] %vm308, %v907
        %940 = vst.msk [vmem:[#allocation3 + $0x50] sm:$0xff] %vm308, %v908
        %941 = vst.msk [vmem:[#allocation3 + $0x58] sm:$0xff] %vm308, %v909
        %942 = vst.msk [vmem:[#allocation3 + $0x60] sm:$0xff] %vm308, %v910
        %943 = vst.msk [vmem:[#allocation3 + $0x68] sm:$0xff] %vm308, %v911
        %944 = vst.msk [vmem:[#allocation3 + $0x70] sm:$0xff] %vm308, %v912
        %945 = vst.msk [vmem:[#allocation3 + $0x78] sm:$0xff] %vm308, %v913
        %946 = vst.msk [vmem:[#allocation3 + $0x80] sm:$0xff] %vm308, %v914
        %947 = vst.msk [vmem:[#allocation3 + $0x88] sm:$0xff] %vm308, %v915
        %948 = vst.msk [vmem:[#allocation3 + $0x90] sm:$0xff] %vm308, %v916
        %949 = vst.msk [vmem:[#allocation3 + $0x98] sm:$0xff] %vm308, %v917
        %950 = vst.msk [vmem:[#allocation3 + $0xa0] sm:$0xff] %vm308, %v918
        %951 = vst.msk [vmem:[#allocation3 + $0xa8] sm:$0xff] %vm308, %v919
        %952 = vst.msk [vmem:[#allocation3 + $0xb0] sm:$0xff] %vm308, %v920
        %953 = vst.msk [vmem:[#allocation3 + $0xb8] sm:$0xff] %vm308, %v921
        %954 = vst.msk [vmem:[#allocation3 + $0xc0] sm:$0xff] %vm308, %v922
        %955 = vst.msk [vmem:[#allocation3 + $0xc8] sm:$0xff] %vm308, %v923
        %956 = vst.msk [vmem:[#allocation3 + $0xd0] sm:$0xff] %vm308, %v924
        %957 = vst.msk [vmem:[#allocation3 + $0xd8] sm:$0xff] %vm308, %v925
        %958 = vst.msk [vmem:[#allocation3 + $0xe0] sm:$0xff] %vm308, %v926
        %959 = vst.msk [vmem:[#allocation3 + $0xe8] sm:$0xff] %vm308, %v927
        %960 = vst.msk [vmem:[#allocation3 + $0xf0] sm:$0xff] %vm308, %v928
        %961 = vst.msk [vmem:[#allocation3 + $0xf8] sm:$0xff] %vm308, %v929
        %s962 = scalar_lea.vmem %s1, 1
        %v963 = vld [vmem:[%s962] sm:$0x1]
        %v964 = vld [vmem:[#allocation3] sm:$0xff]
        %v965 = vld [vmem:[#allocation3 + $0x8] sm:$0xff]
        %v966 = vld [vmem:[#allocation3 + $0x10] sm:$0xff]
        %v967 = vld [vmem:[#allocation3 + $0x18] sm:$0xff]
        %v968 = vld [vmem:[#allocation3 + $0x20] sm:$0xff]
        %v969 = vld [vmem:[#allocation3 + $0x28] sm:$0xff]
        %v970 = vld [vmem:[#allocation3 + $0x30] sm:$0xff]
        %v971 = vld [vmem:[#allocation3 + $0x38] sm:$0xff]
        %v972 = vld [vmem:[#allocation3 + $0x40] sm:$0xff]
        %v973 = vld [vmem:[#allocation3 + $0x48] sm:$0xff]
        %v974 = vld [vmem:[#allocation3 + $0x50] sm:$0xff]
        %v975 = vld [vmem:[#allocation3 + $0x58] sm:$0xff]
        %v976 = vld [vmem:[#allocation3 + $0x60] sm:$0xff]
        %v977 = vld [vmem:[#allocation3 + $0x68] sm:$0xff]
        %v978 = vld [vmem:[#allocation3 + $0x70] sm:$0xff]
        %v979 = vld [vmem:[#allocation3 + $0x78] sm:$0xff]
        %v980 = vld [vmem:[#allocation3 + $0x80] sm:$0xff]
        %v981 = vld [vmem:[#allocation3 + $0x88] sm:$0xff]
        %v982 = vld [vmem:[#allocation3 + $0x90] sm:$0xff]
        %v983 = vld [vmem:[#allocation3 + $0x98] sm:$0xff]
        %v984 = vld [vmem:[#allocation3 + $0xa0] sm:$0xff]
        %v985 = vld [vmem:[#allocation3 + $0xa8] sm:$0xff]
        %v986 = vld [vmem:[#allocation3 + $0xb0] sm:$0xff]
        %v987 = vld [vmem:[#allocation3 + $0xb8] sm:$0xff]
        %v988 = vld [vmem:[#allocation3 + $0xc0] sm:$0xff]
        %v989 = vld [vmem:[#allocation3 + $0xc8] sm:$0xff]
        %v990 = vld [vmem:[#allocation3 + $0xd0] sm:$0xff]
        %v991 = vld [vmem:[#allocation3 + $0xd8] sm:$0xff]
        %v992 = vld [vmem:[#allocation3 + $0xe0] sm:$0xff]
        %v993 = vld [vmem:[#allocation3 + $0xe8] sm:$0xff]
        %v994 = vld [vmem:[#allocation3 + $0xf0] sm:$0xff]
        %v995 = vld [vmem:[#allocation3 + $0xf8] sm:$0xff]
        %v997 = vperm.slane %v963, 0
        %v999 = vmul.f32 %v454, %v997
        %v1000 = vmul.f32 %v459, %v997
        %v1001 = vmul.f32 %v469, %v997
        %v1002 = vmul.f32 %v474, %v997
        %v1003 = vmul.f32 %v484, %v997
        %v1004 = vmul.f32 %v489, %v997
        %v1005 = vmul.f32 %v499, %v997
        %v1006 = vmul.f32 %v504, %v997
        %v1007 = vmul.f32 %v514, %v997
        %v1008 = vmul.f32 %v519, %v997
        %v1009 = vmul.f32 %v529, %v997
        %v1010 = vmul.f32 %v534, %v997
        %v1011 = vmul.f32 %v544, %v997
        %v1012 = vmul.f32 %v549, %v997
        %v1013 = vmul.f32 %v559, %v997
        %v1014 = vmul.f32 %v564, %v997
        %v1015 = vmul.f32 %v574, %v997
        %v1016 = vmul.f32 %v579, %v997
        %v1017 = vmul.f32 %v589, %v997
        %v1018 = vmul.f32 %v594, %v997
        %v1019 = vmul.f32 %v604, %v997
        %v1020 = vmul.f32 %v609, %v997
        %v1021 = vmul.f32 %v619, %v997
        %v1022 = vmul.f32 %v624, %v997
        %v1023 = vmul.f32 %v634, %v997
        %v1024 = vmul.f32 %v639, %v997
        %v1025 = vmul.f32 %v649, %v997
        %v1026 = vmul.f32 %v654, %v997
        %v1027 = vmul.f32 %v664, %v997
        %v1028 = vmul.f32 %v669, %v997
        %v1029 = vmul.f32 %v679, %v997
        %v1030 = vmul.f32 %v684, %v997
        %v1031 = vadd.f32 %v964, %v999
        %v1032 = vadd.f32 %v965, %v1000
        %v1033 = vadd.f32 %v966, %v1001
        %v1034 = vadd.f32 %v967, %v1002
        %v1035 = vadd.f32 %v968, %v1003
        %v1036 = vadd.f32 %v969, %v1004
        %v1037 = vadd.f32 %v970, %v1005
        %v1038 = vadd.f32 %v971, %v1006
        %v1039 = vadd.f32 %v972, %v1007
        %v1040 = vadd.f32 %v973, %v1008
        %v1041 = vadd.f32 %v974, %v1009
        %v1042 = vadd.f32 %v975, %v1010
        %v1043 = vadd.f32 %v976, %v1011
        %v1044 = vadd.f32 %v977, %v1012
        %v1045 = vadd.f32 %v978, %v1013
        %v1046 = vadd.f32 %v979, %v1014
        %v1047 = vadd.f32 %v980, %v1015
        %v1048 = vadd.f32 %v981, %v1016
        %v1049 = vadd.f32 %v982, %v1017
        %v1050 = vadd.f32 %v983, %v1018
        %v1051 = vadd.f32 %v984, %v1019
        %v1052 = vadd.f32 %v985, %v1020
        %v1053 = vadd.f32 %v986, %v1021
        %v1054 = vadd.f32 %v987, %v1022
        %v1055 = vadd.f32 %v988, %v1023
        %v1056 = vadd.f32 %v989, %v1024
        %v1057 = vadd.f32 %v990, %v1025
        %v1058 = vadd.f32 %v991, %v1026
        %v1059 = vadd.f32 %v992, %v1027
        %v1060 = vadd.f32 %v993, %v1028
        %v1061 = vadd.f32 %v994, %v1029
        %v1062 = vadd.f32 %v995, %v1030
        %1063 = vst.msk [vmem:[#allocation3] sm:$0xff] %vm308, %v1031
        %1064 = vst.msk [vmem:[#allocation3 + $0x8] sm:$0xff] %vm308, %v1032
        %1065 = vst.msk [vmem:[#allocation3 + $0x10] sm:$0xff] %vm308, %v1033
        %1066 = vst.msk [vmem:[#allocation3 + $0x18] sm:$0xff] %vm308, %v1034
        %1067 = vst.msk [vmem:[#allocation3 + $0x20] sm:$0xff] %vm308, %v1035
        %1068 = vst.msk [vmem:[#allocation3 + $0x28] sm:$0xff] %vm308, %v1036
        %1069 = vst.msk [vmem:[#allocation3 + $0x30] sm:$0xff] %vm308, %v1037
        %1070 = vst.msk [vmem:[#allocation3 + $0x38] sm:$0xff] %vm308, %v1038
        %1071 = vst.msk [vmem:[#allocation3 + $0x40] sm:$0xff] %vm308, %v1039
        %1072 = vst.msk [vmem:[#allocation3 + $0x48] sm:$0xff] %vm308, %v1040
        %1073 = vst.msk [vmem:[#allocation3 + $0x50] sm:$0xff] %vm308, %v1041
        %1074 = vst.msk [vmem:[#allocation3 + $0x58] sm:$0xff] %vm308, %v1042
        %1075 = vst.msk [vmem:[#allocation3 + $0x60] sm:$0xff] %vm308, %v1043
        %1076 = vst.msk [vmem:[#allocation3 + $0x68] sm:$0xff] %vm308, %v1044
        %1077 = vst.msk [vmem:[#allocation3 + $0x70] sm:$0xff] %vm308, %v1045
        %1078 = vst.msk [vmem:[#allocation3 + $0x78] sm:$0xff] %vm308, %v1046
        %1079 = vst.msk [vmem:[#allocation3 + $0x80] sm:$0xff] %vm308, %v1047
        %1080 = vst.msk [vmem:[#allocation3 + $0x88] sm:$0xff] %vm308, %v1048
        %1081 = vst.msk [vmem:[#allocation3 + $0x90] sm:$0xff] %vm308, %v1049
        %1082 = vst.msk [vmem:[#allocation3 + $0x98] sm:$0xff] %vm308, %v1050
        %1083 = vst.msk [vmem:[#allocation3 + $0xa0] sm:$0xff] %vm308, %v1051
        %1084 = vst.msk [vmem:[#allocation3 + $0xa8] sm:$0xff] %vm308, %v1052
        %1085 = vst.msk [vmem:[#allocation3 + $0xb0] sm:$0xff] %vm308, %v1053
        %1086 = vst.msk [vmem:[#allocation3 + $0xb8] sm:$0xff] %vm308, %v1054
        %1087 = vst.msk [vmem:[#allocation3 + $0xc0] sm:$0xff] %vm308, %v1055
        %1088 = vst.msk [vmem:[#allocation3 + $0xc8] sm:$0xff] %vm308, %v1056
        %1089 = vst.msk [vmem:[#allocation3 + $0xd0] sm:$0xff] %vm308, %v1057
        %1090 = vst.msk [vmem:[#allocation3 + $0xd8] sm:$0xff] %vm308, %v1058
        %1091 = vst.msk [vmem:[#allocation3 + $0xe0] sm:$0xff] %vm308, %v1059
        %1092 = vst.msk [vmem:[#allocation3 + $0xe8] sm:$0xff] %vm308, %v1060
        %1093 = vst.msk [vmem:[#allocation3 + $0xf0] sm:$0xff] %vm308, %v1061
        %1094 = vst.msk [vmem:[#allocation3 + $0xf8] sm:$0xff] %vm308, %v1062
        %s1095 = scalar_lea.vmem %s1, 2
        %v1096 = vld [vmem:[%s1095] sm:$0x1]
        %v1097 = vld [vmem:[#allocation3] sm:$0xff]
        %v1098 = vld [vmem:[#allocation3 + $0x8] sm:$0xff]
        %v1099 = vld [vmem:[#allocation3 + $0x10] sm:$0xff]
        %v1100 = vld [vmem:[#allocation3 + $0x18] sm:$0xff]
        %v1101 = vld [vmem:[#allocation3 + $0x20] sm:$0xff]
        %v1102 = vld [vmem:[#allocation3 + $0x28] sm:$0xff]
        %v1103 = vld [vmem:[#allocation3 + $0x30] sm:$0xff]
        %v1104 = vld [vmem:[#allocation3 + $0x38] sm:$0xff]
        %v1105 = vld [vmem:[#allocation3 + $0x40] sm:$0xff]
        %v1106 = vld [vmem:[#allocation3 + $0x48] sm:$0xff]
        %v1107 = vld [vmem:[#allocation3 + $0x50] sm:$0xff]
        %v1108 = vld [vmem:[#allocation3 + $0x58] sm:$0xff]
        %v1109 = vld [vmem:[#allocation3 + $0x60] sm:$0xff]
        %v1110 = vld [vmem:[#allocation3 + $0x68] sm:$0xff]
        %v1111 = vld [vmem:[#allocation3 + $0x70] sm:$0xff]
        %v1112 = vld [vmem:[#allocation3 + $0x78] sm:$0xff]
        %v1113 = vld [vmem:[#allocation3 + $0x80] sm:$0xff]
        %v1114 = vld [vmem:[#allocation3 + $0x88] sm:$0xff]
        %v1115 = vld [vmem:[#allocation3 + $0x90] sm:$0xff]
        %v1116 = vld [vmem:[#allocation3 + $0x98] sm:$0xff]
        %v1117 = vld [vmem:[#allocation3 + $0xa0] sm:$0xff]
        %v1118 = vld [vmem:[#allocation3 + $0xa8] sm:$0xff]
        %v1119 = vld [vmem:[#allocation3 + $0xb0] sm:$0xff]
        %v1120 = vld [vmem:[#allocation3 + $0xb8] sm:$0xff]
        %v1121 = vld [vmem:[#allocation3 + $0xc0] sm:$0xff]
        %v1122 = vld [vmem:[#allocation3 + $0xc8] sm:$0xff]
        %v1123 = vld [vmem:[#allocation3 + $0xd0] sm:$0xff]
        %v1124 = vld [vmem:[#allocation3 + $0xd8] sm:$0xff]
        %v1125 = vld [vmem:[#allocation3 + $0xe0] sm:$0xff]
        %v1126 = vld [vmem:[#allocation3 + $0xe8] sm:$0xff]
        %v1127 = vld [vmem:[#allocation3 + $0xf0] sm:$0xff]
        %v1128 = vld [vmem:[#allocation3 + $0xf8] sm:$0xff]
        %1130 = vset.pattern.permute.xlu0 0
        %1131 = vperm.xlu0 %1130, %v344
        %v1132 = vpop.permute.xlu0 %1131
        %1135 = vset.pattern.permute.xlu0 0
        %1136 = vperm.xlu0 %1135, %v348
        %v1137 = vpop.permute.xlu0 %1136
        %1140 = vset.pattern.permute.xlu0 0
        %1141 = vperm.xlu0 %1140, %v352
        %v1142 = vpop.permute.xlu0 %1141
        %1145 = vset.pattern.permute.xlu0 0
        %1146 = vperm.xlu0 %1145, %v356
        %v1147 = vpop.permute.xlu0 %1146
        %1150 = vset.pattern.permute.xlu0 0
        %1151 = vperm.xlu0 %1150, %v360
        %v1152 = vpop.permute.xlu0 %1151
        %1155 = vset.pattern.permute.xlu0 0
        %1156 = vperm.xlu0 %1155, %v364
        %v1157 = vpop.permute.xlu0 %1156
        %1160 = vset.pattern.permute.xlu0 0
        %1161 = vperm.xlu0 %1160, %v368
        %v1162 = vpop.permute.xlu0 %1161
        %1165 = vset.pattern.permute.xlu0 0
        %1166 = vperm.xlu0 %1165, %v372
        %v1167 = vpop.permute.xlu0 %1166
        %1170 = vset.pattern.permute.xlu0 0
        %1171 = vperm.xlu0 %1170, %v376
        %v1172 = vpop.permute.xlu0 %1171
        %1175 = vset.pattern.permute.xlu0 0
        %1176 = vperm.xlu0 %1175, %v380
        %v1177 = vpop.permute.xlu0 %1176
        %1180 = vset.pattern.permute.xlu0 0
        %1181 = vperm.xlu0 %1180, %v384
        %v1182 = vpop.permute.xlu0 %1181
        %1185 = vset.pattern.permute.xlu0 0
        %1186 = vperm.xlu0 %1185, %v388
        %v1187 = vpop.permute.xlu0 %1186
        %1190 = vset.pattern.permute.xlu0 0
        %1191 = vperm.xlu0 %1190, %v392
        %v1192 = vpop.permute.xlu0 %1191
        %1195 = vset.pattern.permute.xlu0 0
        %1196 = vperm.xlu0 %1195, %v396
        %v1197 = vpop.permute.xlu0 %1196
        %1200 = vset.pattern.permute.xlu0 0
        %1201 = vperm.xlu0 %1200, %v400
        %v1202 = vpop.permute.xlu0 %1201
        %1205 = vset.pattern.permute.xlu0 0
        %1206 = vperm.xlu0 %1205, %v404
        %v1207 = vpop.permute.xlu0 %1206
        %v1210 = vperm.slane %v1096, 0
        %v1212 = vmul.f32 %v454, %v1210
        %v1213 = vmul.f32 %v459, %v1210
        %v1214 = vmul.f32 %v1132, %v1210
        %v1215 = vmul.f32 %v469, %v1210
        %v1216 = vmul.f32 %v474, %v1210
        %v1217 = vmul.f32 %v1137, %v1210
        %v1218 = vmul.f32 %v484, %v1210
        %v1219 = vmul.f32 %v489, %v1210
        %v1220 = vmul.f32 %v1142, %v1210
        %v1221 = vmul.f32 %v499, %v1210
        %v1222 = vmul.f32 %v504, %v1210
        %v1223 = vmul.f32 %v1147, %v1210
        %v1224 = vmul.f32 %v514, %v1210
        %v1225 = vmul.f32 %v519, %v1210
        %v1226 = vmul.f32 %v1152, %v1210
        %v1227 = vmul.f32 %v529, %v1210
        %v1228 = vmul.f32 %v534, %v1210
        %v1229 = vmul.f32 %v1157, %v1210
        %v1230 = vmul.f32 %v544, %v1210
        %v1231 = vmul.f32 %v549, %v1210
        %v1232 = vmul.f32 %v1162, %v1210
        %v1233 = vmul.f32 %v559, %v1210
        %v1234 = vmul.f32 %v564, %v1210
        %v1235 = vmul.f32 %v1167, %v1210
        %v1236 = vmul.f32 %v574, %v1210
        %v1237 = vmul.f32 %v579, %v1210
        %v1238 = vmul.f32 %v1172, %v1210
        %v1239 = vmul.f32 %v589, %v1210
        %v1240 = vmul.f32 %v594, %v1210
        %v1241 = vmul.f32 %v1177, %v1210
        %v1242 = vmul.f32 %v604, %v1210
        %v1243 = vmul.f32 %v609, %v1210
        %v1244 = vmul.f32 %v1182, %v1210
        %v1245 = vmul.f32 %v619, %v1210
        %v1246 = vmul.f32 %v624, %v1210
        %v1247 = vmul.f32 %v1187, %v1210
        %v1248 = vmul.f32 %v634, %v1210
        %v1249 = vmul.f32 %v639, %v1210
        %v1250 = vmul.f32 %v1192, %v1210
        %v1251 = vmul.f32 %v649, %v1210
        %v1252 = vmul.f32 %v654, %v1210
        %v1253 = vmul.f32 %v1197, %v1210
        %v1254 = vmul.f32 %v664, %v1210
        %v1255 = vmul.f32 %v669, %v1210
        %v1256 = vmul.f32 %v1202, %v1210
        %v1257 = vmul.f32 %v679, %v1210
        %v1258 = vmul.f32 %v684, %v1210
        %v1259 = vmul.f32 %v1207, %v1210
        %vm1308 = vcmask 1046528
        %v1309 = vrot.slane %v1212, 1
        %v1310 = vrot.slane %v1213, 1
        %v1311 = vsel %vm1308, %v1309, %v1310
        %v1312 = vrot.slane %v1214, 1
        %v1313 = vsel %vm1308, %v1310, %v1312
        %v1314 = vrot.slane %v1215, 1
        %v1315 = vrot.slane %v1216, 1
        %v1316 = vsel %vm1308, %v1314, %v1315
        %v1317 = vrot.slane %v1217, 1
        %v1318 = vsel %vm1308, %v1315, %v1317
        %v1319 = vrot.slane %v1218, 1
        %v1320 = vrot.slane %v1219, 1
        %v1321 = vsel %vm1308, %v1319, %v1320
        %v1322 = vrot.slane %v1220, 1
        %v1323 = vsel %vm1308, %v1320, %v1322
        %v1324 = vrot.slane %v1221, 1
        %v1325 = vrot.slane %v1222, 1
        %v1326 = vsel %vm1308, %v1324, %v1325
        %v1327 = vrot.slane %v1223, 1
        %v1328 = vsel %vm1308, %v1325, %v1327
        %v1329 = vrot.slane %v1224, 1
        %v1330 = vrot.slane %v1225, 1
        %v1331 = vsel %vm1308, %v1329, %v1330
        %v1332 = vrot.slane %v1226, 1
        %v1333 = vsel %vm1308, %v1330, %v1332
        %v1334 = vrot.slane %v1227, 1
        %v1335 = vrot.slane %v1228, 1
        %v1336 = vsel %vm1308, %v1334, %v1335
        %v1337 = vrot.slane %v1229, 1
        %v1338 = vsel %vm1308, %v1335, %v1337
        %v1339 = vrot.slane %v1230, 1
        %v1340 = vrot.slane %v1231, 1
        %v1341 = vsel %vm1308, %v1339, %v1340
        %v1342 = vrot.slane %v1232, 1
        %v1343 = vsel %vm1308, %v1340, %v1342
        %v1344 = vrot.slane %v1233, 1
        %v1345 = vrot.slane %v1234, 1
        %v1346 = vsel %vm1308, %v1344, %v1345
        %v1347 = vrot.slane %v1235, 1
        %v1348 = vsel %vm1308, %v1345, %v1347
        %v1349 = vrot.slane %v1236, 1
        %v1350 = vrot.slane %v1237, 1
        %v1351 = vsel %vm1308, %v1349, %v1350
        %v1352 = vrot.slane %v1238, 1
        %v1353 = vsel %vm1308, %v1350, %v1352
        %v1354 = vrot.slane %v1239, 1
        %v1355 = vrot.slane %v1240, 1
        %v1356 = vsel %vm1308, %v1354, %v1355
        %v1357 = vrot.slane %v1241, 1
        %v1358 = vsel %vm1308, %v1355, %v1357
        %v1359 = vrot.slane %v1242, 1
        %v1360 = vrot.slane %v1243, 1
        %v1361 = vsel %vm1308, %v1359, %v1360
        %v1362 = vrot.slane %v1244, 1
        %v1363 = vsel %vm1308, %v1360, %v1362
        %v1364 = vrot.slane %v1245, 1
        %v1365 = vrot.slane %v1246, 1
        %v1366 = vsel %vm1308, %v1364, %v1365
        %v1367 = vrot.slane %v1247, 1
        %v1368 = vsel %vm1308, %v1365, %v1367
        %v1369 = vrot.slane %v1248, 1
        %v1370 = vrot.slane %v1249, 1
        %v1371 = vsel %vm1308, %v1369, %v1370
        %v1372 = vrot.slane %v1250, 1
        %v1373 = vsel %vm1308, %v1370, %v1372
        %v1374 = vrot.slane %v1251, 1
        %v1375 = vrot.slane %v1252, 1
        %v1376 = vsel %vm1308, %v1374, %v1375
        %v1377 = vrot.slane %v1253, 1
        %v1378 = vsel %vm1308, %v1375, %v1377
        %v1379 = vrot.slane %v1254, 1
        %v1380 = vrot.slane %v1255, 1
        %v1381 = vsel %vm1308, %v1379, %v1380
        %v1382 = vrot.slane %v1256, 1
        %v1383 = vsel %vm1308, %v1380, %v1382
        %v1384 = vrot.slane %v1257, 1
        %v1385 = vrot.slane %v1258, 1
        %v1386 = vsel %vm1308, %v1384, %v1385
        %v1387 = vrot.slane %v1259, 1
        %v1388 = vsel %vm1308, %v1385, %v1387
        %v1421 = vadd.f32 %v1097, %v1311
        %v1422 = vadd.f32 %v1098, %v1313
        %v1423 = vadd.f32 %v1099, %v1316
        %v1424 = vadd.f32 %v1100, %v1318
        %v1425 = vadd.f32 %v1101, %v1321
        %v1426 = vadd.f32 %v1102, %v1323
        %v1427 = vadd.f32 %v1103, %v1326
        %v1428 = vadd.f32 %v1104, %v1328
        %v1429 = vadd.f32 %v1105, %v1331
        %v1430 = vadd.f32 %v1106, %v1333
        %v1431 = vadd.f32 %v1107, %v1336
        %v1432 = vadd.f32 %v1108, %v1338
        %v1433 = vadd.f32 %v1109, %v1341
        %v1434 = vadd.f32 %v1110, %v1343
        %v1435 = vadd.f32 %v1111, %v1346
        %v1436 = vadd.f32 %v1112, %v1348
        %v1437 = vadd.f32 %v1113, %v1351
        %v1438 = vadd.f32 %v1114, %v1353
        %v1439 = vadd.f32 %v1115, %v1356
        %v1440 = vadd.f32 %v1116, %v1358
        %v1441 = vadd.f32 %v1117, %v1361
        %v1442 = vadd.f32 %v1118, %v1363
        %v1443 = vadd.f32 %v1119, %v1366
        %v1444 = vadd.f32 %v1120, %v1368
        %v1445 = vadd.f32 %v1121, %v1371
        %v1446 = vadd.f32 %v1122, %v1373
        %v1447 = vadd.f32 %v1123, %v1376
        %v1448 = vadd.f32 %v1124, %v1378
        %v1449 = vadd.f32 %v1125, %v1381
        %v1450 = vadd.f32 %v1126, %v1383
        %v1451 = vadd.f32 %v1127, %v1386
        %v1452 = vadd.f32 %v1128, %v1388
        %1453 = vst.msk [vmem:[#allocation3] sm:$0xff] %vm308, %v1421
        %1454 = vst.msk [vmem:[#allocation3 + $0x8] sm:$0xff] %vm308, %v1422
        %1455 = vst.msk [vmem:[#allocation3 + $0x10] sm:$0xff] %vm308, %v1423
        %1456 = vst.msk [vmem:[#allocation3 + $0x18] sm:$0xff] %vm308, %v1424
        %1457 = vst.msk [vmem:[#allocation3 + $0x20] sm:$0xff] %vm308, %v1425
        %1458 = vst.msk [vmem:[#allocation3 + $0x28] sm:$0xff] %vm308, %v1426
        %1459 = vst.msk [vmem:[#allocation3 + $0x30] sm:$0xff] %vm308, %v1427
        %1460 = vst.msk [vmem:[#allocation3 + $0x38] sm:$0xff] %vm308, %v1428
        %1461 = vst.msk [vmem:[#allocation3 + $0x40] sm:$0xff] %vm308, %v1429
        %1462 = vst.msk [vmem:[#allocation3 + $0x48] sm:$0xff] %vm308, %v1430
        %1463 = vst.msk [vmem:[#allocation3 + $0x50] sm:$0xff] %vm308, %v1431
        %1464 = vst.msk [vmem:[#allocation3 + $0x58] sm:$0xff] %vm308, %v1432
        %1465 = vst.msk [vmem:[#allocation3 + $0x60] sm:$0xff] %vm308, %v1433
        %1466 = vst.msk [vmem:[#allocation3 + $0x68] sm:$0xff] %vm308, %v1434
        %1467 = vst.msk [vmem:[#allocation3 + $0x70] sm:$0xff] %vm308, %v1435
        %1468 = vst.msk [vmem:[#allocation3 + $0x78] sm:$0xff] %vm308, %v1436
        %1469 = vst.msk [vmem:[#allocation3 + $0x80] sm:$0xff] %vm308, %v1437
        %1470 = vst.msk [vmem:[#allocation3 + $0x88] sm:$0xff] %vm308, %v1438
        %1471 = vst.msk [vmem:[#allocation3 + $0x90] sm:$0xff] %vm308, %v1439
        %1472 = vst.msk [vmem:[#allocation3 + $0x98] sm:$0xff] %vm308, %v1440
        %1473 = vst.msk [vmem:[#allocation3 + $0xa0] sm:$0xff] %vm308, %v1441
        %1474 = vst.msk [vmem:[#allocation3 + $0xa8] sm:$0xff] %vm308, %v1442
        %1475 = vst.msk [vmem:[#allocation3 + $0xb0] sm:$0xff] %vm308, %v1443
        %1476 = vst.msk [vmem:[#allocation3 + $0xb8] sm:$0xff] %vm308, %v1444
        %1477 = vst.msk [vmem:[#allocation3 + $0xc0] sm:$0xff] %vm308, %v1445
        %1478 = vst.msk [vmem:[#allocation3 + $0xc8] sm:$0xff] %vm308, %v1446
        %1479 = vst.msk [vmem:[#allocation3 + $0xd0] sm:$0xff] %vm308, %v1447
        %1480 = vst.msk [vmem:[#allocation3 + $0xd8] sm:$0xff] %vm308, %v1448
        %1481 = vst.msk [vmem:[#allocation3 + $0xe0] sm:$0xff] %vm308, %v1449
        %1482 = vst.msk [vmem:[#allocation3 + $0xe8] sm:$0xff] %vm308, %v1450
        %1483 = vst.msk [vmem:[#allocation3 + $0xf0] sm:$0xff] %vm308, %v1451
        %1484 = vst.msk [vmem:[#allocation3 + $0xf8] sm:$0xff] %vm308, %v1452
        %s1485 = scalar_lea.vmem %s1, 3
        %v1486 = vld [vmem:[%s1485] sm:$0x1]
        %v1487 = vld [vmem:[#allocation3] sm:$0xff]
        %v1488 = vld [vmem:[#allocation3 + $0x8] sm:$0xff]
        %v1489 = vld [vmem:[#allocation3 + $0x10] sm:$0xff]
        %v1490 = vld [vmem:[#allocation3 + $0x18] sm:$0xff]
        %v1491 = vld [vmem:[#allocation3 + $0x20] sm:$0xff]
        %v1492 = vld [vmem:[#allocation3 + $0x28] sm:$0xff]
        %v1493 = vld [vmem:[#allocation3 + $0x30] sm:$0xff]
        %v1494 = vld [vmem:[#allocation3 + $0x38] sm:$0xff]
        %v1495 = vld [vmem:[#allocation3 + $0x40] sm:$0xff]
        %v1496 = vld [vmem:[#allocation3 + $0x48] sm:$0xff]
        %v1497 = vld [vmem:[#allocation3 + $0x50] sm:$0xff]
        %v1498 = vld [vmem:[#allocation3 + $0x58] sm:$0xff]
        %v1499 = vld [vmem:[#allocation3 + $0x60] sm:$0xff]
        %v1500 = vld [vmem:[#allocation3 + $0x68] sm:$0xff]
        %v1501 = vld [vmem:[#allocation3 + $0x70] sm:$0xff]
        %v1502 = vld [vmem:[#allocation3 + $0x78] sm:$0xff]
        %v1503 = vld [vmem:[#allocation3 + $0x80] sm:$0xff]
        %v1504 = vld [vmem:[#allocation3 + $0x88] sm:$0xff]
        %v1505 = vld [vmem:[#allocation3 + $0x90] sm:$0xff]
        %v1506 = vld [vmem:[#allocation3 + $0x98] sm:$0xff]
        %v1507 = vld [vmem:[#allocation3 + $0xa0] sm:$0xff]
        %v1508 = vld [vmem:[#allocation3 + $0xa8] sm:$0xff]
        %v1509 = vld [vmem:[#allocation3 + $0xb0] sm:$0xff]
        %v1510 = vld [vmem:[#allocation3 + $0xb8] sm:$0xff]
        %v1511 = vld [vmem:[#allocation3 + $0xc0] sm:$0xff]
        %v1512 = vld [vmem:[#allocation3 + $0xc8] sm:$0xff]
        %v1513 = vld [vmem:[#allocation3 + $0xd0] sm:$0xff]
        %v1514 = vld [vmem:[#allocation3 + $0xd8] sm:$0xff]
        %v1515 = vld [vmem:[#allocation3 + $0xe0] sm:$0xff]
        %v1516 = vld [vmem:[#allocation3 + $0xe8] sm:$0xff]
        %v1517 = vld [vmem:[#allocation3 + $0xf0] sm:$0xff]
        %v1518 = vld [vmem:[#allocation3 + $0xf8] sm:$0xff]
        %1520 = vset.pattern.permute.xlu0 0
        %1521 = vperm.xlu0 %1520, %v405
        %v1522 = vpop.permute.xlu0 %1521
        %1525 = vset.pattern.permute.xlu0 0
        %1526 = vperm.xlu0 %1525, %v406
        %v1527 = vpop.permute.xlu0 %1526
        %1530 = vset.pattern.permute.xlu0 0
        %1531 = vperm.xlu0 %1530, %v407
        %v1532 = vpop.permute.xlu0 %1531
        %v1535 = vperm.slane %v1486, 0
        %v1537 = vmul.f32 %v464, %v1535
        %v1538 = vmul.f32 %v469, %v1535
        %v1539 = vmul.f32 %v474, %v1535
        %v1540 = vmul.f32 %v479, %v1535
        %v1541 = vmul.f32 %v484, %v1535
        %v1542 = vmul.f32 %v489, %v1535
        %v1543 = vmul.f32 %v494, %v1535
        %v1544 = vmul.f32 %v499, %v1535
        %v1545 = vmul.f32 %v504, %v1535
        %v1546 = vmul.f32 %v509, %v1535
        %v1547 = vmul.f32 %v514, %v1535
        %v1548 = vmul.f32 %v519, %v1535
        %v1549 = vmul.f32 %v524, %v1535
        %v1550 = vmul.f32 %v529, %v1535
        %v1551 = vmul.f32 %v534, %v1535
        %v1552 = vmul.f32 %v539, %v1535
        %v1553 = vmul.f32 %v544, %v1535
        %v1554 = vmul.f32 %v549, %v1535
        %v1555 = vmul.f32 %v554, %v1535
        %v1556 = vmul.f32 %v559, %v1535
        %v1557 = vmul.f32 %v564, %v1535
        %v1558 = vmul.f32 %v569, %v1535
        %v1559 = vmul.f32 %v574, %v1535
        %v1560 = vmul.f32 %v579, %v1535
        %v1561 = vmul.f32 %v584, %v1535
        %v1562 = vmul.f32 %v589, %v1535
        %v1563 = vmul.f32 %v594, %v1535
        %v1564 = vmul.f32 %v599, %v1535
        %v1565 = vmul.f32 %v604, %v1535
        %v1566 = vmul.f32 %v609, %v1535
        %v1567 = vmul.f32 %v614, %v1535
        %v1568 = vmul.f32 %v619, %v1535
        %v1569 = vmul.f32 %v624, %v1535
        %v1570 = vmul.f32 %v629, %v1535
        %v1571 = vmul.f32 %v634, %v1535
        %v1572 = vmul.f32 %v639, %v1535
        %v1573 = vmul.f32 %v644, %v1535
        %v1574 = vmul.f32 %v649, %v1535
        %v1575 = vmul.f32 %v654, %v1535
        %v1576 = vmul.f32 %v659, %v1535
        %v1577 = vmul.f32 %v664, %v1535
        %v1578 = vmul.f32 %v669, %v1535
        %v1579 = vmul.f32 %v674, %v1535
        %v1580 = vmul.f32 %v679, %v1535
        %v1581 = vmul.f32 %v684, %v1535
        %v1582 = vmul.f32 %v1522, %v1535
        %v1583 = vmul.f32 %v1527, %v1535
        %v1584 = vmul.f32 %v1532, %v1535
        %v1633 = vrot.slane %v1537, 7
        %v1634 = vrot.slane %v1538, 7
        %v1635 = vsel %vm785, %v1633, %v1634
        %v1636 = vrot.slane %v1539, 7
        %v1637 = vsel %vm785, %v1634, %v1636
        %v1638 = vrot.slane %v1540, 7
        %v1639 = vrot.slane %v1541, 7
        %v1640 = vsel %vm785, %v1638, %v1639
        %v1641 = vrot.slane %v1542, 7
        %v1642 = vsel %vm785, %v1639, %v1641
        %v1643 = vrot.slane %v1543, 7
        %v1644 = vrot.slane %v1544, 7
        %v1645 = vsel %vm785, %v1643, %v1644
        %v1646 = vrot.slane %v1545, 7
        %v1647 = vsel %vm785, %v1644, %v1646
        %v1648 = vrot.slane %v1546, 7
        %v1649 = vrot.slane %v1547, 7
        %v1650 = vsel %vm785, %v1648, %v1649
        %v1651 = vrot.slane %v1548, 7
        %v1652 = vsel %vm785, %v1649, %v1651
        %v1653 = vrot.slane %v1549, 7
        %v1654 = vrot.slane %v1550, 7
        %v1655 = vsel %vm785, %v1653, %v1654
        %v1656 = vrot.slane %v1551, 7
        %v1657 = vsel %vm785, %v1654, %v1656
        %v1658 = vrot.slane %v1552, 7
        %v1659 = vrot.slane %v1553, 7
        %v1660 = vsel %vm785, %v1658, %v1659
        %v1661 = vrot.slane %v1554, 7
        %v1662 = vsel %vm785, %v1659, %v1661
        %v1663 = vrot.slane %v1555, 7
        %v1664 = vrot.slane %v1556, 7
        %v1665 = vsel %vm785, %v1663, %v1664
        %v1666 = vrot.slane %v1557, 7
        %v1667 = vsel %vm785, %v1664, %v1666
        %v1668 = vrot.slane %v1558, 7
        %v1669 = vrot.slane %v1559, 7
        %v1670 = vsel %vm785, %v1668, %v1669
        %v1671 = vrot.slane %v1560, 7
        %v1672 = vsel %vm785, %v1669, %v1671
        %v1673 = vrot.slane %v1561, 7
        %v1674 = vrot.slane %v1562, 7
        %v1675 = vsel %vm785, %v1673, %v1674
        %v1676 = vrot.slane %v1563, 7
        %v1677 = vsel %vm785, %v1674, %v1676
        %v1678 = vrot.slane %v1564, 7
        %v1679 = vrot.slane %v1565, 7
        %v1680 = vsel %vm785, %v1678, %v1679
        %v1681 = vrot.slane %v1566, 7
        %v1682 = vsel %vm785, %v1679, %v1681
        %v1683 = vrot.slane %v1567, 7
        %v1684 = vrot.slane %v1568, 7
        %v1685 = vsel %vm785, %v1683, %v1684
        %v1686 = vrot.slane %v1569, 7
        %v1687 = vsel %vm785, %v1684, %v1686
        %v1688 = vrot.slane %v1570, 7
        %v1689 = vrot.slane %v1571, 7
        %v1690 = vsel %vm785, %v1688, %v1689
        %v1691 = vrot.slane %v1572, 7
        %v1692 = vsel %vm785, %v1689, %v1691
        %v1693 = vrot.slane %v1573, 7
        %v1694 = vrot.slane %v1574, 7
        %v1695 = vsel %vm785, %v1693, %v1694
        %v1696 = vrot.slane %v1575, 7
        %v1697 = vsel %vm785, %v1694, %v1696
        %v1698 = vrot.slane %v1576, 7
        %v1699 = vrot.slane %v1577, 7
        %v1700 = vsel %vm785, %v1698, %v1699
        %v1701 = vrot.slane %v1578, 7
        %v1702 = vsel %vm785, %v1699, %v1701
        %v1703 = vrot.slane %v1579, 7
        %v1704 = vrot.slane %v1580, 7
        %v1705 = vsel %vm785, %v1703, %v1704
        %v1706 = vrot.slane %v1581, 7
        %v1707 = vsel %vm785, %v1704, %v1706
        %v1708 = vrot.slane %v1582, 7
        %v1709 = vrot.slane %v1583, 7
        %v1710 = vsel %vm785, %v1708, %v1709
        %v1711 = vrot.slane %v1584, 7
        %v1712 = vsel %vm785, %v1709, %v1711
        %v1745 = vadd.f32 %v1487, %v1635
        %v1746 = vadd.f32 %v1488, %v1637
        %v1747 = vadd.f32 %v1489, %v1640
        %v1748 = vadd.f32 %v1490, %v1642
        %v1749 = vadd.f32 %v1491, %v1645
        %v1750 = vadd.f32 %v1492, %v1647
        %v1751 = vadd.f32 %v1493, %v1650
        %v1752 = vadd.f32 %v1494, %v1652
        %v1753 = vadd.f32 %v1495, %v1655
        %v1754 = vadd.f32 %v1496, %v1657
        %v1755 = vadd.f32 %v1497, %v1660
        %v1756 = vadd.f32 %v1498, %v1662
        %v1757 = vadd.f32 %v1499, %v1665
        %v1758 = vadd.f32 %v1500, %v1667
        %v1759 = vadd.f32 %v1501, %v1670
        %v1760 = vadd.f32 %v1502, %v1672
        %v1761 = vadd.f32 %v1503, %v1675
        %v1762 = vadd.f32 %v1504, %v1677
        %v1763 = vadd.f32 %v1505, %v1680
        %v1764 = vadd.f32 %v1506, %v1682
        %v1765 = vadd.f32 %v1507, %v1685
        %v1766 = vadd.f32 %v1508, %v1687
        %v1767 = vadd.f32 %v1509, %v1690
        %v1768 = vadd.f32 %v1510, %v1692
        %v1769 = vadd.f32 %v1511, %v1695
        %v1770 = vadd.f32 %v1512, %v1697
        %v1771 = vadd.f32 %v1513, %v1700
        %v1772 = vadd.f32 %v1514, %v1702
        %v1773 = vadd.f32 %v1515, %v1705
        %v1774 = vadd.f32 %v1516, %v1707
        %v1775 = vadd.f32 %v1517, %v1710
        %v1776 = vadd.f32 %v1518, %v1712
        %1777 = vst.msk [vmem:[#allocation3] sm:$0xff] %vm308, %v1745
        %1778 = vst.msk [vmem:[#allocation3 + $0x8] sm:$0xff] %vm308, %v1746
        %1779 = vst.msk [vmem:[#allocation3 + $0x10] sm:$0xff] %vm308, %v1747
        %1780 = vst.msk [vmem:[#allocation3 + $0x18] sm:$0xff] %vm308, %v1748
        %1781 = vst.msk [vmem:[#allocation3 + $0x20] sm:$0xff] %vm308, %v1749
        %1782 = vst.msk [vmem:[#allocation3 + $0x28] sm:$0xff] %vm308, %v1750
        %1783 = vst.msk [vmem:[#allocation3 + $0x30] sm:$0xff] %vm308, %v1751
        %1784 = vst.msk [vmem:[#allocation3 + $0x38] sm:$0xff] %vm308, %v1752
        %1785 = vst.msk [vmem:[#allocation3 + $0x40] sm:$0xff] %vm308, %v1753
        %1786 = vst.msk [vmem:[#allocation3 + $0x48] sm:$0xff] %vm308, %v1754
        %1787 = vst.msk [vmem:[#allocation3 + $0x50] sm:$0xff] %vm308, %v1755
        %1788 = vst.msk [vmem:[#allocation3 + $0x58] sm:$0xff] %vm308, %v1756
        %1789 = vst.msk [vmem:[#allocation3 + $0x60] sm:$0xff] %vm308, %v1757
        %1790 = vst.msk [vmem:[#allocation3 + $0x68] sm:$0xff] %vm308, %v1758
        %1791 = vst.msk [vmem:[#allocation3 + $0x70] sm:$0xff] %vm308, %v1759
        %1792 = vst.msk [vmem:[#allocation3 + $0x78] sm:$0xff] %vm308, %v1760
        %1793 = vst.msk [vmem:[#allocation3 + $0x80] sm:$0xff] %vm308, %v1761
        %1794 = vst.msk [vmem:[#allocation3 + $0x88] sm:$0xff] %vm308, %v1762
        %1795 = vst.msk [vmem:[#allocation3 + $0x90] sm:$0xff] %vm308, %v1763
        %1796 = vst.msk [vmem:[#allocation3 + $0x98] sm:$0xff] %vm308, %v1764
        %1797 = vst.msk [vmem:[#allocation3 + $0xa0] sm:$0xff] %vm308, %v1765
        %1798 = vst.msk [vmem:[#allocation3 + $0xa8] sm:$0xff] %vm308, %v1766
        %1799 = vst.msk [vmem:[#allocation3 + $0xb0] sm:$0xff] %vm308, %v1767
        %1800 = vst.msk [vmem:[#allocation3 + $0xb8] sm:$0xff] %vm308, %v1768
        %1801 = vst.msk [vmem:[#allocation3 + $0xc0] sm:$0xff] %vm308, %v1769
        %1802 = vst.msk [vmem:[#allocation3 + $0xc8] sm:$0xff] %vm308, %v1770
        %1803 = vst.msk [vmem:[#allocation3 + $0xd0] sm:$0xff] %vm308, %v1771
        %1804 = vst.msk [vmem:[#allocation3 + $0xd8] sm:$0xff] %vm308, %v1772
        %1805 = vst.msk [vmem:[#allocation3 + $0xe0] sm:$0xff] %vm308, %v1773
        %1806 = vst.msk [vmem:[#allocation3 + $0xe8] sm:$0xff] %vm308, %v1774
        %1807 = vst.msk [vmem:[#allocation3 + $0xf0] sm:$0xff] %vm308, %v1775
        %1808 = vst.msk [vmem:[#allocation3 + $0xf8] sm:$0xff] %vm308, %v1776
        %s1809 = scalar_lea.vmem %s1, 4
        %v1810 = vld [vmem:[%s1809] sm:$0x1]
        %v1811 = vld [vmem:[#allocation3] sm:$0xff]
        %v1812 = vld [vmem:[#allocation3 + $0x8] sm:$0xff]
        %v1813 = vld [vmem:[#allocation3 + $0x10] sm:$0xff]
        %v1814 = vld [vmem:[#allocation3 + $0x18] sm:$0xff]
        %v1815 = vld [vmem:[#allocation3 + $0x20] sm:$0xff]
        %v1816 = vld [vmem:[#allocation3 + $0x28] sm:$0xff]
        %v1817 = vld [vmem:[#allocation3 + $0x30] sm:$0xff]
        %v1818 = vld [vmem:[#allocation3 + $0x38] sm:$0xff]
        %v1819 = vld [vmem:[#allocation3 + $0x40] sm:$0xff]
        %v1820 = vld [vmem:[#allocation3 + $0x48] sm:$0xff]
        %v1821 = vld [vmem:[#allocation3 + $0x50] sm:$0xff]
        %v1822 = vld [vmem:[#allocation3 + $0x58] sm:$0xff]
        %v1823 = vld [vmem:[#allocation3 + $0x60] sm:$0xff]
        %v1824 = vld [vmem:[#allocation3 + $0x68] sm:$0xff]
        %v1825 = vld [vmem:[#allocation3 + $0x70] sm:$0xff]
        %v1826 = vld [vmem:[#allocation3 + $0x78] sm:$0xff]
        %v1827 = vld [vmem:[#allocation3 + $0x80] sm:$0xff]
        %v1828 = vld [vmem:[#allocation3 + $0x88] sm:$0xff]
        %v1829 = vld [vmem:[#allocation3 + $0x90] sm:$0xff]
        %v1830 = vld [vmem:[#allocation3 + $0x98] sm:$0xff]
        %v1831 = vld [vmem:[#allocation3 + $0xa0] sm:$0xff]
        %v1832 = vld [vmem:[#allocation3 + $0xa8] sm:$0xff]
        %v1833 = vld [vmem:[#allocation3 + $0xb0] sm:$0xff]
        %v1834 = vld [vmem:[#allocation3 + $0xb8] sm:$0xff]
        %v1835 = vld [vmem:[#allocation3 + $0xc0] sm:$0xff]
        %v1836 = vld [vmem:[#allocation3 + $0xc8] sm:$0xff]
        %v1837 = vld [vmem:[#allocation3 + $0xd0] sm:$0xff]
        %v1838 = vld [vmem:[#allocation3 + $0xd8] sm:$0xff]
        %v1839 = vld [vmem:[#allocation3 + $0xe0] sm:$0xff]
        %v1840 = vld [vmem:[#allocation3 + $0xe8] sm:$0xff]
        %v1841 = vld [vmem:[#allocation3 + $0xf0] sm:$0xff]
        %v1842 = vld [vmem:[#allocation3 + $0xf8] sm:$0xff]
        %v1844 = vperm.slane %v1810, 0
        %v1846 = vmul.f32 %v469, %v1844
        %v1847 = vmul.f32 %v474, %v1844
        %v1848 = vmul.f32 %v484, %v1844
        %v1849 = vmul.f32 %v489, %v1844
        %v1850 = vmul.f32 %v499, %v1844
        %v1851 = vmul.f32 %v504, %v1844
        %v1852 = vmul.f32 %v514, %v1844
        %v1853 = vmul.f32 %v519, %v1844
        %v1854 = vmul.f32 %v529, %v1844
        %v1855 = vmul.f32 %v534, %v1844
        %v1856 = vmul.f32 %v544, %v1844
        %v1857 = vmul.f32 %v549, %v1844
        %v1858 = vmul.f32 %v559, %v1844
        %v1859 = vmul.f32 %v564, %v1844
        %v1860 = vmul.f32 %v574, %v1844
        %v1861 = vmul.f32 %v579, %v1844
        %v1862 = vmul.f32 %v589, %v1844
        %v1863 = vmul.f32 %v594, %v1844
        %v1864 = vmul.f32 %v604, %v1844
        %v1865 = vmul.f32 %v609, %v1844
        %v1866 = vmul.f32 %v619, %v1844
        %v1867 = vmul.f32 %v624, %v1844
        %v1868 = vmul.f32 %v634, %v1844
        %v1869 = vmul.f32 %v639, %v1844
        %v1870 = vmul.f32 %v649, %v1844
        %v1871 = vmul.f32 %v654, %v1844
        %v1872 = vmul.f32 %v664, %v1844
        %v1873 = vmul.f32 %v669, %v1844
        %v1874 = vmul.f32 %v679, %v1844
        %v1875 = vmul.f32 %v684, %v1844
        %v1876 = vmul.f32 %v1527, %v1844
        %v1877 = vmul.f32 %v1532, %v1844
        %v1878 = vadd.f32 %v1811, %v1846
        %v1879 = vadd.f32 %v1812, %v1847
        %v1880 = vadd.f32 %v1813, %v1848
        %v1881 = vadd.f32 %v1814, %v1849
        %v1882 = vadd.f32 %v1815, %v1850
        %v1883 = vadd.f32 %v1816, %v1851
        %v1884 = vadd.f32 %v1817, %v1852
        %v1885 = vadd.f32 %v1818, %v1853
        %v1886 = vadd.f32 %v1819, %v1854
        %v1887 = vadd.f32 %v1820, %v1855
        %v1888 = vadd.f32 %v1821, %v1856
        %v1889 = vadd.f32 %v1822, %v1857
        %v1890 = vadd.f32 %v1823, %v1858
        %v1891 = vadd.f32 %v1824, %v1859
        %v1892 = vadd.f32 %v1825, %v1860
        %v1893 = vadd.f32 %v1826, %v1861
        %v1894 = vadd.f32 %v1827, %v1862
        %v1895 = vadd.f32 %v1828, %v1863
        %v1896 = vadd.f32 %v1829, %v1864
        %v1897 = vadd.f32 %v1830, %v1865
        %v1898 = vadd.f32 %v1831, %v1866
        %v1899 = vadd.f32 %v1832, %v1867
        %v1900 = vadd.f32 %v1833, %v1868
        %v1901 = vadd.f32 %v1834, %v1869
        %v1902 = vadd.f32 %v1835, %v1870
        %v1903 = vadd.f32 %v1836, %v1871
        %v1904 = vadd.f32 %v1837, %v1872
        %v1905 = vadd.f32 %v1838, %v1873
        %v1906 = vadd.f32 %v1839, %v1874
        %v1907 = vadd.f32 %v1840, %v1875
        %v1908 = vadd.f32 %v1841, %v1876
        %v1909 = vadd.f32 %v1842, %v1877
        %1910 = vst.msk [vmem:[#allocation3] sm:$0xff] %vm308, %v1878
        %1911 = vst.msk [vmem:[#allocation3 + $0x8] sm:$0xff] %vm308, %v1879
        %1912 = vst.msk [vmem:[#allocation3 + $0x10] sm:$0xff] %vm308, %v1880
        %1913 = vst.msk [vmem:[#allocation3 + $0x18] sm:$0xff] %vm308, %v1881
        %1914 = vst.msk [vmem:[#allocation3 + $0x20] sm:$0xff] %vm308, %v1882
        %1915 = vst.msk [vmem:[#allocation3 + $0x28] sm:$0xff] %vm308, %v1883
        %1916 = vst.msk [vmem:[#allocation3 + $0x30] sm:$0xff] %vm308, %v1884
        %1917 = vst.msk [vmem:[#allocation3 + $0x38] sm:$0xff] %vm308, %v1885
        %1918 = vst.msk [vmem:[#allocation3 + $0x40] sm:$0xff] %vm308, %v1886
        %1919 = vst.msk [vmem:[#allocation3 + $0x48] sm:$0xff] %vm308, %v1887
        %1920 = vst.msk [vmem:[#allocation3 + $0x50] sm:$0xff] %vm308, %v1888
        %1921 = vst.msk [vmem:[#allocation3 + $0x58] sm:$0xff] %vm308, %v1889
        %1922 = vst.msk [vmem:[#allocation3 + $0x60] sm:$0xff] %vm308, %v1890
        %1923 = vst.msk [vmem:[#allocation3 + $0x68] sm:$0xff] %vm308, %v1891
        %1924 = vst.msk [vmem:[#allocation3 + $0x70] sm:$0xff] %vm308, %v1892
        %1925 = vst.msk [vmem:[#allocation3 + $0x78] sm:$0xff] %vm308, %v1893
        %1926 = vst.msk [vmem:[#allocation3 + $0x80] sm:$0xff] %vm308, %v1894
        %1927 = vst.msk [vmem:[#allocation3 + $0x88] sm:$0xff] %vm308, %v1895
        %1928 = vst.msk [vmem:[#allocation3 + $0x90] sm:$0xff] %vm308, %v1896
        %1929 = vst.msk [vmem:[#allocation3 + $0x98] sm:$0xff] %vm308, %v1897
        %1930 = vst.msk [vmem:[#allocation3 + $0xa0] sm:$0xff] %vm308, %v1898
        %1931 = vst.msk [vmem:[#allocation3 + $0xa8] sm:$0xff] %vm308, %v1899
        %1932 = vst.msk [vmem:[#allocation3 + $0xb0] sm:$0xff] %vm308, %v1900
        %1933 = vst.msk [vmem:[#allocation3 + $0xb8] sm:$0xff] %vm308, %v1901
        %1934 = vst.msk [vmem:[#allocation3 + $0xc0] sm:$0xff] %vm308, %v1902
        %1935 = vst.msk [vmem:[#allocation3 + $0xc8] sm:$0xff] %vm308, %v1903
        %1936 = vst.msk [vmem:[#allocation3 + $0xd0] sm:$0xff] %vm308, %v1904
        %1937 = vst.msk [vmem:[#allocation3 + $0xd8] sm:$0xff] %vm308, %v1905
        %1938 = vst.msk [vmem:[#allocation3 + $0xe0] sm:$0xff] %vm308, %v1906
        %1939 = vst.msk [vmem:[#allocation3 + $0xe8] sm:$0xff] %vm308, %v1907
        %1940 = vst.msk [vmem:[#allocation3 + $0xf0] sm:$0xff] %vm308, %v1908
        %1941 = vst.msk [vmem:[#allocation3 + $0xf8] sm:$0xff] %vm308, %v1909
        %s1942 = scalar_lea.vmem %s1, 5
        %v1943 = vld [vmem:[%s1942] sm:$0x1]
        %v1944 = vld [vmem:[#allocation3] sm:$0xff]
        %v1945 = vld [vmem:[#allocation3 + $0x8] sm:$0xff]
        %v1946 = vld [vmem:[#allocation3 + $0x10] sm:$0xff]
        %v1947 = vld [vmem:[#allocation3 + $0x18] sm:$0xff]
        %v1948 = vld [vmem:[#allocation3 + $0x20] sm:$0xff]
        %v1949 = vld [vmem:[#allocation3 + $0x28] sm:$0xff]
        %v1950 = vld [vmem:[#allocation3 + $0x30] sm:$0xff]
        %v1951 = vld [vmem:[#allocation3 + $0x38] sm:$0xff]
        %v1952 = vld [vmem:[#allocation3 + $0x40] sm:$0xff]
        %v1953 = vld [vmem:[#allocation3 + $0x48] sm:$0xff]
        %v1954 = vld [vmem:[#allocation3 + $0x50] sm:$0xff]
        %v1955 = vld [vmem:[#allocation3 + $0x58] sm:$0xff]
        %v1956 = vld [vmem:[#allocation3 + $0x60] sm:$0xff]
        %v1957 = vld [vmem:[#allocation3 + $0x68] sm:$0xff]
        %v1958 = vld [vmem:[#allocation3 + $0x70] sm:$0xff]
        %v1959 = vld [vmem:[#allocation3 + $0x78] sm:$0xff]
        %v1960 = vld [vmem:[#allocation3 + $0x80] sm:$0xff]
        %v1961 = vld [vmem:[#allocation3 + $0x88] sm:$0xff]
        %v1962 = vld [vmem:[#allocation3 + $0x90] sm:$0xff]
        %v1963 = vld [vmem:[#allocation3 + $0x98] sm:$0xff]
        %v1964 = vld [vmem:[#allocation3 + $0xa0] sm:$0xff]
        %v1965 = vld [vmem:[#allocation3 + $0xa8] sm:$0xff]
        %v1966 = vld [vmem:[#allocation3 + $0xb0] sm:$0xff]
        %v1967 = vld [vmem:[#allocation3 + $0xb8] sm:$0xff]
        %v1968 = vld [vmem:[#allocation3 + $0xc0] sm:$0xff]
        %v1969 = vld [vmem:[#allocation3 + $0xc8] sm:$0xff]
        %v1970 = vld [vmem:[#allocation3 + $0xd0] sm:$0xff]
        %v1971 = vld [vmem:[#allocation3 + $0xd8] sm:$0xff]
        %v1972 = vld [vmem:[#allocation3 + $0xe0] sm:$0xff]
        %v1973 = vld [vmem:[#allocation3 + $0xe8] sm:$0xff]
        %v1974 = vld [vmem:[#allocation3 + $0xf0] sm:$0xff]
        %v1975 = vld [vmem:[#allocation3 + $0xf8] sm:$0xff]
        %1977 = vset.pattern.permute.xlu0 0
        %1978 = vperm.xlu0 %1977, %v408
        %v1979 = vpop.permute.xlu0 %1978
        %v1982 = vperm.slane %v1943, 0
        %v1984 = vmul.f32 %v469, %v1982
        %v1985 = vmul.f32 %v474, %v1982
        %v1986 = vmul.f32 %v1137, %v1982
        %v1987 = vmul.f32 %v484, %v1982
        %v1988 = vmul.f32 %v489, %v1982
        %v1989 = vmul.f32 %v1142, %v1982
        %v1990 = vmul.f32 %v499, %v1982
        %v1991 = vmul.f32 %v504, %v1982
        %v1992 = vmul.f32 %v1147, %v1982
        %v1993 = vmul.f32 %v514, %v1982
        %v1994 = vmul.f32 %v519, %v1982
        %v1995 = vmul.f32 %v1152, %v1982
        %v1996 = vmul.f32 %v529, %v1982
        %v1997 = vmul.f32 %v534, %v1982
        %v1998 = vmul.f32 %v1157, %v1982
        %v1999 = vmul.f32 %v544, %v1982
        %v2000 = vmul.f32 %v549, %v1982
        %v2001 = vmul.f32 %v1162, %v1982
        %v2002 = vmul.f32 %v559, %v1982
        %v2003 = vmul.f32 %v564, %v1982
        %v2004 = vmul.f32 %v1167, %v1982
        %v2005 = vmul.f32 %v574, %v1982
        %v2006 = vmul.f32 %v579, %v1982
        %v2007 = vmul.f32 %v1172, %v1982
        %v2008 = vmul.f32 %v589, %v1982
        %v2009 = vmul.f32 %v594, %v1982
        %v2010 = vmul.f32 %v1177, %v1982
        %v2011 = vmul.f32 %v604, %v1982
        %v2012 = vmul.f32 %v609, %v1982
        %v2013 = vmul.f32 %v1182, %v1982
        %v2014 = vmul.f32 %v619, %v1982
        %v2015 = vmul.f32 %v624, %v1982
        %v2016 = vmul.f32 %v1187, %v1982
        %v2017 = vmul.f32 %v634, %v1982
        %v2018 = vmul.f32 %v639, %v1982
        %v2019 = vmul.f32 %v1192, %v1982
        %v2020 = vmul.f32 %v649, %v1982
        %v2021 = vmul.f32 %v654, %v1982
        %v2022 = vmul.f32 %v1197, %v1982
        %v2023 = vmul.f32 %v664, %v1982
        %v2024 = vmul.f32 %v669, %v1982
        %v2025 = vmul.f32 %v1202, %v1982
        %v2026 = vmul.f32 %v679, %v1982
        %v2027 = vmul.f32 %v684, %v1982
        %v2028 = vmul.f32 %v1207, %v1982
        %v2029 = vmul.f32 %v1527, %v1982
        %v2030 = vmul.f32 %v1532, %v1982
        %v2031 = vmul.f32 %v1979, %v1982
        %v2080 = vrot.slane %v1984, 1
        %v2081 = vrot.slane %v1985, 1
        %v2082 = vsel %vm1308, %v2080, %v2081
        %v2083 = vrot.slane %v1986, 1
        %v2084 = vsel %vm1308, %v2081, %v2083
        %v2085 = vrot.slane %v1987, 1
        %v2086 = vrot.slane %v1988, 1
        %v2087 = vsel %vm1308, %v2085, %v2086
        %v2088 = vrot.slane %v1989, 1
        %v2089 = vsel %vm1308, %v2086, %v2088
        %v2090 = vrot.slane %v1990, 1
        %v2091 = vrot.slane %v1991, 1
        %v2092 = vsel %vm1308, %v2090, %v2091
        %v2093 = vrot.slane %v1992, 1
        %v2094 = vsel %vm1308, %v2091, %v2093
        %v2095 = vrot.slane %v1993, 1
        %v2096 = vrot.slane %v1994, 1
        %v2097 = vsel %vm1308, %v2095, %v2096
        %v2098 = vrot.slane %v1995, 1
        %v2099 = vsel %vm1308, %v2096, %v2098
        %v2100 = vrot.slane %v1996, 1
        %v2101 = vrot.slane %v1997, 1
        %v2102 = vsel %vm1308, %v2100, %v2101
        %v2103 = vrot.slane %v1998, 1
        %v2104 = vsel %vm1308, %v2101, %v2103
        %v2105 = vrot.slane %v1999, 1
        %v2106 = vrot.slane %v2000, 1
        %v2107 = vsel %vm1308, %v2105, %v2106
        %v2108 = vrot.slane %v2001, 1
        %v2109 = vsel %vm1308, %v2106, %v2108
        %v2110 = vrot.slane %v2002, 1
        %v2111 = vrot.slane %v2003, 1
        %v2112 = vsel %vm1308, %v2110, %v2111
        %v2113 = vrot.slane %v2004, 1
        %v2114 = vsel %vm1308, %v2111, %v2113
        %v2115 = vrot.slane %v2005, 1
        %v2116 = vrot.slane %v2006, 1
        %v2117 = vsel %vm1308, %v2115, %v2116
        %v2118 = vrot.slane %v2007, 1
        %v2119 = vsel %vm1308, %v2116, %v2118
        %v2120 = vrot.slane %v2008, 1
        %v2121 = vrot.slane %v2009, 1
        %v2122 = vsel %vm1308, %v2120, %v2121
        %v2123 = vrot.slane %v2010, 1
        %v2124 = vsel %vm1308, %v2121, %v2123
        %v2125 = vrot.slane %v2011, 1
        %v2126 = vrot.slane %v2012, 1
        %v2127 = vsel %vm1308, %v2125, %v2126
        %v2128 = vrot.slane %v2013, 1
        %v2129 = vsel %vm1308, %v2126, %v2128
        %v2130 = vrot.slane %v2014, 1
        %v2131 = vrot.slane %v2015, 1
        %v2132 = vsel %vm1308, %v2130, %v2131
        %v2133 = vrot.slane %v2016, 1
        %v2134 = vsel %vm1308, %v2131, %v2133
        %v2135 = vrot.slane %v2017, 1
        %v2136 = vrot.slane %v2018, 1
        %v2137 = vsel %vm1308, %v2135, %v2136
        %v2138 = vrot.slane %v2019, 1
        %v2139 = vsel %vm1308, %v2136, %v2138
        %v2140 = vrot.slane %v2020, 1
        %v2141 = vrot.slane %v2021, 1
        %v2142 = vsel %vm1308, %v2140, %v2141
        %v2143 = vrot.slane %v2022, 1
        %v2144 = vsel %vm1308, %v2141, %v2143
        %v2145 = vrot.slane %v2023, 1
        %v2146 = vrot.slane %v2024, 1
        %v2147 = vsel %vm1308, %v2145, %v2146
        %v2148 = vrot.slane %v2025, 1
        %v2149 = vsel %vm1308, %v2146, %v2148
        %v2150 = vrot.slane %v2026, 1
        %v2151 = vrot.slane %v2027, 1
        %v2152 = vsel %vm1308, %v2150, %v2151
        %v2153 = vrot.slane %v2028, 1
        %v2154 = vsel %vm1308, %v2151, %v2153
        %v2155 = vrot.slane %v2029, 1
        %v2156 = vrot.slane %v2030, 1
        %v2157 = vsel %vm1308, %v2155, %v2156
        %v2158 = vrot.slane %v2031, 1
        %v2159 = vsel %vm1308, %v2156, %v2158
        %v2192 = vadd.f32 %v1944, %v2082
        %v2193 = vadd.f32 %v1945, %v2084
        %v2194 = vadd.f32 %v1946, %v2087
        %v2195 = vadd.f32 %v1947, %v2089
        %v2196 = vadd.f32 %v1948, %v2092
        %v2197 = vadd.f32 %v1949, %v2094
        %v2198 = vadd.f32 %v1950, %v2097
        %v2199 = vadd.f32 %v1951, %v2099
        %v2200 = vadd.f32 %v1952, %v2102
        %v2201 = vadd.f32 %v1953, %v2104
        %v2202 = vadd.f32 %v1954, %v2107
        %v2203 = vadd.f32 %v1955, %v2109
        %v2204 = vadd.f32 %v1956, %v2112
        %v2205 = vadd.f32 %v1957, %v2114
        %v2206 = vadd.f32 %v1958, %v2117
        %v2207 = vadd.f32 %v1959, %v2119
        %v2208 = vadd.f32 %v1960, %v2122
        %v2209 = vadd.f32 %v1961, %v2124
        %v2210 = vadd.f32 %v1962, %v2127
        %v2211 = vadd.f32 %v1963, %v2129
        %v2212 = vadd.f32 %v1964, %v2132
        %v2213 = vadd.f32 %v1965, %v2134
        %v2214 = vadd.f32 %v1966, %v2137
        %v2215 = vadd.f32 %v1967, %v2139
        %v2216 = vadd.f32 %v1968, %v2142
        %v2217 = vadd.f32 %v1969, %v2144
        %v2218 = vadd.f32 %v1970, %v2147
        %v2219 = vadd.f32 %v1971, %v2149
        %v2220 = vadd.f32 %v1972, %v2152
        %v2221 = vadd.f32 %v1973, %v2154
        %v2222 = vadd.f32 %v1974, %v2157
        %v2223 = vadd.f32 %v1975, %v2159
        %2224 = vst.msk [vmem:[#allocation3] sm:$0xff] %vm308, %v2192
        %2225 = vst.msk [vmem:[#allocation3 + $0x8] sm:$0xff] %vm308, %v2193
        %2226 = vst.msk [vmem:[#allocation3 + $0x10] sm:$0xff] %vm308, %v2194
        %2227 = vst.msk [vmem:[#allocation3 + $0x18] sm:$0xff] %vm308, %v2195
        %2228 = vst.msk [vmem:[#allocation3 + $0x20] sm:$0xff] %vm308, %v2196
        %2229 = vst.msk [vmem:[#allocation3 + $0x28] sm:$0xff] %vm308, %v2197
        %2230 = vst.msk [vmem:[#allocation3 + $0x30] sm:$0xff] %vm308, %v2198
        %2231 = vst.msk [vmem:[#allocation3 + $0x38] sm:$0xff] %vm308, %v2199
        %2232 = vst.msk [vmem:[#allocation3 + $0x40] sm:$0xff] %vm308, %v2200
        %2233 = vst.msk [vmem:[#allocation3 + $0x48] sm:$0xff] %vm308, %v2201
        %2234 = vst.msk [vmem:[#allocation3 + $0x50] sm:$0xff] %vm308, %v2202
        %2235 = vst.msk [vmem:[#allocation3 + $0x58] sm:$0xff] %vm308, %v2203
        %2236 = vst.msk [vmem:[#allocation3 + $0x60] sm:$0xff] %vm308, %v2204
        %2237 = vst.msk [vmem:[#allocation3 + $0x68] sm:$0xff] %vm308, %v2205
        %2238 = vst.msk [vmem:[#allocation3 + $0x70] sm:$0xff] %vm308, %v2206
        %2239 = vst.msk [vmem:[#allocation3 + $0x78] sm:$0xff] %vm308, %v2207
        %2240 = vst.msk [vmem:[#allocation3 + $0x80] sm:$0xff] %vm308, %v2208
        %2241 = vst.msk [vmem:[#allocation3 + $0x88] sm:$0xff] %vm308, %v2209
        %2242 = vst.msk [vmem:[#allocation3 + $0x90] sm:$0xff] %vm308, %v2210
        %2243 = vst.msk [vmem:[#allocation3 + $0x98] sm:$0xff] %vm308, %v2211
        %2244 = vst.msk [vmem:[#allocation3 + $0xa0] sm:$0xff] %vm308, %v2212
        %2245 = vst.msk [vmem:[#allocation3 + $0xa8] sm:$0xff] %vm308, %v2213
        %2246 = vst.msk [vmem:[#allocation3 + $0xb0] sm:$0xff] %vm308, %v2214
        %2247 = vst.msk [vmem:[#allocation3 + $0xb8] sm:$0xff] %vm308, %v2215
        %2248 = vst.msk [vmem:[#allocation3 + $0xc0] sm:$0xff] %vm308, %v2216
        %2249 = vst.msk [vmem:[#allocation3 + $0xc8] sm:$0xff] %vm308, %v2217
        %2250 = vst.msk [vmem:[#allocation3 + $0xd0] sm:$0xff] %vm308, %v2218
        %2251 = vst.msk [vmem:[#allocation3 + $0xd8] sm:$0xff] %vm308, %v2219
        %2252 = vst.msk [vmem:[#allocation3 + $0xe0] sm:$0xff] %vm308, %v2220
        %2253 = vst.msk [vmem:[#allocation3 + $0xe8] sm:$0xff] %vm308, %v2221
        %2254 = vst.msk [vmem:[#allocation3 + $0xf0] sm:$0xff] %vm308, %v2222
        %2255 = vst.msk [vmem:[#allocation3 + $0xf8] sm:$0xff] %vm308, %v2223
        %s2256 = scalar_lea.vmem %s1, 6
        %v2257 = vld [vmem:[%s2256] sm:$0x1]
        %v2258 = vld [vmem:[#allocation3] sm:$0xff]
        %v2259 = vld [vmem:[#allocation3 + $0x8] sm:$0xff]
        %v2260 = vld [vmem:[#allocation3 + $0x10] sm:$0xff]
        %v2261 = vld [vmem:[#allocation3 + $0x18] sm:$0xff]
        %v2262 = vld [vmem:[#allocation3 + $0x20] sm:$0xff]
        %v2263 = vld [vmem:[#allocation3 + $0x28] sm:$0xff]
        %v2264 = vld [vmem:[#allocation3 + $0x30] sm:$0xff]
        %v2265 = vld [vmem:[#allocation3 + $0x38] sm:$0xff]
        %v2266 = vld [vmem:[#allocation3 + $0x40] sm:$0xff]
        %v2267 = vld [vmem:[#allocation3 + $0x48] sm:$0xff]
        %v2268 = vld [vmem:[#allocation3 + $0x50] sm:$0xff]
        %v2269 = vld [vmem:[#allocation3 + $0x58] sm:$0xff]
        %v2270 = vld [vmem:[#allocation3 + $0x60] sm:$0xff]
        %v2271 = vld [vmem:[#allocation3 + $0x68] sm:$0xff]
        %v2272 = vld [vmem:[#allocation3 + $0x70] sm:$0xff]
        %v2273 = vld [vmem:[#allocation3 + $0x78] sm:$0xff]
        %v2274 = vld [vmem:[#allocation3 + $0x80] sm:$0xff]
        %v2275 = vld [vmem:[#allocation3 + $0x88] sm:$0xff]
        %v2276 = vld [vmem:[#allocation3 + $0x90] sm:$0xff]
        %v2277 = vld [vmem:[#allocation3 + $0x98] sm:$0xff]
        %v2278 = vld [vmem:[#allocation3 + $0xa0] sm:$0xff]
        %v2279 = vld [vmem:[#allocation3 + $0xa8] sm:$0xff]
        %v2280 = vld [vmem:[#allocation3 + $0xb0] sm:$0xff]
        %v2281 = vld [vmem:[#allocation3 + $0xb8] sm:$0xff]
        %v2282 = vld [vmem:[#allocation3 + $0xc0] sm:$0xff]
        %v2283 = vld [vmem:[#allocation3 + $0xc8] sm:$0xff]
        %v2284 = vld [vmem:[#allocation3 + $0xd0] sm:$0xff]
        %v2285 = vld [vmem:[#allocation3 + $0xd8] sm:$0xff]
        %v2286 = vld [vmem:[#allocation3 + $0xe0] sm:$0xff]
        %v2287 = vld [vmem:[#allocation3 + $0xe8] sm:$0xff]
        %v2288 = vld [vmem:[#allocation3 + $0xf0] sm:$0xff]
        %v2289 = vld [vmem:[#allocation3 + $0xf8] sm:$0xff]
        %2291 = vset.pattern.permute.xlu0 0
        %2292 = vperm.xlu0 %2291, %v409
        %v2293 = vpop.permute.xlu0 %2292
        %2296 = vset.pattern.permute.xlu0 0
        %2297 = vperm.xlu0 %2296, %v410
        %v2298 = vpop.permute.xlu0 %2297
        %2301 = vset.pattern.permute.xlu0 0
        %2302 = vperm.xlu0 %2301, %v411
        %v2303 = vpop.permute.xlu0 %2302
        %v2306 = vperm.slane %v2257, 0
        %v2308 = vmul.f32 %v479, %v2306
        %v2309 = vmul.f32 %v484, %v2306
        %v2310 = vmul.f32 %v489, %v2306
        %v2311 = vmul.f32 %v494, %v2306
        %v2312 = vmul.f32 %v499, %v2306
        %v2313 = vmul.f32 %v504, %v2306
        %v2314 = vmul.f32 %v509, %v2306
        %v2315 = vmul.f32 %v514, %v2306
        %v2316 = vmul.f32 %v519, %v2306
        %v2317 = vmul.f32 %v524, %v2306
        %v2318 = vmul.f32 %v529, %v2306
        %v2319 = vmul.f32 %v534, %v2306
        %v2320 = vmul.f32 %v539, %v2306
        %v2321 = vmul.f32 %v544, %v2306
        %v2322 = vmul.f32 %v549, %v2306
        %v2323 = vmul.f32 %v554, %v2306
        %v2324 = vmul.f32 %v559, %v2306
        %v2325 = vmul.f32 %v564, %v2306
        %v2326 = vmul.f32 %v569, %v2306
        %v2327 = vmul.f32 %v574, %v2306
        %v2328 = vmul.f32 %v579, %v2306
        %v2329 = vmul.f32 %v584, %v2306
        %v2330 = vmul.f32 %v589, %v2306
        %v2331 = vmul.f32 %v594, %v2306
        %v2332 = vmul.f32 %v599, %v2306
        %v2333 = vmul.f32 %v604, %v2306
        %v2334 = vmul.f32 %v609, %v2306
        %v2335 = vmul.f32 %v614, %v2306
        %v2336 = vmul.f32 %v619, %v2306
        %v2337 = vmul.f32 %v624, %v2306
        %v2338 = vmul.f32 %v629, %v2306
        %v2339 = vmul.f32 %v634, %v2306
        %v2340 = vmul.f32 %v639, %v2306
        %v2341 = vmul.f32 %v644, %v2306
        %v2342 = vmul.f32 %v649, %v2306
        %v2343 = vmul.f32 %v654, %v2306
        %v2344 = vmul.f32 %v659, %v2306
        %v2345 = vmul.f32 %v664, %v2306
        %v2346 = vmul.f32 %v669, %v2306
        %v2347 = vmul.f32 %v674, %v2306
        %v2348 = vmul.f32 %v679, %v2306
        %v2349 = vmul.f32 %v684, %v2306
        %v2350 = vmul.f32 %v1522, %v2306
        %v2351 = vmul.f32 %v1527, %v2306
        %v2352 = vmul.f32 %v1532, %v2306
        %v2353 = vmul.f32 %v2293, %v2306
        %v2354 = vmul.f32 %v2298, %v2306
        %v2355 = vmul.f32 %v2303, %v2306
        %v2404 = vrot.slane %v2308, 7
        %v2405 = vrot.slane %v2309, 7
        %v2406 = vsel %vm785, %v2404, %v2405
        %v2407 = vrot.slane %v2310, 7
        %v2408 = vsel %vm785, %v2405, %v2407
        %v2409 = vrot.slane %v2311, 7
        %v2410 = vrot.slane %v2312, 7
        %v2411 = vsel %vm785, %v2409, %v2410
        %v2412 = vrot.slane %v2313, 7
        %v2413 = vsel %vm785, %v2410, %v2412
        %v2414 = vrot.slane %v2314, 7
        %v2415 = vrot.slane %v2315, 7
        %v2416 = vsel %vm785, %v2414, %v2415
        %v2417 = vrot.slane %v2316, 7
        %v2418 = vsel %vm785, %v2415, %v2417
        %v2419 = vrot.slane %v2317, 7
        %v2420 = vrot.slane %v2318, 7
        %v2421 = vsel %vm785, %v2419, %v2420
        %v2422 = vrot.slane %v2319, 7
        %v2423 = vsel %vm785, %v2420, %v2422
        %v2424 = vrot.slane %v2320, 7
        %v2425 = vrot.slane %v2321, 7
        %v2426 = vsel %vm785, %v2424, %v2425
        %v2427 = vrot.slane %v2322, 7
        %v2428 = vsel %vm785, %v2425, %v2427
        %v2429 = vrot.slane %v2323, 7
        %v2430 = vrot.slane %v2324, 7
        %v2431 = vsel %vm785, %v2429, %v2430
        %v2432 = vrot.slane %v2325, 7
        %v2433 = vsel %vm785, %v2430, %v2432
        %v2434 = vrot.slane %v2326, 7
        %v2435 = vrot.slane %v2327, 7
        %v2436 = vsel %vm785, %v2434, %v2435
        %v2437 = vrot.slane %v2328, 7
        %v2438 = vsel %vm785, %v2435, %v2437
        %v2439 = vrot.slane %v2329, 7
        %v2440 = vrot.slane %v2330, 7
        %v2441 = vsel %vm785, %v2439, %v2440
        %v2442 = vrot.slane %v2331, 7
        %v2443 = vsel %vm785, %v2440, %v2442
        %v2444 = vrot.slane %v2332, 7
        %v2445 = vrot.slane %v2333, 7
        %v2446 = vsel %vm785, %v2444, %v2445
        %v2447 = vrot.slane %v2334, 7
        %v2448 = vsel %vm785, %v2445, %v2447
        %v2449 = vrot.slane %v2335, 7
        %v2450 = vrot.slane %v2336, 7
        %v2451 = vsel %vm785, %v2449, %v2450
        %v2452 = vrot.slane %v2337, 7
        %v2453 = vsel %vm785, %v2450, %v2452
        %v2454 = vrot.slane %v2338, 7
        %v2455 = vrot.slane %v2339, 7
        %v2456 = vsel %vm785, %v2454, %v2455
        %v2457 = vrot.slane %v2340, 7
        %v2458 = vsel %vm785, %v2455, %v2457
        %v2459 = vrot.slane %v2341, 7
        %v2460 = vrot.slane %v2342, 7
        %v2461 = vsel %vm785, %v2459, %v2460
        %v2462 = vrot.slane %v2343, 7
        %v2463 = vsel %vm785, %v2460, %v2462
        %v2464 = vrot.slane %v2344, 7
        %v2465 = vrot.slane %v2345, 7
        %v2466 = vsel %vm785, %v2464, %v2465
        %v2467 = vrot.slane %v2346, 7
        %v2468 = vsel %vm785, %v2465, %v2467
        %v2469 = vrot.slane %v2347, 7
        %v2470 = vrot.slane %v2348, 7
        %v2471 = vsel %vm785, %v2469, %v2470
        %v2472 = vrot.slane %v2349, 7
        %v2473 = vsel %vm785, %v2470, %v2472
        %v2474 = vrot.slane %v2350, 7
        %v2475 = vrot.slane %v2351, 7
        %v2476 = vsel %vm785, %v2474, %v2475
        %v2477 = vrot.slane %v2352, 7
        %v2478 = vsel %vm785, %v2475, %v2477
        %v2479 = vrot.slane %v2353, 7
        %v2480 = vrot.slane %v2354, 7
        %v2481 = vsel %vm785, %v2479, %v2480
        %v2482 = vrot.slane %v2355, 7
        %v2483 = vsel %vm785, %v2480, %v2482
        %v2516 = vadd.f32 %v2258, %v2406
        %v2517 = vadd.f32 %v2259, %v2408
        %v2518 = vadd.f32 %v2260, %v2411
        %v2519 = vadd.f32 %v2261, %v2413
        %v2520 = vadd.f32 %v2262, %v2416
        %v2521 = vadd.f32 %v2263, %v2418
        %v2522 = vadd.f32 %v2264, %v2421
        %v2523 = vadd.f32 %v2265, %v2423
        %v2524 = vadd.f32 %v2266, %v2426
        %v2525 = vadd.f32 %v2267, %v2428
        %v2526 = vadd.f32 %v2268, %v2431
        %v2527 = vadd.f32 %v2269, %v2433
        %v2528 = vadd.f32 %v2270, %v2436
        %v2529 = vadd.f32 %v2271, %v2438
        %v2530 = vadd.f32 %v2272, %v2441
        %v2531 = vadd.f32 %v2273, %v2443
        %v2532 = vadd.f32 %v2274, %v2446
        %v2533 = vadd.f32 %v2275, %v2448
        %v2534 = vadd.f32 %v2276, %v2451
        %v2535 = vadd.f32 %v2277, %v2453
        %v2536 = vadd.f32 %v2278, %v2456
        %v2537 = vadd.f32 %v2279, %v2458
        %v2538 = vadd.f32 %v2280, %v2461
        %v2539 = vadd.f32 %v2281, %v2463
        %v2540 = vadd.f32 %v2282, %v2466
        %v2541 = vadd.f32 %v2283, %v2468
        %v2542 = vadd.f32 %v2284, %v2471
        %v2543 = vadd.f32 %v2285, %v2473
        %v2544 = vadd.f32 %v2286, %v2476
        %v2545 = vadd.f32 %v2287, %v2478
        %v2546 = vadd.f32 %v2288, %v2481
        %v2547 = vadd.f32 %v2289, %v2483
        %2548 = vst.msk [vmem:[#allocation3] sm:$0xff] %vm308, %v2516
        %2549 = vst.msk [vmem:[#allocation3 + $0x8] sm:$0xff] %vm308, %v2517
        %2550 = vst.msk [vmem:[#allocation3 + $0x10] sm:$0xff] %vm308, %v2518
        %2551 = vst.msk [vmem:[#allocation3 + $0x18] sm:$0xff] %vm308, %v2519
        %2552 = vst.msk [vmem:[#allocation3 + $0x20] sm:$0xff] %vm308, %v2520
        %2553 = vst.msk [vmem:[#allocation3 + $0x28] sm:$0xff] %vm308, %v2521
        %2554 = vst.msk [vmem:[#allocation3 + $0x30] sm:$0xff] %vm308, %v2522
        %2555 = vst.msk [vmem:[#allocation3 + $0x38] sm:$0xff] %vm308, %v2523
        %2556 = vst.msk [vmem:[#allocation3 + $0x40] sm:$0xff] %vm308, %v2524
        %2557 = vst.msk [vmem:[#allocation3 + $0x48] sm:$0xff] %vm308, %v2525
        %2558 = vst.msk [vmem:[#allocation3 + $0x50] sm:$0xff] %vm308, %v2526
        %2559 = vst.msk [vmem:[#allocation3 + $0x58] sm:$0xff] %vm308, %v2527
        %2560 = vst.msk [vmem:[#allocation3 + $0x60] sm:$0xff] %vm308, %v2528
        %2561 = vst.msk [vmem:[#allocation3 + $0x68] sm:$0xff] %vm308, %v2529
        %2562 = vst.msk [vmem:[#allocation3 + $0x70] sm:$0xff] %vm308, %v2530
        %2563 = vst.msk [vmem:[#allocation3 + $0x78] sm:$0xff] %vm308, %v2531
        %2564 = vst.msk [vmem:[#allocation3 + $0x80] sm:$0xff] %vm308, %v2532
        %2565 = vst.msk [vmem:[#allocation3 + $0x88] sm:$0xff] %vm308, %v2533
        %2566 = vst.msk [vmem:[#allocation3 + $0x90] sm:$0xff] %vm308, %v2534
        %2567 = vst.msk [vmem:[#allocation3 + $0x98] sm:$0xff] %vm308, %v2535
        %2568 = vst.msk [vmem:[#allocation3 + $0xa0] sm:$0xff] %vm308, %v2536
        %2569 = vst.msk [vmem:[#allocation3 + $0xa8] sm:$0xff] %vm308, %v2537
        %2570 = vst.msk [vmem:[#allocation3 + $0xb0] sm:$0xff] %vm308, %v2538
        %2571 = vst.msk [vmem:[#allocation3 + $0xb8] sm:$0xff] %vm308, %v2539
        %2572 = vst.msk [vmem:[#allocation3 + $0xc0] sm:$0xff] %vm308, %v2540
        %2573 = vst.msk [vmem:[#allocation3 + $0xc8] sm:$0xff] %vm308, %v2541
        %2574 = vst.msk [vmem:[#allocation3 + $0xd0] sm:$0xff] %vm308, %v2542
        %2575 = vst.msk [vmem:[#allocation3 + $0xd8] sm:$0xff] %vm308, %v2543
        %2576 = vst.msk [vmem:[#allocation3 + $0xe0] sm:$0xff] %vm308, %v2544
        %2577 = vst.msk [vmem:[#allocation3 + $0xe8] sm:$0xff] %vm308, %v2545
        %2578 = vst.msk [vmem:[#allocation3 + $0xf0] sm:$0xff] %vm308, %v2546
        %2579 = vst.msk [vmem:[#allocation3 + $0xf8] sm:$0xff] %vm308, %v2547
        %s2580 = scalar_lea.vmem %s1, 7
        %v2581 = vld [vmem:[%s2580] sm:$0x1]
        %v2582 = vld [vmem:[#allocation3] sm:$0xff]
        %v2583 = vld [vmem:[#allocation3 + $0x8] sm:$0xff]
        %v2584 = vld [vmem:[#allocation3 + $0x10] sm:$0xff]
        %v2585 = vld [vmem:[#allocation3 + $0x18] sm:$0xff]
        %v2586 = vld [vmem:[#allocation3 + $0x20] sm:$0xff]
        %v2587 = vld [vmem:[#allocation3 + $0x28] sm:$0xff]
        %v2588 = vld [vmem:[#allocation3 + $0x30] sm:$0xff]
        %v2589 = vld [vmem:[#allocation3 + $0x38] sm:$0xff]
        %v2590 = vld [vmem:[#allocation3 + $0x40] sm:$0xff]
        %v2591 = vld [vmem:[#allocation3 + $0x48] sm:$0xff]
        %v2592 = vld [vmem:[#allocation3 + $0x50] sm:$0xff]
        %v2593 = vld [vmem:[#allocation3 + $0x58] sm:$0xff]
        %v2594 = vld [vmem:[#allocation3 + $0x60] sm:$0xff]
        %v2595 = vld [vmem:[#allocation3 + $0x68] sm:$0xff]
        %v2596 = vld [vmem:[#allocation3 + $0x70] sm:$0xff]
        %v2597 = vld [vmem:[#allocation3 + $0x78] sm:$0xff]
        %v2598 = vld [vmem:[#allocation3 + $0x80] sm:$0xff]
        %v2599 = vld [vmem:[#allocation3 + $0x88] sm:$0xff]
        %v2600 = vld [vmem:[#allocation3 + $0x90] sm:$0xff]
        %v2601 = vld [vmem:[#allocation3 + $0x98] sm:$0xff]
        %v2602 = vld [vmem:[#allocation3 + $0xa0] sm:$0xff]
        %v2603 = vld [vmem:[#allocation3 + $0xa8] sm:$0xff]
        %v2604 = vld [vmem:[#allocation3 + $0xb0] sm:$0xff]
        %v2605 = vld [vmem:[#allocation3 + $0xb8] sm:$0xff]
        %v2606 = vld [vmem:[#allocation3 + $0xc0] sm:$0xff]
        %v2607 = vld [vmem:[#allocation3 + $0xc8] sm:$0xff]
        %v2608 = vld [vmem:[#allocation3 + $0xd0] sm:$0xff]
        %v2609 = vld [vmem:[#allocation3 + $0xd8] sm:$0xff]
        %v2610 = vld [vmem:[#allocation3 + $0xe0] sm:$0xff]
        %v2611 = vld [vmem:[#allocation3 + $0xe8] sm:$0xff]
        %v2612 = vld [vmem:[#allocation3 + $0xf0] sm:$0xff]
        %v2613 = vld [vmem:[#allocation3 + $0xf8] sm:$0xff]
        %v2615 = vperm.slane %v2581, 0
        %v2617 = vmul.f32 %v484, %v2615
        %v2618 = vmul.f32 %v489, %v2615
        %v2619 = vmul.f32 %v499, %v2615
        %v2620 = vmul.f32 %v504, %v2615
        %v2621 = vmul.f32 %v514, %v2615
        %v2622 = vmul.f32 %v519, %v2615
        %v2623 = vmul.f32 %v529, %v2615
        %v2624 = vmul.f32 %v534, %v2615
        %v2625 = vmul.f32 %v544, %v2615
        %v2626 = vmul.f32 %v549, %v2615
        %v2627 = vmul.f32 %v559, %v2615
        %v2628 = vmul.f32 %v564, %v2615
        %v2629 = vmul.f32 %v574, %v2615
        %v2630 = vmul.f32 %v579, %v2615
        %v2631 = vmul.f32 %v589, %v2615
        %v2632 = vmul.f32 %v594, %v2615
        %v2633 = vmul.f32 %v604, %v2615
        %v2634 = vmul.f32 %v609, %v2615
        %v2635 = vmul.f32 %v619, %v2615
        %v2636 = vmul.f32 %v624, %v2615
        %v2637 = vmul.f32 %v634, %v2615
        %v2638 = vmul.f32 %v639, %v2615
        %v2639 = vmul.f32 %v649, %v2615
        %v2640 = vmul.f32 %v654, %v2615
        %v2641 = vmul.f32 %v664, %v2615
        %v2642 = vmul.f32 %v669, %v2615
        %v2643 = vmul.f32 %v679, %v2615
        %v2644 = vmul.f32 %v684, %v2615
        %v2645 = vmul.f32 %v1527, %v2615
        %v2646 = vmul.f32 %v1532, %v2615
        %v2647 = vmul.f32 %v2298, %v2615
        %v2648 = vmul.f32 %v2303, %v2615
        %v2649 = vadd.f32 %v2582, %v2617
        %v2650 = vadd.f32 %v2583, %v2618
        %v2651 = vadd.f32 %v2584, %v2619
        %v2652 = vadd.f32 %v2585, %v2620
        %v2653 = vadd.f32 %v2586, %v2621
        %v2654 = vadd.f32 %v2587, %v2622
        %v2655 = vadd.f32 %v2588, %v2623
        %v2656 = vadd.f32 %v2589, %v2624
        %v2657 = vadd.f32 %v2590, %v2625
        %v2658 = vadd.f32 %v2591, %v2626
        %v2659 = vadd.f32 %v2592, %v2627
        %v2660 = vadd.f32 %v2593, %v2628
        %v2661 = vadd.f32 %v2594, %v2629
        %v2662 = vadd.f32 %v2595, %v2630
        %v2663 = vadd.f32 %v2596, %v2631
        %v2664 = vadd.f32 %v2597, %v2632
        %v2665 = vadd.f32 %v2598, %v2633
        %v2666 = vadd.f32 %v2599, %v2634
        %v2667 = vadd.f32 %v2600, %v2635
        %v2668 = vadd.f32 %v2601, %v2636
        %v2669 = vadd.f32 %v2602, %v2637
        %v2670 = vadd.f32 %v2603, %v2638
        %v2671 = vadd.f32 %v2604, %v2639
        %v2672 = vadd.f32 %v2605, %v2640
        %v2673 = vadd.f32 %v2606, %v2641
        %v2674 = vadd.f32 %v2607, %v2642
        %v2675 = vadd.f32 %v2608, %v2643
        %v2676 = vadd.f32 %v2609, %v2644
        %v2677 = vadd.f32 %v2610, %v2645
        %v2678 = vadd.f32 %v2611, %v2646
        %v2679 = vadd.f32 %v2612, %v2647
        %v2680 = vadd.f32 %v2613, %v2648
        %2681 = vst.msk [vmem:[#allocation3] sm:$0xff] %vm308, %v2649
        %2682 = vst.msk [vmem:[#allocation3 + $0x8] sm:$0xff] %vm308, %v2650
        %2683 = vst.msk [vmem:[#allocation3 + $0x10] sm:$0xff] %vm308, %v2651
        %2684 = vst.msk [vmem:[#allocation3 + $0x18] sm:$0xff] %vm308, %v2652
        %2685 = vst.msk [vmem:[#allocation3 + $0x20] sm:$0xff] %vm308, %v2653
        %2686 = vst.msk [vmem:[#allocation3 + $0x28] sm:$0xff] %vm308, %v2654
        %2687 = vst.msk [vmem:[#allocation3 + $0x30] sm:$0xff] %vm308, %v2655
        %2688 = vst.msk [vmem:[#allocation3 + $0x38] sm:$0xff] %vm308, %v2656
        %2689 = vst.msk [vmem:[#allocation3 + $0x40] sm:$0xff] %vm308, %v2657
        %2690 = vst.msk [vmem:[#allocation3 + $0x48] sm:$0xff] %vm308, %v2658
        %2691 = vst.msk [vmem:[#allocation3 + $0x50] sm:$0xff] %vm308, %v2659
        %2692 = vst.msk [vmem:[#allocation3 + $0x58] sm:$0xff] %vm308, %v2660
        %2693 = vst.msk [vmem:[#allocation3 + $0x60] sm:$0xff] %vm308, %v2661
        %2694 = vst.msk [vmem:[#allocation3 + $0x68] sm:$0xff] %vm308, %v2662
        %2695 = vst.msk [vmem:[#allocation3 + $0x70] sm:$0xff] %vm308, %v2663
        %2696 = vst.msk [vmem:[#allocation3 + $0x78] sm:$0xff] %vm308, %v2664
        %2697 = vst.msk [vmem:[#allocation3 + $0x80] sm:$0xff] %vm308, %v2665
        %2698 = vst.msk [vmem:[#allocation3 + $0x88] sm:$0xff] %vm308, %v2666
        %2699 = vst.msk [vmem:[#allocation3 + $0x90] sm:$0xff] %vm308, %v2667
        %2700 = vst.msk [vmem:[#allocation3 + $0x98] sm:$0xff] %vm308, %v2668
        %2701 = vst.msk [vmem:[#allocation3 + $0xa0] sm:$0xff] %vm308, %v2669
        %2702 = vst.msk [vmem:[#allocation3 + $0xa8] sm:$0xff] %vm308, %v2670
        %2703 = vst.msk [vmem:[#allocation3 + $0xb0] sm:$0xff] %vm308, %v2671
        %2704 = vst.msk [vmem:[#allocation3 + $0xb8] sm:$0xff] %vm308, %v2672
        %2705 = vst.msk [vmem:[#allocation3 + $0xc0] sm:$0xff] %vm308, %v2673
        %2706 = vst.msk [vmem:[#allocation3 + $0xc8] sm:$0xff] %vm308, %v2674
        %2707 = vst.msk [vmem:[#allocation3 + $0xd0] sm:$0xff] %vm308, %v2675
        %2708 = vst.msk [vmem:[#allocation3 + $0xd8] sm:$0xff] %vm308, %v2676
        %2709 = vst.msk [vmem:[#allocation3 + $0xe0] sm:$0xff] %vm308, %v2677
        %2710 = vst.msk [vmem:[#allocation3 + $0xe8] sm:$0xff] %vm308, %v2678
        %2711 = vst.msk [vmem:[#allocation3 + $0xf0] sm:$0xff] %vm308, %v2679
        %2712 = vst.msk [vmem:[#allocation3 + $0xf8] sm:$0xff] %vm308, %v2680
        %s2713 = scalar_lea.vmem %s1, 8
        %v2714 = vld [vmem:[%s2713] sm:$0x1]
        %v2715 = vld [vmem:[#allocation3] sm:$0xff]
        %v2716 = vld [vmem:[#allocation3 + $0x8] sm:$0xff]
        %v2717 = vld [vmem:[#allocation3 + $0x10] sm:$0xff]
        %v2718 = vld [vmem:[#allocation3 + $0x18] sm:$0xff]
        %v2719 = vld [vmem:[#allocation3 + $0x20] sm:$0xff]
        %v2720 = vld [vmem:[#allocation3 + $0x28] sm:$0xff]
        %v2721 = vld [vmem:[#allocation3 + $0x30] sm:$0xff]
        %v2722 = vld [vmem:[#allocation3 + $0x38] sm:$0xff]
        %v2723 = vld [vmem:[#allocation3 + $0x40] sm:$0xff]
        %v2724 = vld [vmem:[#allocation3 + $0x48] sm:$0xff]
        %v2725 = vld [vmem:[#allocation3 + $0x50] sm:$0xff]
        %v2726 = vld [vmem:[#allocation3 + $0x58] sm:$0xff]
        %v2727 = vld [vmem:[#allocation3 + $0x60] sm:$0xff]
        %v2728 = vld [vmem:[#allocation3 + $0x68] sm:$0xff]
        %v2729 = vld [vmem:[#allocation3 + $0x70] sm:$0xff]
        %v2730 = vld [vmem:[#allocation3 + $0x78] sm:$0xff]
        %v2731 = vld [vmem:[#allocation3 + $0x80] sm:$0xff]
        %v2732 = vld [vmem:[#allocation3 + $0x88] sm:$0xff]
        %v2733 = vld [vmem:[#allocation3 + $0x90] sm:$0xff]
        %v2734 = vld [vmem:[#allocation3 + $0x98] sm:$0xff]
        %v2735 = vld [vmem:[#allocation3 + $0xa0] sm:$0xff]
        %v2736 = vld [vmem:[#allocation3 + $0xa8] sm:$0xff]
        %v2737 = vld [vmem:[#allocation3 + $0xb0] sm:$0xff]
        %v2738 = vld [vmem:[#allocation3 + $0xb8] sm:$0xff]
        %v2739 = vld [vmem:[#allocation3 + $0xc0] sm:$0xff]
        %v2740 = vld [vmem:[#allocation3 + $0xc8] sm:$0xff]
        %v2741 = vld [vmem:[#allocation3 + $0xd0] sm:$0xff]
        %v2742 = vld [vmem:[#allocation3 + $0xd8] sm:$0xff]
        %v2743 = vld [vmem:[#allocation3 + $0xe0] sm:$0xff]
        %v2744 = vld [vmem:[#allocation3 + $0xe8] sm:$0xff]
        %v2745 = vld [vmem:[#allocation3 + $0xf0] sm:$0xff]
        %v2746 = vld [vmem:[#allocation3 + $0xf8] sm:$0xff]
        %2748 = vset.pattern.permute.xlu0 0
        %2749 = vperm.xlu0 %2748, %v412
        %v2750 = vpop.permute.xlu0 %2749
        %v2753 = vperm.slane %v2714, 0
        %v2755 = vmul.f32 %v484, %v2753
        %v2756 = vmul.f32 %v489, %v2753
        %v2757 = vmul.f32 %v1142, %v2753
        %v2758 = vmul.f32 %v499, %v2753
        %v2759 = vmul.f32 %v504, %v2753
        %v2760 = vmul.f32 %v1147, %v2753
        %v2761 = vmul.f32 %v514, %v2753
        %v2762 = vmul.f32 %v519, %v2753
        %v2763 = vmul.f32 %v1152, %v2753
        %v2764 = vmul.f32 %v529, %v2753
        %v2765 = vmul.f32 %v534, %v2753
        %v2766 = vmul.f32 %v1157, %v2753
        %v2767 = vmul.f32 %v544, %v2753
        %v2768 = vmul.f32 %v549, %v2753
        %v2769 = vmul.f32 %v1162, %v2753
        %v2770 = vmul.f32 %v559, %v2753
        %v2771 = vmul.f32 %v564, %v2753
        %v2772 = vmul.f32 %v1167, %v2753
        %v2773 = vmul.f32 %v574, %v2753
        %v2774 = vmul.f32 %v579, %v2753
        %v2775 = vmul.f32 %v1172, %v2753
        %v2776 = vmul.f32 %v589, %v2753
        %v2777 = vmul.f32 %v594, %v2753
        %v2778 = vmul.f32 %v1177, %v2753
        %v2779 = vmul.f32 %v604, %v2753
        %v2780 = vmul.f32 %v609, %v2753
        %v2781 = vmul.f32 %v1182, %v2753
        %v2782 = vmul.f32 %v619, %v2753
        %v2783 = vmul.f32 %v624, %v2753
        %v2784 = vmul.f32 %v1187, %v2753
        %v2785 = vmul.f32 %v634, %v2753
        %v2786 = vmul.f32 %v639, %v2753
        %v2787 = vmul.f32 %v1192, %v2753
        %v2788 = vmul.f32 %v649, %v2753
        %v2789 = vmul.f32 %v654, %v2753
        %v2790 = vmul.f32 %v1197, %v2753
        %v2791 = vmul.f32 %v664, %v2753
        %v2792 = vmul.f32 %v669, %v2753
        %v2793 = vmul.f32 %v1202, %v2753
        %v2794 = vmul.f32 %v679, %v2753
        %v2795 = vmul.f32 %v684, %v2753
        %v2796 = vmul.f32 %v1207, %v2753
        %v2797 = vmul.f32 %v1527, %v2753
        %v2798 = vmul.f32 %v1532, %v2753
        %v2799 = vmul.f32 %v1979, %v2753
        %v2800 = vmul.f32 %v2298, %v2753
        %v2801 = vmul.f32 %v2303, %v2753
        %v2802 = vmul.f32 %v2750, %v2753
        %v2851 = vrot.slane %v2755, 1
        %v2852 = vrot.slane %v2756, 1
        %v2853 = vsel %vm1308, %v2851, %v2852
        %v2854 = vrot.slane %v2757, 1
        %v2855 = vsel %vm1308, %v2852, %v2854
        %v2856 = vrot.slane %v2758, 1
        %v2857 = vrot.slane %v2759, 1
        %v2858 = vsel %vm1308, %v2856, %v2857
        %v2859 = vrot.slane %v2760, 1
        %v2860 = vsel %vm1308, %v2857, %v2859
        %v2861 = vrot.slane %v2761, 1
        %v2862 = vrot.slane %v2762, 1
        %v2863 = vsel %vm1308, %v2861, %v2862
        %v2864 = vrot.slane %v2763, 1
        %v2865 = vsel %vm1308, %v2862, %v2864
        %v2866 = vrot.slane %v2764, 1
        %v2867 = vrot.slane %v2765, 1
        %v2868 = vsel %vm1308, %v2866, %v2867
        %v2869 = vrot.slane %v2766, 1
        %v2870 = vsel %vm1308, %v2867, %v2869
        %v2871 = vrot.slane %v2767, 1
        %v2872 = vrot.slane %v2768, 1
        %v2873 = vsel %vm1308, %v2871, %v2872
        %v2874 = vrot.slane %v2769, 1
        %v2875 = vsel %vm1308, %v2872, %v2874
        %v2876 = vrot.slane %v2770, 1
        %v2877 = vrot.slane %v2771, 1
        %v2878 = vsel %vm1308, %v2876, %v2877
        %v2879 = vrot.slane %v2772, 1
        %v2880 = vsel %vm1308, %v2877, %v2879
        %v2881 = vrot.slane %v2773, 1
        %v2882 = vrot.slane %v2774, 1
        %v2883 = vsel %vm1308, %v2881, %v2882
        %v2884 = vrot.slane %v2775, 1
        %v2885 = vsel %vm1308, %v2882, %v2884
        %v2886 = vrot.slane %v2776, 1
        %v2887 = vrot.slane %v2777, 1
        %v2888 = vsel %vm1308, %v2886, %v2887
        %v2889 = vrot.slane %v2778, 1
        %v2890 = vsel %vm1308, %v2887, %v2889
        %v2891 = vrot.slane %v2779, 1
        %v2892 = vrot.slane %v2780, 1
        %v2893 = vsel %vm1308, %v2891, %v2892
        %v2894 = vrot.slane %v2781, 1
        %v2895 = vsel %vm1308, %v2892, %v2894
        %v2896 = vrot.slane %v2782, 1
        %v2897 = vrot.slane %v2783, 1
        %v2898 = vsel %vm1308, %v2896, %v2897
        %v2899 = vrot.slane %v2784, 1
        %v2900 = vsel %vm1308, %v2897, %v2899
        %v2901 = vrot.slane %v2785, 1
        %v2902 = vrot.slane %v2786, 1
        %v2903 = vsel %vm1308, %v2901, %v2902
        %v2904 = vrot.slane %v2787, 1
        %v2905 = vsel %vm1308, %v2902, %v2904
        %v2906 = vrot.slane %v2788, 1
        %v2907 = vrot.slane %v2789, 1
        %v2908 = vsel %vm1308, %v2906, %v2907
        %v2909 = vrot.slane %v2790, 1
        %v2910 = vsel %vm1308, %v2907, %v2909
        %v2911 = vrot.slane %v2791, 1
        %v2912 = vrot.slane %v2792, 1
        %v2913 = vsel %vm1308, %v2911, %v2912
        %v2914 = vrot.slane %v2793, 1
        %v2915 = vsel %vm1308, %v2912, %v2914
        %v2916 = vrot.slane %v2794, 1
        %v2917 = vrot.slane %v2795, 1
        %v2918 = vsel %vm1308, %v2916, %v2917
        %v2919 = vrot.slane %v2796, 1
        %v2920 = vsel %vm1308, %v2917, %v2919
        %v2921 = vrot.slane %v2797, 1
        %v2922 = vrot.slane %v2798, 1
        %v2923 = vsel %vm1308, %v2921, %v2922
        %v2924 = vrot.slane %v2799, 1
        %v2925 = vsel %vm1308, %v2922, %v2924
        %v2926 = vrot.slane %v2800, 1
        %v2927 = vrot.slane %v2801, 1
        %v2928 = vsel %vm1308, %v2926, %v2927
        %v2929 = vrot.slane %v2802, 1
        %v2930 = vsel %vm1308, %v2927, %v2929
        %v2963 = vadd.f32 %v2715, %v2853
        %v2964 = vadd.f32 %v2716, %v2855
        %v2965 = vadd.f32 %v2717, %v2858
        %v2966 = vadd.f32 %v2718, %v2860
        %v2967 = vadd.f32 %v2719, %v2863
        %v2968 = vadd.f32 %v2720, %v2865
        %v2969 = vadd.f32 %v2721, %v2868
        %v2970 = vadd.f32 %v2722, %v2870
        %v2971 = vadd.f32 %v2723, %v2873
        %v2972 = vadd.f32 %v2724, %v2875
        %v2973 = vadd.f32 %v2725, %v2878
        %v2974 = vadd.f32 %v2726, %v2880
        %v2975 = vadd.f32 %v2727, %v2883
        %v2976 = vadd.f32 %v2728, %v2885
        %v2977 = vadd.f32 %v2729, %v2888
        %v2978 = vadd.f32 %v2730, %v2890
        %v2979 = vadd.f32 %v2731, %v2893
        %v2980 = vadd.f32 %v2732, %v2895
        %v2981 = vadd.f32 %v2733, %v2898
        %v2982 = vadd.f32 %v2734, %v2900
        %v2983 = vadd.f32 %v2735, %v2903
        %v2984 = vadd.f32 %v2736, %v2905
        %v2985 = vadd.f32 %v2737, %v2908
        %v2986 = vadd.f32 %v2738, %v2910
        %v2987 = vadd.f32 %v2739, %v2913
        %v2988 = vadd.f32 %v2740, %v2915
        %v2989 = vadd.f32 %v2741, %v2918
        %v2990 = vadd.f32 %v2742, %v2920
        %v2991 = vadd.f32 %v2743, %v2923
        %v2992 = vadd.f32 %v2744, %v2925
        %v2993 = vadd.f32 %v2745, %v2928
        %v2994 = vadd.f32 %v2746, %v2930
        %2995 = vst.msk [vmem:[#allocation3] sm:$0xff] %vm308, %v2963
        %2996 = vst.msk [vmem:[#allocation3 + $0x8] sm:$0xff] %vm308, %v2964
        %2997 = vst.msk [vmem:[#allocation3 + $0x10] sm:$0xff] %vm308, %v2965
        %2998 = vst.msk [vmem:[#allocation3 + $0x18] sm:$0xff] %vm308, %v2966
        %2999 = vst.msk [vmem:[#allocation3 + $0x20] sm:$0xff] %vm308, %v2967
        %3000 = vst.msk [vmem:[#allocation3 + $0x28] sm:$0xff] %vm308, %v2968
        %3001 = vst.msk [vmem:[#allocation3 + $0x30] sm:$0xff] %vm308, %v2969
        %3002 = vst.msk [vmem:[#allocation3 + $0x38] sm:$0xff] %vm308, %v2970
        %3003 = vst.msk [vmem:[#allocation3 + $0x40] sm:$0xff] %vm308, %v2971
        %3004 = vst.msk [vmem:[#allocation3 + $0x48] sm:$0xff] %vm308, %v2972
        %3005 = vst.msk [vmem:[#allocation3 + $0x50] sm:$0xff] %vm308, %v2973
        %3006 = vst.msk [vmem:[#allocation3 + $0x58] sm:$0xff] %vm308, %v2974
        %3007 = vst.msk [vmem:[#allocation3 + $0x60] sm:$0xff] %vm308, %v2975
        %3008 = vst.msk [vmem:[#allocation3 + $0x68] sm:$0xff] %vm308, %v2976
        %3009 = vst.msk [vmem:[#allocation3 + $0x70] sm:$0xff] %vm308, %v2977
        %3010 = vst.msk [vmem:[#allocation3 + $0x78] sm:$0xff] %vm308, %v2978
        %3011 = vst.msk [vmem:[#allocation3 + $0x80] sm:$0xff] %vm308, %v2979
        %3012 = vst.msk [vmem:[#allocation3 + $0x88] sm:$0xff] %vm308, %v2980
        %3013 = vst.msk [vmem:[#allocation3 + $0x90] sm:$0xff] %vm308, %v2981
        %3014 = vst.msk [vmem:[#allocation3 + $0x98] sm:$0xff] %vm308, %v2982
        %3015 = vst.msk [vmem:[#allocation3 + $0xa0] sm:$0xff] %vm308, %v2983
        %3016 = vst.msk [vmem:[#allocation3 + $0xa8] sm:$0xff] %vm308, %v2984
        %3017 = vst.msk [vmem:[#allocation3 + $0xb0] sm:$0xff] %vm308, %v2985
        %3018 = vst.msk [vmem:[#allocation3 + $0xb8] sm:$0xff] %vm308, %v2986
        %3019 = vst.msk [vmem:[#allocation3 + $0xc0] sm:$0xff] %vm308, %v2987
        %3020 = vst.msk [vmem:[#allocation3 + $0xc8] sm:$0xff] %vm308, %v2988
        %3021 = vst.msk [vmem:[#allocation3 + $0xd0] sm:$0xff] %vm308, %v2989
        %3022 = vst.msk [vmem:[#allocation3 + $0xd8] sm:$0xff] %vm308, %v2990
        %3023 = vst.msk [vmem:[#allocation3 + $0xe0] sm:$0xff] %vm308, %v2991
        %3024 = vst.msk [vmem:[#allocation3 + $0xe8] sm:$0xff] %vm308, %v2992
        %3025 = vst.msk [vmem:[#allocation3 + $0xf0] sm:$0xff] %vm308, %v2993
        %3026 = vst.msk [vmem:[#allocation3 + $0xf8] sm:$0xff] %vm308, %v2994
        %v3027 = vld [vmem:[#allocation3] sm:$0xff]
        %v3028 = vld [vmem:[#allocation3 + $0x8] sm:$0xff]
        %v3029 = vld [vmem:[#allocation3 + $0x10] sm:$0xff]
        %v3030 = vld [vmem:[#allocation3 + $0x18] sm:$0xff]
        %v3031 = vld [vmem:[#allocation3 + $0x20] sm:$0xff]
        %v3032 = vld [vmem:[#allocation3 + $0x28] sm:$0xff]
        %v3033 = vld [vmem:[#allocation3 + $0x30] sm:$0xff]
        %v3034 = vld [vmem:[#allocation3 + $0x38] sm:$0xff]
        %v3035 = vld [vmem:[#allocation3 + $0x40] sm:$0xff]
        %v3036 = vld [vmem:[#allocation3 + $0x48] sm:$0xff]
        %v3037 = vld [vmem:[#allocation3 + $0x50] sm:$0xff]
        %v3038 = vld [vmem:[#allocation3 + $0x58] sm:$0xff]
        %v3039 = vld [vmem:[#allocation3 + $0x60] sm:$0xff]
        %v3040 = vld [vmem:[#allocation3 + $0x68] sm:$0xff]
        %v3041 = vld [vmem:[#allocation3 + $0x70] sm:$0xff]
        %v3042 = vld [vmem:[#allocation3 + $0x78] sm:$0xff]
        %v3043 = vld [vmem:[#allocation3 + $0x80] sm:$0xff]
        %v3044 = vld [vmem:[#allocation3 + $0x88] sm:$0xff]
        %v3045 = vld [vmem:[#allocation3 + $0x90] sm:$0xff]
        %v3046 = vld [vmem:[#allocation3 + $0x98] sm:$0xff]
        %v3047 = vld [vmem:[#allocation3 + $0xa0] sm:$0xff]
        %v3048 = vld [vmem:[#allocation3 + $0xa8] sm:$0xff]
        %v3049 = vld [vmem:[#allocation3 + $0xb0] sm:$0xff]
        %v3050 = vld [vmem:[#allocation3 + $0xb8] sm:$0xff]
        %v3051 = vld [vmem:[#allocation3 + $0xc0] sm:$0xff]
        %v3052 = vld [vmem:[#allocation3 + $0xc8] sm:$0xff]
        %v3053 = vld [vmem:[#allocation3 + $0xd0] sm:$0xff]
        %v3054 = vld [vmem:[#allocation3 + $0xd8] sm:$0xff]
        %v3055 = vld [vmem:[#allocation3 + $0xe0] sm:$0xff]
        %v3056 = vld [vmem:[#allocation3 + $0xe8] sm:$0xff]
        %v3057 = vld [vmem:[#allocation3 + $0xf0] sm:$0xff]
        %v3058 = vld [vmem:[#allocation3 + $0xf8] sm:$0xff]
        %v3059 = vld [vmem:[%s2] sm:$0x1]
        %v3061 = vperm.slane %v3059, 0
        %v3063 = vadd.f32 %v3027, %v3061
        %v3064 = vadd.f32 %v3028, %v3061
        %v3065 = vadd.f32 %v3029, %v3061
        %v3066 = vadd.f32 %v3030, %v3061
        %v3067 = vadd.f32 %v3031, %v3061
        %v3068 = vadd.f32 %v3032, %v3061
        %v3069 = vadd.f32 %v3033, %v3061
        %v3070 = vadd.f32 %v3034, %v3061
        %v3071 = vadd.f32 %v3035, %v3061
        %v3072 = vadd.f32 %v3036, %v3061
        %v3073 = vadd.f32 %v3037, %v3061
        %v3074 = vadd.f32 %v3038, %v3061
        %v3075 = vadd.f32 %v3039, %v3061
        %v3076 = vadd.f32 %v3040, %v3061
        %v3077 = vadd.f32 %v3041, %v3061
        %v3078 = vadd.f32 %v3042, %v3061
        %v3079 = vadd.f32 %v3043, %v3061
        %v3080 = vadd.f32 %v3044, %v3061
        %v3081 = vadd.f32 %v3045, %v3061
        %v3082 = vadd.f32 %v3046, %v3061
        %v3083 = vadd.f32 %v3047, %v3061
        %v3084 = vadd.f32 %v3048, %v3061
        %v3085 = vadd.f32 %v3049, %v3061
        %v3086 = vadd.f32 %v3050, %v3061
        %v3087 = vadd.f32 %v3051, %v3061
        %v3088 = vadd.f32 %v3052, %v3061
        %v3089 = vadd.f32 %v3053, %v3061
        %v3090 = vadd.f32 %v3054, %v3061
        %v3091 = vadd.f32 %v3055, %v3061
        %v3092 = vadd.f32 %v3056, %v3061
        %v3093 = vadd.f32 %v3057, %v3061
        %v3094 = vadd.f32 %v3058, %v3061
        %vm3095 = vcmp.gt.f32.partialorder %v3063, 0.0
        %vm3096 = vcmp.gt.f32.partialorder %v3064, 0.0
        %vm3097 = vcmp.gt.f32.partialorder %v3065, 0.0
        %vm3098 = vcmp.gt.f32.partialorder %v3066, 0.0
        %vm3099 = vcmp.gt.f32.partialorder %v3067, 0.0
        %vm3100 = vcmp.gt.f32.partialorder %v3068, 0.0
        %vm3101 = vcmp.gt.f32.partialorder %v3069, 0.0
        %vm3102 = vcmp.gt.f32.partialorder %v3070, 0.0
        %vm3103 = vcmp.gt.f32.partialorder %v3071, 0.0
        %vm3104 = vcmp.gt.f32.partialorder %v3072, 0.0
        %vm3105 = vcmp.gt.f32.partialorder %v3073, 0.0
        %vm3106 = vcmp.gt.f32.partialorder %v3074, 0.0
        %vm3107 = vcmp.gt.f32.partialorder %v3075, 0.0
        %vm3108 = vcmp.gt.f32.partialorder %v3076, 0.0
        %vm3109 = vcmp.gt.f32.partialorder %v3077, 0.0
        %vm3110 = vcmp.gt.f32.partialorder %v3078, 0.0
        %vm3111 = vcmp.gt.f32.partialorder %v3079, 0.0
        %vm3112 = vcmp.gt.f32.partialorder %v3080, 0.0
        %vm3113 = vcmp.gt.f32.partialorder %v3081, 0.0
        %vm3114 = vcmp.gt.f32.partialorder %v3082, 0.0
        %vm3115 = vcmp.gt.f32.partialorder %v3083, 0.0
        %vm3116 = vcmp.gt.f32.partialorder %v3084, 0.0
        %vm3117 = vcmp.gt.f32.partialorder %v3085, 0.0
        %vm3118 = vcmp.gt.f32.partialorder %v3086, 0.0
        %vm3119 = vcmp.gt.f32.partialorder %v3087, 0.0
        %vm3120 = vcmp.gt.f32.partialorder %v3088, 0.0
        %vm3121 = vcmp.gt.f32.partialorder %v3089, 0.0
        %vm3122 = vcmp.gt.f32.partialorder %v3090, 0.0
        %vm3123 = vcmp.gt.f32.partialorder %v3091, 0.0
        %vm3124 = vcmp.gt.f32.partialorder %v3092, 0.0
        %vm3125 = vcmp.gt.f32.partialorder %v3093, 0.0
        %vm3126 = vcmp.gt.f32.partialorder %v3094, 0.0
        %v3127 = vmul.f32 %v3063, 0.01
        %v3128 = vmul.f32 %v3064, 0.01
        %v3129 = vmul.f32 %v3065, 0.01
        %v3130 = vmul.f32 %v3066, 0.01
        %v3131 = vmul.f32 %v3067, 0.01
        %v3132 = vmul.f32 %v3068, 0.01
        %v3133 = vmul.f32 %v3069, 0.01
        %v3134 = vmul.f32 %v3070, 0.01
        %v3135 = vmul.f32 %v3071, 0.01
        %v3136 = vmul.f32 %v3072, 0.01
        %v3137 = vmul.f32 %v3073, 0.01
        %v3138 = vmul.f32 %v3074, 0.01
        %v3139 = vmul.f32 %v3075, 0.01
        %v3140 = vmul.f32 %v3076, 0.01
        %v3141 = vmul.f32 %v3077, 0.01
        %v3142 = vmul.f32 %v3078, 0.01
        %v3143 = vmul.f32 %v3079, 0.01
        %v3144 = vmul.f32 %v3080, 0.01
        %v3145 = vmul.f32 %v3081, 0.01
        %v3146 = vmul.f32 %v3082, 0.01
        %v3147 = vmul.f32 %v3083, 0.01
        %v3148 = vmul.f32 %v3084, 0.01
        %v3149 = vmul.f32 %v3085, 0.01
        %v3150 = vmul.f32 %v3086, 0.01
        %v3151 = vmul.f32 %v3087, 0.01
        %v3152 = vmul.f32 %v3088, 0.01
        %v3153 = vmul.f32 %v3089, 0.01
        %v3154 = vmul.f32 %v3090, 0.01
        %v3155 = vmul.f32 %v3091, 0.01
        %v3156 = vmul.f32 %v3092, 0.01
        %v3157 = vmul.f32 %v3093, 0.01
        %v3158 = vmul.f32 %v3094, 0.01
        %v3159 = vsel %vm3095, %v3063, %v3127
        %v3160 = vsel %vm3096, %v3064, %v3128
        %v3161 = vsel %vm3097, %v3065, %v3129
        %v3162 = vsel %vm3098, %v3066, %v3130
        %v3163 = vsel %vm3099, %v3067, %v3131
        %v3164 = vsel %vm3100, %v3068, %v3132
        %v3165 = vsel %vm3101, %v3069, %v3133
        %v3166 = vsel %vm3102, %v3070, %v3134
        %v3167 = vsel %vm3103, %v3071, %v3135
        %v3168 = vsel %vm3104, %v3072, %v3136
        %v3169 = vsel %vm3105, %v3073, %v3137
        %v3170 = vsel %vm3106, %v3074, %v3138
        %v3171 = vsel %vm3107, %v3075, %v3139
        %v3172 = vsel %vm3108, %v3076, %v3140
        %v3173 = vsel %vm3109, %v3077, %v3141
        %v3174 = vsel %vm3110, %v3078, %v3142
        %v3175 = vsel %vm3111, %v3079, %v3143
        %v3176 = vsel %vm3112, %v3080, %v3144
        %v3177 = vsel %vm3113, %v3081, %v3145
        %v3178 = vsel %vm3114, %v3082, %v3146
        %v3179 = vsel %vm3115, %v3083, %v3147
        %v3180 = vsel %vm3116, %v3084, %v3148
        %v3181 = vsel %vm3117, %v3085, %v3149
        %v3182 = vsel %vm3118, %v3086, %v3150
        %v3183 = vsel %vm3119, %v3087, %v3151
        %v3184 = vsel %vm3120, %v3088, %v3152
        %v3185 = vsel %vm3121, %v3089, %v3153
        %v3186 = vsel %vm3122, %v3090, %v3154
        %v3187 = vsel %vm3123, %v3091, %v3155
        %v3188 = vsel %vm3124, %v3092, %v3156
        %v3189 = vsel %vm3125, %v3093, %v3157
        %v3190 = vsel %vm3126, %v3094, %v3158
        %3191 = vst.msk [vmem:[#allocation4] sm:$0xff] %vm308, -inf
        %3192 = vst.msk [vmem:[#allocation4 + $0x8] sm:$0xff] %vm308, -inf
        %3193 = vst.msk [vmem:[#allocation4 + $0x10] sm:$0xff] %vm308, -inf
        %vm3194 = vcmask 254976
        %3195 = vst.msk [vmem:[#allocation4 + $0x18] sm:$0x3] %vm3194, -inf
        %3196 = vst.msk [vmem:[#allocation4 + $0x20] sm:$0xff] %vm308, -inf
        %3197 = vst.msk [vmem:[#allocation4 + $0x28] sm:$0xff] %vm308, -inf
        %3198 = vst.msk [vmem:[#allocation4 + $0x30] sm:$0xff] %vm308, -inf
        %3199 = vst.msk [vmem:[#allocation4 + $0x38] sm:$0x3] %vm3194, -inf
        %3200 = vst.msk [vmem:[#allocation4 + $0x40] sm:$0xff] %vm308, -inf
        %3201 = vst.msk [vmem:[#allocation4 + $0x48] sm:$0xff] %vm308, -inf
        %3202 = vst.msk [vmem:[#allocation4 + $0x50] sm:$0xff] %vm308, -inf
        %3203 = vst.msk [vmem:[#allocation4 + $0x58] sm:$0x3] %vm3194, -inf
        %3204 = vst.msk [vmem:[#allocation4 + $0x60] sm:$0xff] %vm308, -inf
        %3205 = vst.msk [vmem:[#allocation4 + $0x68] sm:$0xff] %vm308, -inf
        %3206 = vst.msk [vmem:[#allocation4 + $0x70] sm:$0xff] %vm308, -inf
        %3207 = vst.msk [vmem:[#allocation4 + $0x78] sm:$0x3] %vm3194, -inf
        %3208 = vst.msk [vmem:[#allocation4 + $0x80] sm:$0xff] %vm308, -inf
        %3209 = vst.msk [vmem:[#allocation4 + $0x88] sm:$0xff] %vm308, -inf
        %3210 = vst.msk [vmem:[#allocation4 + $0x90] sm:$0xff] %vm308, -inf
        %3211 = vst.msk [vmem:[#allocation4 + $0x98] sm:$0x3] %vm3194, -inf
        %3212 = vst.msk [vmem:[#allocation4 + $0xa0] sm:$0xff] %vm308, -inf
        %3213 = vst.msk [vmem:[#allocation4 + $0xa8] sm:$0xff] %vm308, -inf
        %3214 = vst.msk [vmem:[#allocation4 + $0xb0] sm:$0xff] %vm308, -inf
        %3215 = vst.msk [vmem:[#allocation4 + $0xb8] sm:$0x3] %vm3194, -inf
        %3216 = vst.msk [vmem:[#allocation4 + $0xc0] sm:$0xff] %vm308, -inf
        %3217 = vst.msk [vmem:[#allocation4 + $0xc8] sm:$0xff] %vm308, -inf
        %3218 = vst.msk [vmem:[#allocation4 + $0xd0] sm:$0xff] %vm308, -inf
        %3219 = vst.msk [vmem:[#allocation4 + $0xd8] sm:$0x3] %vm3194, -inf
        %3220 = vst.msk [vmem:[#allocation4 + $0xe0] sm:$0xff] %vm308, -inf
        %3221 = vst.msk [vmem:[#allocation4 + $0xe8] sm:$0xff] %vm308, -inf
        %3222 = vst.msk [vmem:[#allocation4 + $0xf0] sm:$0xff] %vm308, -inf
        %3223 = vst.msk [vmem:[#allocation4 + $0xf8] sm:$0x3] %vm3194, -inf
        %3224 = vst.msk [vmem:[#allocation4 + $0x100] sm:$0xff] %vm308, -inf
        %3225 = vst.msk [vmem:[#allocation4 + $0x108] sm:$0xff] %vm308, -inf
        %3226 = vst.msk [vmem:[#allocation4 + $0x110] sm:$0xff] %vm308, -inf
        %3227 = vst.msk [vmem:[#allocation4 + $0x118] sm:$0x3] %vm3194, -inf
        %3228 = vst.msk [vmem:[#allocation4 + $0x120] sm:$0xff] %vm308, -inf
        %3229 = vst.msk [vmem:[#allocation4 + $0x128] sm:$0xff] %vm308, -inf
        %3230 = vst.msk [vmem:[#allocation4 + $0x130] sm:$0xff] %vm308, -inf
        %3231 = vst.msk [vmem:[#allocation4 + $0x138] sm:$0x3] %vm3194, -inf
        %3232 = vst.msk [vmem:[#allocation4 + $0x140] sm:$0xff] %vm308, -inf
        %3233 = vst.msk [vmem:[#allocation4 + $0x148] sm:$0xff] %vm308, -inf
        %3234 = vst.msk [vmem:[#allocation4 + $0x150] sm:$0xff] %vm308, -inf
        %3235 = vst.msk [vmem:[#allocation4 + $0x158] sm:$0x3] %vm3194, -inf
        %3236 = vst.msk [vmem:[#allocation4 + $0x160] sm:$0xff] %vm308, -inf
        %3237 = vst.msk [vmem:[#allocation4 + $0x168] sm:$0xff] %vm308, -inf
        %3238 = vst.msk [vmem:[#allocation4 + $0x170] sm:$0xff] %vm308, -inf
        %3239 = vst.msk [vmem:[#allocation4 + $0x178] sm:$0x3] %vm3194, -inf
        %3240 = vst.msk [vmem:[#allocation4 + $0x180] sm:$0xff] %vm308, -inf
        %3241 = vst.msk [vmem:[#allocation4 + $0x188] sm:$0xff] %vm308, -inf
        %3242 = vst.msk [vmem:[#allocation4 + $0x190] sm:$0xff] %vm308, -inf
        %3243 = vst.msk [vmem:[#allocation4 + $0x198] sm:$0x3] %vm3194, -inf
        %3244 = vst.msk [vmem:[#allocation4 + $0x1a0] sm:$0xff] %vm308, -inf
        %3245 = vst.msk [vmem:[#allocation4 + $0x1a8] sm:$0xff] %vm308, -inf
        %3246 = vst.msk [vmem:[#allocation4 + $0x1b0] sm:$0xff] %vm308, -inf
        %3247 = vst.msk [vmem:[#allocation4 + $0x1b8] sm:$0x3] %vm3194, -inf
        %3248 = vst.msk [vmem:[#allocation4 + $0x1c0] sm:$0xff] %vm308, -inf
        %3249 = vst.msk [vmem:[#allocation4 + $0x1c8] sm:$0xff] %vm308, -inf
        %3250 = vst.msk [vmem:[#allocation4 + $0x1d0] sm:$0xff] %vm308, -inf
        %3251 = vst.msk [vmem:[#allocation4 + $0x1d8] sm:$0x3] %vm3194, -inf
        %3252 = vst.msk [vmem:[#allocation4 + $0x1e0] sm:$0xff] %vm308, -inf
        %3253 = vst.msk [vmem:[#allocation4 + $0x1e8] sm:$0xff] %vm308, -inf
        %3254 = vst.msk [vmem:[#allocation4 + $0x1f0] sm:$0xff] %vm308, -inf
        %3255 = vst.msk [vmem:[#allocation4 + $0x1f8] sm:$0x3] %vm3194, -inf
        %3256 = vst.msk [vmem:[#allocation4 + $0x200] sm:$0xff] %vm308, -inf
        %3257 = vst.msk [vmem:[#allocation4 + $0x208] sm:$0xff] %vm308, -inf
        %3258 = vst.msk [vmem:[#allocation4 + $0x210] sm:$0xff] %vm308, -inf
        %3259 = vst.msk [vmem:[#allocation4 + $0x218] sm:$0x3] %vm3194, -inf
        %3260 = vst.msk [vmem:[#allocation4 + $0x220] sm:$0xff] %vm308, -inf
        %3261 = vst.msk [vmem:[#allocation4 + $0x228] sm:$0xff] %vm308, -inf
        %3262 = vst.msk [vmem:[#allocation4 + $0x230] sm:$0xff] %vm308, -inf
        %3263 = vst.msk [vmem:[#allocation4 + $0x238] sm:$0x3] %vm3194, -inf
        %3264 = vst.msk [vmem:[#allocation4 + $0x240] sm:$0xff] %vm308, -inf
        %3265 = vst.msk [vmem:[#allocation4 + $0x248] sm:$0xff] %vm308, -inf
        %3266 = vst.msk [vmem:[#allocation4 + $0x250] sm:$0xff] %vm308, -inf
        %3267 = vst.msk [vmem:[#allocation4 + $0x258] sm:$0x3] %vm3194, -inf
        %3268 = vst.msk [vmem:[#allocation4 + $0x260] sm:$0xff] %vm308, -inf
        %3269 = vst.msk [vmem:[#allocation4 + $0x268] sm:$0xff] %vm308, -inf
        %3270 = vst.msk [vmem:[#allocation4 + $0x270] sm:$0xff] %vm308, -inf
        %3271 = vst.msk [vmem:[#allocation4 + $0x278] sm:$0x3] %vm3194, -inf
        %s3272 = scalar_lea.vmem [#allocation4], 64
        %3273 = vst.msk [vmem:[%s3272 + $0x8] sm:$0xff] %vm308, %v3159
        %3274 = vst.msk [vmem:[%s3272 + $0x10] sm:$0xff] %vm308, %v3160
        %3275 = vst.msk [vmem:[%s3272 + $0x28] sm:$0xff] %vm308, %v3161
        %3276 = vst.msk [vmem:[%s3272 + $0x30] sm:$0xff] %vm308, %v3162
        %3277 = vst.msk [vmem:[%s3272 + $0x48] sm:$0xff] %vm308, %v3163
        %3278 = vst.msk [vmem:[%s3272 + $0x50] sm:$0xff] %vm308, %v3164
        %3279 = vst.msk [vmem:[%s3272 + $0x68] sm:$0xff] %vm308, %v3165
        %3280 = vst.msk [vmem:[%s3272 + $0x70] sm:$0xff] %vm308, %v3166
        %3281 = vst.msk [vmem:[%s3272 + $0x88] sm:$0xff] %vm308, %v3167
        %3282 = vst.msk [vmem:[%s3272 + $0x90] sm:$0xff] %vm308, %v3168
        %3283 = vst.msk [vmem:[%s3272 + $0xa8] sm:$0xff] %vm308, %v3169
        %3284 = vst.msk [vmem:[%s3272 + $0xb0] sm:$0xff] %vm308, %v3170
        %3285 = vst.msk [vmem:[%s3272 + $0xc8] sm:$0xff] %vm308, %v3171
        %3286 = vst.msk [vmem:[%s3272 + $0xd0] sm:$0xff] %vm308, %v3172
        %3287 = vst.msk [vmem:[%s3272 + $0xe8] sm:$0xff] %vm308, %v3173
        %3288 = vst.msk [vmem:[%s3272 + $0xf0] sm:$0xff] %vm308, %v3174
        %3289 = vst.msk [vmem:[%s3272 + $0x108] sm:$0xff] %vm308, %v3175
        %3290 = vst.msk [vmem:[%s3272 + $0x110] sm:$0xff] %vm308, %v3176
        %3291 = vst.msk [vmem:[%s3272 + $0x128] sm:$0xff] %vm308, %v3177
        %3292 = vst.msk [vmem:[%s3272 + $0x130] sm:$0xff] %vm308, %v3178
        %3293 = vst.msk [vmem:[%s3272 + $0x148] sm:$0xff] %vm308, %v3179
        %3294 = vst.msk [vmem:[%s3272 + $0x150] sm:$0xff] %vm308, %v3180
        %3295 = vst.msk [vmem:[%s3272 + $0x168] sm:$0xff] %vm308, %v3181
        %3296 = vst.msk [vmem:[%s3272 + $0x170] sm:$0xff] %vm308, %v3182
        %3297 = vst.msk [vmem:[%s3272 + $0x188] sm:$0xff] %vm308, %v3183
        %3298 = vst.msk [vmem:[%s3272 + $0x190] sm:$0xff] %vm308, %v3184
        %3299 = vst.msk [vmem:[%s3272 + $0x1a8] sm:$0xff] %vm308, %v3185
        %3300 = vst.msk [vmem:[%s3272 + $0x1b0] sm:$0xff] %vm308, %v3186
        %3301 = vst.msk [vmem:[%s3272 + $0x1c8] sm:$0xff] %vm308, %v3187
        %3302 = vst.msk [vmem:[%s3272 + $0x1d0] sm:$0xff] %vm308, %v3188
        %3303 = vst.msk [vmem:[%s3272 + $0x1e8] sm:$0xff] %vm308, %v3189
        %3304 = vst.msk [vmem:[%s3272 + $0x1f0] sm:$0xff] %vm308, %v3190
        %v3305 = vld [vmem:[#allocation4] sm:$0xff]
        %v3306 = vld [vmem:[#allocation4 + $0x8] sm:$0xff]
        %v3307 = vld [vmem:[#allocation4 + $0x10] sm:$0xff]
        %v3308 = vld [vmem:[#allocation4 + $0x18] sm:$0x3]
        %v3309 = vld [vmem:[#allocation4 + $0x20] sm:$0xff]
        %v3310 = vld [vmem:[#allocation4 + $0x28] sm:$0xff]
        %v3311 = vld [vmem:[#allocation4 + $0x30] sm:$0xff]
        %v3312 = vld [vmem:[#allocation4 + $0x38] sm:$0x3]
        %v3313 = vld [vmem:[#allocation4 + $0x40] sm:$0xff]
        %v3314 = vld [vmem:[#allocation4 + $0x48] sm:$0xff]
        %v3315 = vld [vmem:[#allocation4 + $0x50] sm:$0xff]
        %v3316 = vld [vmem:[#allocation4 + $0x58] sm:$0x3]
        %v3317 = vld [vmem:[#allocation4 + $0x60] sm:$0xff]
        %v3318 = vld [vmem:[#allocation4 + $0x68] sm:$0xff]
        %v3319 = vld [vmem:[#allocation4 + $0x70] sm:$0xff]
        %v3320 = vld [vmem:[#allocation4 + $0x78] sm:$0x3]
        %v3321 = vld [vmem:[#allocation4 + $0x80] sm:$0xff]
        %v3322 = vld [vmem:[#allocation4 + $0x88] sm:$0xff]
        %v3323 = vld [vmem:[#allocation4 + $0x90] sm:$0xff]
        %v3324 = vld [vmem:[#allocation4 + $0x98] sm:$0x3]
        %v3325 = vld [vmem:[#allocation4 + $0xa0] sm:$0xff]
        %v3326 = vld [vmem:[#allocation4 + $0xa8] sm:$0xff]
        %v3327 = vld [vmem:[#allocation4 + $0xb0] sm:$0xff]
        %v3328 = vld [vmem:[#allocation4 + $0xb8] sm:$0x3]
        %v3329 = vld [vmem:[#allocation4 + $0xc0] sm:$0xff]
        %v3330 = vld [vmem:[#allocation4 + $0xc8] sm:$0xff]
        %v3331 = vld [vmem:[#allocation4 + $0xd0] sm:$0xff]
        %v3332 = vld [vmem:[#allocation4 + $0xd8] sm:$0x3]
        %v3333 = vld [vmem:[#allocation4 + $0xe0] sm:$0xff]
        %v3334 = vld [vmem:[#allocation4 + $0xe8] sm:$0xff]
        %v3335 = vld [vmem:[#allocation4 + $0xf0] sm:$0xff]
        %v3336 = vld [vmem:[#allocation4 + $0xf8] sm:$0x3]
        %v3337 = vld [vmem:[#allocation4 + $0x100] sm:$0xff]
        %v3338 = vld [vmem:[#allocation4 + $0x108] sm:$0xff]
        %v3339 = vld [vmem:[#allocation4 + $0x110] sm:$0xff]
        %v3340 = vld [vmem:[#allocation4 + $0x118] sm:$0x3]
        %v3341 = vld [vmem:[#allocation4 + $0x120] sm:$0xff]
        %v3342 = vld [vmem:[#allocation4 + $0x128] sm:$0xff]
        %v3343 = vld [vmem:[#allocation4 + $0x130] sm:$0xff]
        %v3344 = vld [vmem:[#allocation4 + $0x138] sm:$0x3]
        %v3345 = vld [vmem:[#allocation4 + $0x140] sm:$0xff]
        %v3346 = vld [vmem:[#allocation4 + $0x148] sm:$0xff]
        %v3347 = vld [vmem:[#allocation4 + $0x150] sm:$0xff]
        %v3348 = vld [vmem:[#allocation4 + $0x158] sm:$0x3]
        %v3349 = vld [vmem:[#allocation4 + $0x160] sm:$0xff]
        %v3350 = vld [vmem:[#allocation4 + $0x168] sm:$0xff]
        %v3351 = vld [vmem:[#allocation4 + $0x170] sm:$0xff]
        %v3352 = vld [vmem:[#allocation4 + $0x178] sm:$0x3]
        %v3353 = vld [vmem:[#allocation4 + $0x180] sm:$0xff]
        %v3354 = vld [vmem:[#allocation4 + $0x188] sm:$0xff]
        %v3355 = vld [vmem:[#allocation4 + $0x190] sm:$0xff]
        %v3356 = vld [vmem:[#allocation4 + $0x198] sm:$0x3]
        %v3357 = vld [vmem:[#allocation4 + $0x1a0] sm:$0xff]
        %v3358 = vld [vmem:[#allocation4 + $0x1a8] sm:$0xff]
        %v3359 = vld [vmem:[#allocation4 + $0x1b0] sm:$0xff]
        %v3360 = vld [vmem:[#allocation4 + $0x1b8] sm:$0x3]
        %v3361 = vld [vmem:[#allocation4 + $0x1c0] sm:$0xff]
        %v3362 = vld [vmem:[#allocation4 + $0x1c8] sm:$0xff]
        %v3363 = vld [vmem:[#allocation4 + $0x1d0] sm:$0xff]
        %v3364 = vld [vmem:[#allocation4 + $0x1d8] sm:$0x3]
        %v3365 = vld [vmem:[#allocation4 + $0x1e0] sm:$0xff]
        %v3366 = vld [vmem:[#allocation4 + $0x1e8] sm:$0xff]
        %v3367 = vld [vmem:[#allocation4 + $0x1f0] sm:$0xff]
        %v3368 = vld [vmem:[#allocation4 + $0x1f8] sm:$0x3]
        %v3369 = vld [vmem:[#allocation4 + $0x200] sm:$0xff]
        %v3370 = vld [vmem:[#allocation4 + $0x208] sm:$0xff]
        %v3371 = vld [vmem:[#allocation4 + $0x210] sm:$0xff]
        %v3372 = vld [vmem:[#allocation4 + $0x218] sm:$0x3]
        %v3373 = vld [vmem:[#allocation4 + $0x220] sm:$0xff]
        %v3374 = vld [vmem:[#allocation4 + $0x228] sm:$0xff]
        %v3375 = vld [vmem:[#allocation4 + $0x230] sm:$0xff]
        %v3376 = vld [vmem:[#allocation4 + $0x238] sm:$0x3]
        %v3377 = vld [vmem:[#allocation4 + $0x240] sm:$0xff]
        %v3378 = vld [vmem:[#allocation4 + $0x248] sm:$0xff]
        %v3379 = vld [vmem:[#allocation4 + $0x250] sm:$0xff]
        %v3380 = vld [vmem:[#allocation4 + $0x258] sm:$0x3]
        %v3381 = vld [vmem:[#allocation4 + $0x260] sm:$0xff]
        %v3382 = vld [vmem:[#allocation4 + $0x268] sm:$0xff]
        %v3383 = vld [vmem:[#allocation4 + $0x270] sm:$0xff]
        %v3384 = vld [vmem:[#allocation4 + $0x278] sm:$0x3]
        %v3385 = vmax.f32 %v3305, %v3309
        %v3386 = vmax.f32 %v3306, %v3310
        %v3387 = vmax.f32 %v3307, %v3311
        %v3388 = vmax.f32 %v3308, %v3312
        %v3389 = vmax.f32 %v3309, %v3313
        %v3390 = vmax.f32 %v3310, %v3314
        %v3391 = vmax.f32 %v3311, %v3315
        %v3392 = vmax.f32 %v3312, %v3316
        %v3393 = vmax.f32 %v3313, %v3317
        %v3394 = vmax.f32 %v3314, %v3318
        %v3395 = vmax.f32 %v3315, %v3319
        %v3396 = vmax.f32 %v3316, %v3320
        %v3397 = vmax.f32 %v3317, %v3321
        %v3398 = vmax.f32 %v3318, %v3322
        %v3399 = vmax.f32 %v3319, %v3323
        %v3400 = vmax.f32 %v3320, %v3324
        %v3401 = vmax.f32 %v3321, %v3325
        %v3402 = vmax.f32 %v3322, %v3326
        %v3403 = vmax.f32 %v3323, %v3327
        %v3404 = vmax.f32 %v3324, %v3328
        %v3405 = vmax.f32 %v3325, %v3329
        %v3406 = vmax.f32 %v3326, %v3330
        %v3407 = vmax.f32 %v3327, %v3331
        %v3408 = vmax.f32 %v3328, %v3332
        %v3409 = vmax.f32 %v3329, %v3333
        %v3410 = vmax.f32 %v3330, %v3334
        %v3411 = vmax.f32 %v3331, %v3335
        %v3412 = vmax.f32 %v3332, %v3336
        %v3413 = vmax.f32 %v3333, %v3337
        %v3414 = vmax.f32 %v3334, %v3338
        %v3415 = vmax.f32 %v3335, %v3339
        %v3416 = vmax.f32 %v3336, %v3340
        %v3417 = vmax.f32 %v3337, %v3341
        %v3418 = vmax.f32 %v3338, %v3342
        %v3419 = vmax.f32 %v3339, %v3343
        %v3420 = vmax.f32 %v3340, %v3344
        %v3421 = vmax.f32 %v3341, %v3345
        %v3422 = vmax.f32 %v3342, %v3346
        %v3423 = vmax.f32 %v3343, %v3347
        %v3424 = vmax.f32 %v3344, %v3348
        %v3425 = vmax.f32 %v3345, %v3349
        %v3426 = vmax.f32 %v3346, %v3350
        %v3427 = vmax.f32 %v3347, %v3351
        %v3428 = vmax.f32 %v3348, %v3352
        %v3429 = vmax.f32 %v3349, %v3353
        %v3430 = vmax.f32 %v3350, %v3354
        %v3431 = vmax.f32 %v3351, %v3355
        %v3432 = vmax.f32 %v3352, %v3356
        %v3433 = vmax.f32 %v3353, %v3357
        %v3434 = vmax.f32 %v3354, %v3358
        %v3435 = vmax.f32 %v3355, %v3359
        %v3436 = vmax.f32 %v3356, %v3360
        %v3437 = vmax.f32 %v3357, %v3361
        %v3438 = vmax.f32 %v3358, %v3362
        %v3439 = vmax.f32 %v3359, %v3363
        %v3440 = vmax.f32 %v3360, %v3364
        %v3441 = vmax.f32 %v3361, %v3365
        %v3442 = vmax.f32 %v3362, %v3366
        %v3443 = vmax.f32 %v3363, %v3367
        %v3444 = vmax.f32 %v3364, %v3368
        %v3445 = vmax.f32 %v3365, %v3369
        %v3446 = vmax.f32 %v3366, %v3370
        %v3447 = vmax.f32 %v3367, %v3371
        %v3448 = vmax.f32 %v3368, %v3372
        %v3449 = vmax.f32 %v3385, %v3313
        %v3450 = vmax.f32 %v3386, %v3314
        %v3451 = vmax.f32 %v3387, %v3315
        %v3452 = vmax.f32 %v3388, %v3316
        %v3453 = vmax.f32 %v3389, %v3317
        %v3454 = vmax.f32 %v3390, %v3318
        %v3455 = vmax.f32 %v3391, %v3319
        %v3456 = vmax.f32 %v3392, %v3320
        %v3457 = vmax.f32 %v3393, %v3321
        %v3458 = vmax.f32 %v3394, %v3322
        %v3459 = vmax.f32 %v3395, %v3323
        %v3460 = vmax.f32 %v3396, %v3324
        %v3461 = vmax.f32 %v3397, %v3325
        %v3462 = vmax.f32 %v3398, %v3326
        %v3463 = vmax.f32 %v3399, %v3327
        %v3464 = vmax.f32 %v3400, %v3328
        %v3465 = vmax.f32 %v3401, %v3329
        %v3466 = vmax.f32 %v3402, %v3330
        %v3467 = vmax.f32 %v3403, %v3331
        %v3468 = vmax.f32 %v3404, %v3332
        %v3469 = vmax.f32 %v3405, %v3333
        %v3470 = vmax.f32 %v3406, %v3334
        %v3471 = vmax.f32 %v3407, %v3335
        %v3472 = vmax.f32 %v3408, %v3336
        %v3473 = vmax.f32 %v3409, %v3337
        %v3474 = vmax.f32 %v3410, %v3338
        %v3475 = vmax.f32 %v3411, %v3339
        %v3476 = vmax.f32 %v3412, %v3340
        %v3477 = vmax.f32 %v3413, %v3341
        %v3478 = vmax.f32 %v3414, %v3342
        %v3479 = vmax.f32 %v3415, %v3343
        %v3480 = vmax.f32 %v3416, %v3344
        %v3481 = vmax.f32 %v3417, %v3345
        %v3482 = vmax.f32 %v3418, %v3346
        %v3483 = vmax.f32 %v3419, %v3347
        %v3484 = vmax.f32 %v3420, %v3348
        %v3485 = vmax.f32 %v3421, %v3349
        %v3486 = vmax.f32 %v3422, %v3350
        %v3487 = vmax.f32 %v3423, %v3351
        %v3488 = vmax.f32 %v3424, %v3352
        %v3489 = vmax.f32 %v3425, %v3353
        %v3490 = vmax.f32 %v3426, %v3354
        %v3491 = vmax.f32 %v3427, %v3355
        %v3492 = vmax.f32 %v3428, %v3356
        %v3493 = vmax.f32 %v3429, %v3357
        %v3494 = vmax.f32 %v3430, %v3358
        %v3495 = vmax.f32 %v3431, %v3359
        %v3496 = vmax.f32 %v3432, %v3360
        %v3497 = vmax.f32 %v3433, %v3361
        %v3498 = vmax.f32 %v3434, %v3362
        %v3499 = vmax.f32 %v3435, %v3363
        %v3500 = vmax.f32 %v3436, %v3364
        %v3501 = vmax.f32 %v3437, %v3365
        %v3502 = vmax.f32 %v3438, %v3366
        %v3503 = vmax.f32 %v3439, %v3367
        %v3504 = vmax.f32 %v3440, %v3368
        %v3505 = vmax.f32 %v3441, %v3369
        %v3506 = vmax.f32 %v3442, %v3370
        %v3507 = vmax.f32 %v3443, %v3371
        %v3508 = vmax.f32 %v3444, %v3372
        %v3509 = vmax.f32 %v3445, %v3373
        %v3510 = vmax.f32 %v3446, %v3374
        %v3511 = vmax.f32 %v3447, %v3375
        %v3512 = vmax.f32 %v3448, %v3376
        %v3513 = vmax.f32 %v3449, %v3317
        %v3514 = vmax.f32 %v3450, %v3318
        %v3515 = vmax.f32 %v3451, %v3319
        %v3516 = vmax.f32 %v3452, %v3320
        %v3517 = vmax.f32 %v3453, %v3321
        %v3518 = vmax.f32 %v3454, %v3322
        %v3519 = vmax.f32 %v3455, %v3323
        %v3520 = vmax.f32 %v3456, %v3324
        %v3521 = vmax.f32 %v3457, %v3325
        %v3522 = vmax.f32 %v3458, %v3326
        %v3523 = vmax.f32 %v3459, %v3327
        %v3524 = vmax.f32 %v3460, %v3328
        %v3525 = vmax.f32 %v3461, %v3329
        %v3526 = vmax.f32 %v3462, %v3330
        %v3527 = vmax.f32 %v3463, %v3331
        %v3528 = vmax.f32 %v3464, %v3332
        %v3529 = vmax.f32 %v3465, %v3333
        %v3530 = vmax.f32 %v3466, %v3334
        %v3531 = vmax.f32 %v3467, %v3335
        %v3532 = vmax.f32 %v3468, %v3336
        %v3533 = vmax.f32 %v3469, %v3337
        %v3534 = vmax.f32 %v3470, %v3338
        %v3535 = vmax.f32 %v3471, %v3339
        %v3536 = vmax.f32 %v3472, %v3340
        %v3537 = vmax.f32 %v3473, %v3341
        %v3538 = vmax.f32 %v3474, %v3342
        %v3539 = vmax.f32 %v3475, %v3343
        %v3540 = vmax.f32 %v3476, %v3344
        %v3541 = vmax.f32 %v3477, %v3345
        %v3542 = vmax.f32 %v3478, %v3346
        %v3543 = vmax.f32 %v3479, %v3347
        %v3544 = vmax.f32 %v3480, %v3348
        %v3545 = vmax.f32 %v3481, %v3349
        %v3546 = vmax.f32 %v3482, %v3350
        %v3547 = vmax.f32 %v3483, %v3351
        %v3548 = vmax.f32 %v3484, %v3352
        %v3549 = vmax.f32 %v3485, %v3353
        %v3550 = vmax.f32 %v3486, %v3354
        %v3551 = vmax.f32 %v3487, %v3355
        %v3552 = vmax.f32 %v3488, %v3356
        %v3553 = vmax.f32 %v3489, %v3357
        %v3554 = vmax.f32 %v3490, %v3358
        %v3555 = vmax.f32 %v3491, %v3359
        %v3556 = vmax.f32 %v3492, %v3360
        %v3557 = vmax.f32 %v3493, %v3361
        %v3558 = vmax.f32 %v3494, %v3362
        %v3559 = vmax.f32 %v3495, %v3363
        %v3560 = vmax.f32 %v3496, %v3364
        %v3561 = vmax.f32 %v3497, %v3365
        %v3562 = vmax.f32 %v3498, %v3366
        %v3563 = vmax.f32 %v3499, %v3367
        %v3564 = vmax.f32 %v3500, %v3368
        %v3565 = vmax.f32 %v3501, %v3369
        %v3566 = vmax.f32 %v3502, %v3370
        %v3567 = vmax.f32 %v3503, %v3371
        %v3568 = vmax.f32 %v3504, %v3372
        %v3569 = vmax.f32 %v3505, %v3373
        %v3570 = vmax.f32 %v3506, %v3374
        %v3571 = vmax.f32 %v3507, %v3375
        %v3572 = vmax.f32 %v3508, %v3376
        %v3573 = vmax.f32 %v3509, %v3377
        %v3574 = vmax.f32 %v3510, %v3378
        %v3575 = vmax.f32 %v3511, %v3379
        %v3576 = vmax.f32 %v3512, %v3380
        %v3577 = vmax.f32 %v3513, %v3321
        %v3578 = vmax.f32 %v3514, %v3322
        %v3579 = vmax.f32 %v3515, %v3323
        %v3580 = vmax.f32 %v3516, %v3324
        %v3581 = vmax.f32 %v3517, %v3325
        %v3582 = vmax.f32 %v3518, %v3326
        %v3583 = vmax.f32 %v3519, %v3327
        %v3584 = vmax.f32 %v3520, %v3328
        %v3585 = vmax.f32 %v3521, %v3329
        %v3586 = vmax.f32 %v3522, %v3330
        %v3587 = vmax.f32 %v3523, %v3331
        %v3588 = vmax.f32 %v3524, %v3332
        %v3589 = vmax.f32 %v3525, %v3333
        %v3590 = vmax.f32 %v3526, %v3334
        %v3591 = vmax.f32 %v3527, %v3335
        %v3592 = vmax.f32 %v3528, %v3336
        %v3593 = vmax.f32 %v3529, %v3337
        %v3594 = vmax.f32 %v3530, %v3338
        %v3595 = vmax.f32 %v3531, %v3339
        %v3596 = vmax.f32 %v3532, %v3340
        %v3597 = vmax.f32 %v3533, %v3341
        %v3598 = vmax.f32 %v3534, %v3342
        %v3599 = vmax.f32 %v3535, %v3343
        %v3600 = vmax.f32 %v3536, %v3344
        %v3601 = vmax.f32 %v3537, %v3345
        %v3602 = vmax.f32 %v3538, %v3346
        %v3603 = vmax.f32 %v3539, %v3347
        %v3604 = vmax.f32 %v3540, %v3348
        %v3605 = vmax.f32 %v3541, %v3349
        %v3606 = vmax.f32 %v3542, %v3350
        %v3607 = vmax.f32 %v3543, %v3351
        %v3608 = vmax.f32 %v3544, %v3352
        %v3609 = vmax.f32 %v3545, %v3353
        %v3610 = vmax.f32 %v3546, %v3354
        %v3611 = vmax.f32 %v3547, %v3355
        %v3612 = vmax.f32 %v3548, %v3356
        %v3613 = vmax.f32 %v3549, %v3357
        %v3614 = vmax.f32 %v3550, %v3358
        %v3615 = vmax.f32 %v3551, %v3359
        %v3616 = vmax.f32 %v3552, %v3360
        %v3617 = vmax.f32 %v3553, %v3361
        %v3618 = vmax.f32 %v3554, %v3362
        %v3619 = vmax.f32 %v3555, %v3363
        %v3620 = vmax.f32 %v3556, %v3364
        %v3621 = vmax.f32 %v3557, %v3365
        %v3622 = vmax.f32 %v3558, %v3366
        %v3623 = vmax.f32 %v3559, %v3367
        %v3624 = vmax.f32 %v3560, %v3368
        %v3625 = vmax.f32 %v3561, %v3369
        %v3626 = vmax.f32 %v3562, %v3370
        %v3627 = vmax.f32 %v3563, %v3371
        %v3628 = vmax.f32 %v3564, %v3372
        %v3629 = vmax.f32 %v3565, %v3373
        %v3630 = vmax.f32 %v3566, %v3374
        %v3631 = vmax.f32 %v3567, %v3375
        %v3632 = vmax.f32 %v3568, %v3376
        %v3633 = vmax.f32 %v3569, %v3377
        %v3634 = vmax.f32 %v3570, %v3378
        %v3635 = vmax.f32 %v3571, %v3379
        %v3636 = vmax.f32 %v3572, %v3380
        %v3637 = vmax.f32 %v3573, %v3381
        %v3638 = vmax.f32 %v3574, %v3382
        %v3639 = vmax.f32 %v3575, %v3383
        %v3640 = vmax.f32 %v3576, %v3384
        %v3689 = vrot.slane %v3577, 1
        %v3690 = vrot.slane %v3578, 1
        %v3691 = vsel %vm1308, %v3689, %v3690
        %v3692 = vrot.slane %v3579, 1
        %v3693 = vsel %vm1308, %v3690, %v3692
        %v3694 = vrot.slane %v3581, 1
        %v3695 = vrot.slane %v3582, 1
        %v3696 = vsel %vm1308, %v3694, %v3695
        %v3697 = vrot.slane %v3583, 1
        %v3698 = vsel %vm1308, %v3695, %v3697
        %v3699 = vrot.slane %v3585, 1
        %v3700 = vrot.slane %v3586, 1
        %v3701 = vsel %vm1308, %v3699, %v3700
        %v3702 = vrot.slane %v3587, 1
        %v3703 = vsel %vm1308, %v3700, %v3702
        %v3704 = vrot.slane %v3589, 1
        %v3705 = vrot.slane %v3590, 1
        %v3706 = vsel %vm1308, %v3704, %v3705
        %v3707 = vrot.slane %v3591, 1
        %v3708 = vsel %vm1308, %v3705, %v3707
        %v3709 = vrot.slane %v3593, 1
        %v3710 = vrot.slane %v3594, 1
        %v3711 = vsel %vm1308, %v3709, %v3710
        %v3712 = vrot.slane %v3595, 1
        %v3713 = vsel %vm1308, %v3710, %v3712
        %v3714 = vrot.slane %v3597, 1
        %v3715 = vrot.slane %v3598, 1
        %v3716 = vsel %vm1308, %v3714, %v3715
        %v3717 = vrot.slane %v3599, 1
        %v3718 = vsel %vm1308, %v3715, %v3717
        %v3719 = vrot.slane %v3601, 1
        %v3720 = vrot.slane %v3602, 1
        %v3721 = vsel %vm1308, %v3719, %v3720
        %v3722 = vrot.slane %v3603, 1
        %v3723 = vsel %vm1308, %v3720, %v3722
        %v3724 = vrot.slane %v3605, 1
        %v3725 = vrot.slane %v3606, 1
        %v3726 = vsel %vm1308, %v3724, %v3725
        %v3727 = vrot.slane %v3607, 1
        %v3728 = vsel %vm1308, %v3725, %v3727
        %v3729 = vrot.slane %v3609, 1
        %v3730 = vrot.slane %v3610, 1
        %v3731 = vsel %vm1308, %v3729, %v3730
        %v3732 = vrot.slane %v3611, 1
        %v3733 = vsel %vm1308, %v3730, %v3732
        %v3734 = vrot.slane %v3613, 1
        %v3735 = vrot.slane %v3614, 1
        %v3736 = vsel %vm1308, %v3734, %v3735
        %v3737 = vrot.slane %v3615, 1
        %v3738 = vsel %vm1308, %v3735, %v3737
        %v3739 = vrot.slane %v3617, 1
        %v3740 = vrot.slane %v3618, 1
        %v3741 = vsel %vm1308, %v3739, %v3740
        %v3742 = vrot.slane %v3619, 1
        %v3743 = vsel %vm1308, %v3740, %v3742
        %v3744 = vrot.slane %v3621, 1
        %v3745 = vrot.slane %v3622, 1
        %v3746 = vsel %vm1308, %v3744, %v3745
        %v3747 = vrot.slane %v3623, 1
        %v3748 = vsel %vm1308, %v3745, %v3747
        %v3749 = vrot.slane %v3625, 1
        %v3750 = vrot.slane %v3626, 1
        %v3751 = vsel %vm1308, %v3749, %v3750
        %v3752 = vrot.slane %v3627, 1
        %v3753 = vsel %vm1308, %v3750, %v3752
        %v3754 = vrot.slane %v3629, 1
        %v3755 = vrot.slane %v3630, 1
        %v3756 = vsel %vm1308, %v3754, %v3755
        %v3757 = vrot.slane %v3631, 1
        %v3758 = vsel %vm1308, %v3755, %v3757
        %v3759 = vrot.slane %v3633, 1
        %v3760 = vrot.slane %v3634, 1
        %v3761 = vsel %vm1308, %v3759, %v3760
        %v3762 = vrot.slane %v3635, 1
        %v3763 = vsel %vm1308, %v3760, %v3762
        %v3764 = vrot.slane %v3637, 1
        %v3765 = vrot.slane %v3638, 1
        %v3766 = vsel %vm1308, %v3764, %v3765
        %v3767 = vrot.slane %v3639, 1
        %v3768 = vsel %vm1308, %v3765, %v3767
        %v3817 = vmax.f32 %v3577, %v3691
        %v3818 = vmax.f32 %v3578, %v3693
        %v3819 = vmax.f32 %v3579, %v3692
        %v3820 = vmax.f32 %v3581, %v3696
        %v3821 = vmax.f32 %v3582, %v3698
        %v3822 = vmax.f32 %v3583, %v3697
        %v3823 = vmax.f32 %v3585, %v3701
        %v3824 = vmax.f32 %v3586, %v3703
        %v3825 = vmax.f32 %v3587, %v3702
        %v3826 = vmax.f32 %v3589, %v3706
        %v3827 = vmax.f32 %v3590, %v3708
        %v3828 = vmax.f32 %v3591, %v3707
        %v3829 = vmax.f32 %v3593, %v3711
        %v3830 = vmax.f32 %v3594, %v3713
        %v3831 = vmax.f32 %v3595, %v3712
        %v3832 = vmax.f32 %v3597, %v3716
        %v3833 = vmax.f32 %v3598, %v3718
        %v3834 = vmax.f32 %v3599, %v3717
        %v3835 = vmax.f32 %v3601, %v3721
        %v3836 = vmax.f32 %v3602, %v3723
        %v3837 = vmax.f32 %v3603, %v3722
        %v3838 = vmax.f32 %v3605, %v3726
        %v3839 = vmax.f32 %v3606, %v3728
        %v3840 = vmax.f32 %v3607, %v3727
        %v3841 = vmax.f32 %v3609, %v3731
        %v3842 = vmax.f32 %v3610, %v3733
        %v3843 = vmax.f32 %v3611, %v3732
        %v3844 = vmax.f32 %v3613, %v3736
        %v3845 = vmax.f32 %v3614, %v3738
        %v3846 = vmax.f32 %v3615, %v3737
        %v3847 = vmax.f32 %v3617, %v3741
        %v3848 = vmax.f32 %v3618, %v3743
        %v3849 = vmax.f32 %v3619, %v3742
        %v3850 = vmax.f32 %v3621, %v3746
        %v3851 = vmax.f32 %v3622, %v3748
        %v3852 = vmax.f32 %v3623, %v3747
        %v3853 = vmax.f32 %v3625, %v3751
        %v3854 = vmax.f32 %v3626, %v3753
        %v3855 = vmax.f32 %v3627, %v3752
        %v3856 = vmax.f32 %v3629, %v3756
        %v3857 = vmax.f32 %v3630, %v3758
        %v3858 = vmax.f32 %v3631, %v3757
        %v3859 = vmax.f32 %v3633, %v3761
        %v3860 = vmax.f32 %v3634, %v3763
        %v3861 = vmax.f32 %v3635, %v3762
        %v3862 = vmax.f32 %v3637, %v3766
        %v3863 = vmax.f32 %v3638, %v3768
        %v3864 = vmax.f32 %v3639, %v3767
        %vm3865 = vcmask 1045504
        %v3866 = vrot.slane %v3578, 2
        %v3867 = vrot.slane %v3579, 2
        %v3868 = vsel %vm3865, %v3866, %v3867
        %v3869 = vrot.slane %v3582, 2
        %v3870 = vrot.slane %v3583, 2
        %v3871 = vsel %vm3865, %v3869, %v3870
        %v3872 = vrot.slane %v3586, 2
        %v3873 = vrot.slane %v3587, 2
        %v3874 = vsel %vm3865, %v3872, %v3873
        %v3875 = vrot.slane %v3590, 2
        %v3876 = vrot.slane %v3591, 2
        %v3877 = vsel %vm3865, %v3875, %v3876
        %v3878 = vrot.slane %v3594, 2
        %v3879 = vrot.slane %v3595, 2
        %v3880 = vsel %vm3865, %v3878, %v3879
        %v3881 = vrot.slane %v3598, 2
        %v3882 = vrot.slane %v3599, 2
        %v3883 = vsel %vm3865, %v3881, %v3882
        %v3884 = vrot.slane %v3602, 2
        %v3885 = vrot.slane %v3603, 2
        %v3886 = vsel %vm3865, %v3884, %v3885
        %v3887 = vrot.slane %v3606, 2
        %v3888 = vrot.slane %v3607, 2
        %v3889 = vsel %vm3865, %v3887, %v3888
        %v3890 = vrot.slane %v3610, 2
        %v3891 = vrot.slane %v3611, 2
        %v3892 = vsel %vm3865, %v3890, %v3891
        %v3893 = vrot.slane %v3614, 2
        %v3894 = vrot.slane %v3615, 2
        %v3895 = vsel %vm3865, %v3893, %v3894
        %v3896 = vrot.slane %v3618, 2
        %v3897 = vrot.slane %v3619, 2
        %v3898 = vsel %vm3865, %v3896, %v3897
        %v3899 = vrot.slane %v3622, 2
        %v3900 = vrot.slane %v3623, 2
        %v3901 = vsel %vm3865, %v3899, %v3900
        %v3902 = vrot.slane %v3626, 2
        %v3903 = vrot.slane %v3627, 2
        %v3904 = vsel %vm3865, %v3902, %v3903
        %v3905 = vrot.slane %v3630, 2
        %v3906 = vrot.slane %v3631, 2
        %v3907 = vsel %vm3865, %v3905, %v3906
        %v3908 = vrot.slane %v3634, 2
        %v3909 = vrot.slane %v3635, 2
        %v3910 = vsel %vm3865, %v3908, %v3909
        %v3911 = vrot.slane %v3638, 2
        %v3912 = vrot.slane %v3639, 2
        %v3913 = vsel %vm3865, %v3911, %v3912
        %v3962 = vmax.f32 %v3817, %v3866
        %v3963 = vmax.f32 %v3818, %v3868
        %v3964 = vmax.f32 %v3819, %v3867
        %v3965 = vmax.f32 %v3820, %v3869
        %v3966 = vmax.f32 %v3821, %v3871
        %v3967 = vmax.f32 %v3822, %v3870
        %v3968 = vmax.f32 %v3823, %v3872
        %v3969 = vmax.f32 %v3824, %v3874
        %v3970 = vmax.f32 %v3825, %v3873
        %v3971 = vmax.f32 %v3826, %v3875
        %v3972 = vmax.f32 %v3827, %v3877
        %v3973 = vmax.f32 %v3828, %v3876
        %v3974 = vmax.f32 %v3829, %v3878
        %v3975 = vmax.f32 %v3830, %v3880
        %v3976 = vmax.f32 %v3831, %v3879
        %v3977 = vmax.f32 %v3832, %v3881
        %v3978 = vmax.f32 %v3833, %v3883
        %v3979 = vmax.f32 %v3834, %v3882
        %v3980 = vmax.f32 %v3835, %v3884
        %v3981 = vmax.f32 %v3836, %v3886
        %v3982 = vmax.f32 %v3837, %v3885
        %v3983 = vmax.f32 %v3838, %v3887
        %v3984 = vmax.f32 %v3839, %v3889
        %v3985 = vmax.f32 %v3840, %v3888
        %v3986 = vmax.f32 %v3841, %v3890
        %v3987 = vmax.f32 %v3842, %v3892
        %v3988 = vmax.f32 %v3843, %v3891
        %v3989 = vmax.f32 %v3844, %v3893
        %v3990 = vmax.f32 %v3845, %v3895
        %v3991 = vmax.f32 %v3846, %v3894
        %v3992 = vmax.f32 %v3847, %v3896
        %v3993 = vmax.f32 %v3848, %v3898
        %v3994 = vmax.f32 %v3849, %v3897
        %v3995 = vmax.f32 %v3850, %v3899
        %v3996 = vmax.f32 %v3851, %v3901
        %v3997 = vmax.f32 %v3852, %v3900
        %v3998 = vmax.f32 %v3853, %v3902
        %v3999 = vmax.f32 %v3854, %v3904
        %v4000 = vmax.f32 %v3855, %v3903
        %v4001 = vmax.f32 %v3856, %v3905
        %v4002 = vmax.f32 %v3857, %v3907
        %v4003 = vmax.f32 %v3858, %v3906
        %v4004 = vmax.f32 %v3859, %v3908
        %v4005 = vmax.f32 %v3860, %v3910
        %v4006 = vmax.f32 %v3861, %v3909
        %v4007 = vmax.f32 %v3862, %v3911
        %v4008 = vmax.f32 %v3863, %v3913
        %v4009 = vmax.f32 %v3864, %v3912
        %vm4026 = vcmask 1044480
        %v4027 = vrot.slane %v3578, 3
        %v4028 = vrot.slane %v3579, 3
        %v4029 = vsel %vm4026, %v4027, %v4028
        %v4030 = vrot.slane %v3580, 3
        %v4031 = vsel %vm4026, %v4028, %v4030
        %v4032 = vrot.slane %v3582, 3
        %v4033 = vrot.slane %v3583, 3
        %v4034 = vsel %vm4026, %v4032, %v4033
        %v4035 = vrot.slane %v3584, 3
        %v4036 = vsel %vm4026, %v4033, %v4035
        %v4037 = vrot.slane %v3586, 3
        %v4038 = vrot.slane %v3587, 3
        %v4039 = vsel %vm4026, %v4037, %v4038
        %v4040 = vrot.slane %v3588, 3
        %v4041 = vsel %vm4026, %v4038, %v4040
        %v4042 = vrot.slane %v3590, 3
        %v4043 = vrot.slane %v3591, 3
        %v4044 = vsel %vm4026, %v4042, %v4043
        %v4045 = vrot.slane %v3592, 3
        %v4046 = vsel %vm4026, %v4043, %v4045
        %v4047 = vrot.slane %v3594, 3
        %v4048 = vrot.slane %v3595, 3
        %v4049 = vsel %vm4026, %v4047, %v4048
        %v4050 = vrot.slane %v3596, 3
        %v4051 = vsel %vm4026, %v4048, %v4050
        %v4052 = vrot.slane %v3598, 3
        %v4053 = vrot.slane %v3599, 3
        %v4054 = vsel %vm4026, %v4052, %v4053
        %v4055 = vrot.slane %v3600, 3
        %v4056 = vsel %vm4026, %v4053, %v4055
        %v4057 = vrot.slane %v3602, 3
        %v4058 = vrot.slane %v3603, 3
        %v4059 = vsel %vm4026, %v4057, %v4058
        %v4060 = vrot.slane %v3604, 3
        %v4061 = vsel %vm4026, %v4058, %v4060
        %v4062 = vrot.slane %v3606, 3
        %v4063 = vrot.slane %v3607, 3
        %v4064 = vsel %vm4026, %v4062, %v4063
        %v4065 = vrot.slane %v3608, 3
        %v4066 = vsel %vm4026, %v4063, %v4065
        %v4067 = vrot.slane %v3610, 3
        %v4068 = vrot.slane %v3611, 3
        %v4069 = vsel %vm4026, %v4067, %v4068
        %v4070 = vrot.slane %v3612, 3
        %v4071 = vsel %vm4026, %v4068, %v4070
        %v4072 = vrot.slane %v3614, 3
        %v4073 = vrot.slane %v3615, 3
        %v4074 = vsel %vm4026, %v4072, %v4073
        %v4075 = vrot.slane %v3616, 3
        %v4076 = vsel %vm4026, %v4073, %v4075
        %v4077 = vrot.slane %v3618, 3
        %v4078 = vrot.slane %v3619, 3
        %v4079 = vsel %vm4026, %v4077, %v4078
        %v4080 = vrot.slane %v3620, 3
        %v4081 = vsel %vm4026, %v4078, %v4080
        %v4082 = vrot.slane %v3622, 3
        %v4083 = vrot.slane %v3623, 3
        %v4084 = vsel %vm4026, %v4082, %v4083
        %v4085 = vrot.slane %v3624, 3
        %v4086 = vsel %vm4026, %v4083, %v4085
        %v4087 = vrot.slane %v3626, 3
        %v4088 = vrot.slane %v3627, 3
        %v4089 = vsel %vm4026, %v4087, %v4088
        %v4090 = vrot.slane %v3628, 3
        %v4091 = vsel %vm4026, %v4088, %v4090
        %v4092 = vrot.slane %v3630, 3
        %v4093 = vrot.slane %v3631, 3
        %v4094 = vsel %vm4026, %v4092, %v4093
        %v4095 = vrot.slane %v3632, 3
        %v4096 = vsel %vm4026, %v4093, %v4095
        %v4097 = vrot.slane %v3634, 3
        %v4098 = vrot.slane %v3635, 3
        %v4099 = vsel %vm4026, %v4097, %v4098
        %v4100 = vrot.slane %v3636, 3
        %v4101 = vsel %vm4026, %v4098, %v4100
        %v4102 = vrot.slane %v3638, 3
        %v4103 = vrot.slane %v3639, 3
        %v4104 = vsel %vm4026, %v4102, %v4103
        %v4105 = vrot.slane %v3640, 3
        %v4106 = vsel %vm4026, %v4103, %v4105
        %v4155 = vmax.f32 %v3962, %v4027
        %v4156 = vmax.f32 %v3963, %v4029
        %v4157 = vmax.f32 %v3964, %v4031
        %v4158 = vmax.f32 %v3965, %v4032
        %v4159 = vmax.f32 %v3966, %v4034
        %v4160 = vmax.f32 %v3967, %v4036
        %v4161 = vmax.f32 %v3968, %v4037
        %v4162 = vmax.f32 %v3969, %v4039
        %v4163 = vmax.f32 %v3970, %v4041
        %v4164 = vmax.f32 %v3971, %v4042
        %v4165 = vmax.f32 %v3972, %v4044
        %v4166 = vmax.f32 %v3973, %v4046
        %v4167 = vmax.f32 %v3974, %v4047
        %v4168 = vmax.f32 %v3975, %v4049
        %v4169 = vmax.f32 %v3976, %v4051
        %v4170 = vmax.f32 %v3977, %v4052
        %v4171 = vmax.f32 %v3978, %v4054
        %v4172 = vmax.f32 %v3979, %v4056
        %v4173 = vmax.f32 %v3980, %v4057
        %v4174 = vmax.f32 %v3981, %v4059
        %v4175 = vmax.f32 %v3982, %v4061
        %v4176 = vmax.f32 %v3983, %v4062
        %v4177 = vmax.f32 %v3984, %v4064
        %v4178 = vmax.f32 %v3985, %v4066
        %v4179 = vmax.f32 %v3986, %v4067
        %v4180 = vmax.f32 %v3987, %v4069
        %v4181 = vmax.f32 %v3988, %v4071
        %v4182 = vmax.f32 %v3989, %v4072
        %v4183 = vmax.f32 %v3990, %v4074
        %v4184 = vmax.f32 %v3991, %v4076
        %v4185 = vmax.f32 %v3992, %v4077
        %v4186 = vmax.f32 %v3993, %v4079
        %v4187 = vmax.f32 %v3994, %v4081
        %v4188 = vmax.f32 %v3995, %v4082
        %v4189 = vmax.f32 %v3996, %v4084
        %v4190 = vmax.f32 %v3997, %v4086
        %v4191 = vmax.f32 %v3998, %v4087
        %v4192 = vmax.f32 %v3999, %v4089
        %v4193 = vmax.f32 %v4000, %v4091
        %v4194 = vmax.f32 %v4001, %v4092
        %v4195 = vmax.f32 %v4002, %v4094
        %v4196 = vmax.f32 %v4003, %v4096
        %v4197 = vmax.f32 %v4004, %v4097
        %v4198 = vmax.f32 %v4005, %v4099
        %v4199 = vmax.f32 %v4006, %v4101
        %v4200 = vmax.f32 %v4007, %v4102
        %v4201 = vmax.f32 %v4008, %v4104
        %v4202 = vmax.f32 %v4009, %v4106
        %vm4203 = vcmask 1043456
        %v4204 = vrot.slane %v3578, 4
        %v4205 = vrot.slane %v3579, 4
        %v4206 = vsel %vm4203, %v4204, %v4205
        %v4207 = vrot.slane %v3580, 4
        %v4208 = vsel %vm4203, %v4205, %v4207
        %v4209 = vrot.slane %v3582, 4
        %v4210 = vrot.slane %v3583, 4
        %v4211 = vsel %vm4203, %v4209, %v4210
        %v4212 = vrot.slane %v3584, 4
        %v4213 = vsel %vm4203, %v4210, %v4212
        %v4214 = vrot.slane %v3586, 4
        %v4215 = vrot.slane %v3587, 4
        %v4216 = vsel %vm4203, %v4214, %v4215
        %v4217 = vrot.slane %v3588, 4
        %v4218 = vsel %vm4203, %v4215, %v4217
        %v4219 = vrot.slane %v3590, 4
        %v4220 = vrot.slane %v3591, 4
        %v4221 = vsel %vm4203, %v4219, %v4220
        %v4222 = vrot.slane %v3592, 4
        %v4223 = vsel %vm4203, %v4220, %v4222
        %v4224 = vrot.slane %v3594, 4
        %v4225 = vrot.slane %v3595, 4
        %v4226 = vsel %vm4203, %v4224, %v4225
        %v4227 = vrot.slane %v3596, 4
        %v4228 = vsel %vm4203, %v4225, %v4227
        %v4229 = vrot.slane %v3598, 4
        %v4230 = vrot.slane %v3599, 4
        %v4231 = vsel %vm4203, %v4229, %v4230
        %v4232 = vrot.slane %v3600, 4
        %v4233 = vsel %vm4203, %v4230, %v4232
        %v4234 = vrot.slane %v3602, 4
        %v4235 = vrot.slane %v3603, 4
        %v4236 = vsel %vm4203, %v4234, %v4235
        %v4237 = vrot.slane %v3604, 4
        %v4238 = vsel %vm4203, %v4235, %v4237
        %v4239 = vrot.slane %v3606, 4
        %v4240 = vrot.slane %v3607, 4
        %v4241 = vsel %vm4203, %v4239, %v4240
        %v4242 = vrot.slane %v3608, 4
        %v4243 = vsel %vm4203, %v4240, %v4242
        %v4244 = vrot.slane %v3610, 4
        %v4245 = vrot.slane %v3611, 4
        %v4246 = vsel %vm4203, %v4244, %v4245
        %v4247 = vrot.slane %v3612, 4
        %v4248 = vsel %vm4203, %v4245, %v4247
        %v4249 = vrot.slane %v3614, 4
        %v4250 = vrot.slane %v3615, 4
        %v4251 = vsel %vm4203, %v4249, %v4250
        %v4252 = vrot.slane %v3616, 4
        %v4253 = vsel %vm4203, %v4250, %v4252
        %v4254 = vrot.slane %v3618, 4
        %v4255 = vrot.slane %v3619, 4
        %v4256 = vsel %vm4203, %v4254, %v4255
        %v4257 = vrot.slane %v3620, 4
        %v4258 = vsel %vm4203, %v4255, %v4257
        %v4259 = vrot.slane %v3622, 4
        %v4260 = vrot.slane %v3623, 4
        %v4261 = vsel %vm4203, %v4259, %v4260
        %v4262 = vrot.slane %v3624, 4
        %v4263 = vsel %vm4203, %v4260, %v4262
        %v4264 = vrot.slane %v3626, 4
        %v4265 = vrot.slane %v3627, 4
        %v4266 = vsel %vm4203, %v4264, %v4265
        %v4267 = vrot.slane %v3628, 4
        %v4268 = vsel %vm4203, %v4265, %v4267
        %v4269 = vrot.slane %v3630, 4
        %v4270 = vrot.slane %v3631, 4
        %v4271 = vsel %vm4203, %v4269, %v4270
        %v4272 = vrot.slane %v3632, 4
        %v4273 = vsel %vm4203, %v4270, %v4272
        %v4274 = vrot.slane %v3634, 4
        %v4275 = vrot.slane %v3635, 4
        %v4276 = vsel %vm4203, %v4274, %v4275
        %v4277 = vrot.slane %v3636, 4
        %v4278 = vsel %vm4203, %v4275, %v4277
        %v4279 = vrot.slane %v3638, 4
        %v4280 = vrot.slane %v3639, 4
        %v4281 = vsel %vm4203, %v4279, %v4280
        %v4282 = vrot.slane %v3640, 4
        %v4283 = vsel %vm4203, %v4280, %v4282
        %v4332 = vmax.f32 %v4155, %v4204
        %v4333 = vmax.f32 %v4156, %v4206
        %v4334 = vmax.f32 %v4157, %v4208
        %v4335 = vmax.f32 %v4158, %v4209
        %v4336 = vmax.f32 %v4159, %v4211
        %v4337 = vmax.f32 %v4160, %v4213
        %v4338 = vmax.f32 %v4161, %v4214
        %v4339 = vmax.f32 %v4162, %v4216
        %v4340 = vmax.f32 %v4163, %v4218
        %v4341 = vmax.f32 %v4164, %v4219
        %v4342 = vmax.f32 %v4165, %v4221
        %v4343 = vmax.f32 %v4166, %v4223
        %v4344 = vmax.f32 %v4167, %v4224
        %v4345 = vmax.f32 %v4168, %v4226
        %v4346 = vmax.f32 %v4169, %v4228
        %v4347 = vmax.f32 %v4170, %v4229
        %v4348 = vmax.f32 %v4171, %v4231
        %v4349 = vmax.f32 %v4172, %v4233
        %v4350 = vmax.f32 %v4173, %v4234
        %v4351 = vmax.f32 %v4174, %v4236
        %v4352 = vmax.f32 %v4175, %v4238
        %v4353 = vmax.f32 %v4176, %v4239
        %v4354 = vmax.f32 %v4177, %v4241
        %v4355 = vmax.f32 %v4178, %v4243
        %v4356 = vmax.f32 %v4179, %v4244
        %v4357 = vmax.f32 %v4180, %v4246
        %v4358 = vmax.f32 %v4181, %v4248
        %v4359 = vmax.f32 %v4182, %v4249
        %v4360 = vmax.f32 %v4183, %v4251
        %v4361 = vmax.f32 %v4184, %v4253
        %v4362 = vmax.f32 %v4185, %v4254
        %v4363 = vmax.f32 %v4186, %v4256
        %v4364 = vmax.f32 %v4187, %v4258
        %v4365 = vmax.f32 %v4188, %v4259
        %v4366 = vmax.f32 %v4189, %v4261
        %v4367 = vmax.f32 %v4190, %v4263
        %v4368 = vmax.f32 %v4191, %v4264
        %v4369 = vmax.f32 %v4192, %v4266
        %v4370 = vmax.f32 %v4193, %v4268
        %v4371 = vmax.f32 %v4194, %v4269
        %v4372 = vmax.f32 %v4195, %v4271
        %v4373 = vmax.f32 %v4196, %v4273
        %v4374 = vmax.f32 %v4197, %v4274
        %v4375 = vmax.f32 %v4198, %v4276
        %v4376 = vmax.f32 %v4199, %v4278
        %v4377 = vmax.f32 %v4200, %v4279
        %v4378 = vmax.f32 %v4201, %v4281
        %v4379 = vmax.f32 %v4202, %v4283
        %vm4380 = vcmask 261126
        %4381 = vst.msk [vmem:[%s163 - $0x6] sm:$0xc0] %vm4380, %v4332
        %4382 = vst.msk [vmem:[%s163 + $0x2] sm:$0xff] %vm308, %v4333
        %vm4383 = vcmask 259072
        %4384 = vst.msk [vmem:[%s163 + $0xa] sm:$0x3f] %vm4383, %v4334
        %4385 = vst.msk [vmem:[%s163 + $0xa] sm:$0xc0] %vm4380, %v4335
        %4386 = vst.msk [vmem:[%s163 + $0x12] sm:$0xff] %vm308, %v4336
        %4387 = vst.msk [vmem:[%s163 + $0x1a] sm:$0x3f] %vm4383, %v4337
        %4388 = vst.msk [vmem:[%s163 + $0x1a] sm:$0xc0] %vm4380, %v4338
        %4389 = vst.msk [vmem:[%s163 + $0x22] sm:$0xff] %vm308, %v4339
        %4390 = vst.msk [vmem:[%s163 + $0x2a] sm:$0x3f] %vm4383, %v4340
        %4391 = vst.msk [vmem:[%s163 + $0x2a] sm:$0xc0] %vm4380, %v4341
        %4392 = vst.msk [vmem:[%s163 + $0x32] sm:$0xff] %vm308, %v4342
        %4393 = vst.msk [vmem:[%s163 + $0x3a] sm:$0x3f] %vm4383, %v4343
        %4394 = vst.msk [vmem:[%s163 + $0x3a] sm:$0xc0] %vm4380, %v4344
        %4395 = vst.msk [vmem:[%s163 + $0x42] sm:$0xff] %vm308, %v4345
        %4396 = vst.msk [vmem:[%s163 + $0x4a] sm:$0x3f] %vm4383, %v4346
        %4397 = vst.msk [vmem:[%s163 + $0x4a] sm:$0xc0] %vm4380, %v4347
        %4398 = vst.msk [vmem:[%s163 + $0x52] sm:$0xff] %vm308, %v4348
        %4399 = vst.msk [vmem:[%s163 + $0x5a] sm:$0x3f] %vm4383, %v4349
        %4400 = vst.msk [vmem:[%s163 + $0x5a] sm:$0xc0] %vm4380, %v4350
        %4401 = vst.msk [vmem:[%s163 + $0x62] sm:$0xff] %vm308, %v4351
        %4402 = vst.msk [vmem:[%s163 + $0x6a] sm:$0x3f] %vm4383, %v4352
        %4403 = vst.msk [vmem:[%s163 + $0x6a] sm:$0xc0] %vm4380, %v4353
        %4404 = vst.msk [vmem:[%s163 + $0x72] sm:$0xff] %vm308, %v4354
        %4405 = vst.msk [vmem:[%s163 + $0x7a] sm:$0x3f] %vm4383, %v4355
        %4406 = vst.msk [vmem:[%s163 + $0x7a] sm:$0xc0] %vm4380, %v4356
        %4407 = vst.msk [vmem:[%s163 + $0x82] sm:$0xff] %vm308, %v4357
        %4408 = vst.msk [vmem:[%s163 + $0x8a] sm:$0x3f] %vm4383, %v4358
        %4409 = vst.msk [vmem:[%s163 + $0x8a] sm:$0xc0] %vm4380, %v4359
        %4410 = vst.msk [vmem:[%s163 + $0x92] sm:$0xff] %vm308, %v4360
        %4411 = vst.msk [vmem:[%s163 + $0x9a] sm:$0x3f] %vm4383, %v4361
        %4412 = vst.msk [vmem:[%s163 + $0x9a] sm:$0xc0] %vm4380, %v4362
        %4413 = vst.msk [vmem:[%s163 + $0xa2] sm:$0xff] %vm308, %v4363
        %4414 = vst.msk [vmem:[%s163 + $0xaa] sm:$0x3f] %vm4383, %v4364
        %4415 = vst.msk [vmem:[%s163 + $0xaa] sm:$0xc0] %vm4380, %v4365
        %4416 = vst.msk [vmem:[%s163 + $0xb2] sm:$0xff] %vm308, %v4366
        %4417 = vst.msk [vmem:[%s163 + $0xba] sm:$0x3f] %vm4383, %v4367
        %4418 = vst.msk [vmem:[%s163 + $0xba] sm:$0xc0] %vm4380, %v4368
        %4419 = vst.msk [vmem:[%s163 + $0xc2] sm:$0xff] %vm308, %v4369
        %4420 = vst.msk [vmem:[%s163 + $0xca] sm:$0x3f] %vm4383, %v4370
        %4421 = vst.msk [vmem:[%s163 + $0xca] sm:$0xc0] %vm4380, %v4371
        %4422 = vst.msk [vmem:[%s163 + $0xd2] sm:$0xff] %vm308, %v4372
        %4423 = vst.msk [vmem:[%s163 + $0xda] sm:$0x3f] %vm4383, %v4373
        %4424 = vst.msk [vmem:[%s163 + $0xda] sm:$0xc0] %vm4380, %v4374
        %4425 = vst.msk [vmem:[%s163 + $0xe2] sm:$0xff] %vm308, %v4375
        %4426 = vst.msk [vmem:[%s163 + $0xea] sm:$0x3f] %vm4383, %v4376
        %4427 = vst.msk [vmem:[%s163 + $0xea] sm:$0xc0] %vm4380, %v4377
        %4428 = vst.msk [vmem:[%s163 + $0xf2] sm:$0xff] %vm308, %v4378
        %4429 = vst.msk [vmem:[%s163 + $0xfa] sm:$0x3f] %vm4383, %v4379
        %s4430 = sand.u32 %s93, 1
        %s4431 = scalar_lea.sflag [#allocation6], %s4430
        %s4432 = sand.u32 %s93, 1
        %s4433 = smul.addr %s4432, 256
        %s4434 = scalar_lea.vmem [#allocation5], %s4433
        // Predicated region
        $region33: #{tpu_custom_call.1} parent=31 // pred_check
          %p4435 = pneg %p103
        $region34: #{tpu_custom_call.1} parent=31 // pred_check_branch
          %4437 = sbr.rel (%p4435) target = $region36
        $region35: #{tpu_custom_call.1} parent=31 // pred_region
          %4439 = vsyncadd %s4431, 0
          %s4440 = smul.addr %s17, 32
          %s4441 = smul.addr %s4440, 8
          %s4442 = scalar_lea.hbm %s3, %s4441
          %s4443 = sshll.u32 %s4434, 4
          %s4444 = int_to_ptr.vmem [resolvable:$true] %s4443
          %s4445 = sshll.u32 %s4442, 4
          %s4446 = int_to_ptr.hbm [resolvable:$true] %s4445
          %4451 = dma.vmem_to_hbm [thread:$0]  %s4444, 4096, %s4446, %s4431, 128, 128, 8
        $region36: #{tpu_custom_call.1} parent=31 // pred_fallthru
          _
      $region32: #{tpu_custom_call.1} parent=5 // pred_fallthru
        _
      %p4452 = scmp.le.s32.totalorder 2, %s12
      // Predicated region
      $region37: #{tpu_custom_call.1} parent=5 // pred_check
        %p4453 = pneg %p4452
      $region38: #{tpu_custom_call.1} parent=5 // pred_check_branch
        %4455 = sbr.rel (%p4453) target = $region40
      $region39: #{tpu_custom_call.1} parent=5 // pred_region
        %s4456 = ssub.s32 %s12, 2
        // Predicated region
        $region41: #{tpu_custom_call.1} parent=39 // pred_check
          %p4457 = pneg %p109
        $region42: #{tpu_custom_call.1} parent=39 // pred_check_branch
          %4459 = sbr.rel (%p4457) target = $region44
        $region43: #{tpu_custom_call.1} parent=39 // pred_region
          %s4460 = sand.u32 %s94, 1
          %s4461 = scalar_lea.sflag [#allocation6], %s4460
          %s4462 = sand.u32 %s94, 1
          %s4463 = smul.addr %s4462, 256
          %s4464 = scalar_lea.vmem [#allocation5], %s4463
          %4466 = dma.done %s4461, 4096
        $region44: #{tpu_custom_call.1} parent=39 // pred_fallthru
          _
      $region40: #{tpu_custom_call.1} parent=5 // pred_fallthru
        _
    $region6: #{tpu_custom_call.1} parent=1 // loop_footer
      %s16 = sadd.s32 1, %s12
    $region7: #{tpu_custom_call.1} parent=1 // loop_footer_branch
      %11 = sbr.rel target = $region3
    $region8: #{tpu_custom_call.1} parent=1 // loop_exit
      _
    %4467 = vsyncpa [#allocation6], 1
    %s4468 = scalar_lea.sflag [#allocation6], 1
    %4469 = vsyncpa %s4468, 1

</llo_original>
